<compile_context>
chip_gen: v7x
topology: tpu7x:2x2x1
jax: 0.10.0
libtpu: 0.0.40
codegen_flags: <defaults>
</compile_context>

<pallas_src>
import math
import functools

import jax
import jax.numpy as jnp
from jax.experimental import pallas as pl
from jax.experimental.pallas import tpu as pltpu


# Order in which each encoder's stacked weights are passed to the kernel.
_WKEYS = ("wqkv", "bqkv", "wo", "bo", "g1", "be1",
          "w1", "b1", "w2", "b2", "g2", "be2")


# ----------------------------------------------------------------------------
# Fused whole-forward kernel
# ----------------------------------------------------------------------------

def _prior_forward_kernel(
        xlens_ref, ylens_ref,                      # SMEM scalar prefetch: [B]
        x_ref,                                     # (1, Tx, C) f32
        attn_ref,                                  # (1, L, Tx) f32
        # pre_attn_encoder weights, stacked on a leading layer axis
        pre_wqkv, pre_bqkv, pre_wo, pre_bo, pre_g1, pre_be1,
        pre_w1, pre_b1, pre_w2, pre_b2, pre_g2, pre_be2,
        # post_attn_encoder weights
        post_wqkv, post_bqkv, post_wo, post_bo, post_g1, post_be1,
        post_w1, post_b1, post_w2, post_b2, post_g2, post_be2,
        pw_ref, pb_ref,                            # (C, 2*out) bf16, (1, 2*out) f32
        y_out_ref,                                 # (1, L, C) f32
        st_out_ref,                                # (1, L, 2*out) f32
        *, n_heads, kernel_size, eps):
    b = pl.program_id(0)
    xlen = xlens_ref[b]
    ylen = ylens_ref[b]
    K = kernel_size
    pad_l = (K - 1) // 2
    pad_r = K // 2

    def layer_norm(z, g, be):
        mu = jnp.mean(z, axis=-1, keepdims=True)
        zc = z - mu
        var = jnp.mean(zc * zc, axis=-1, keepdims=True)
        return zc * jax.lax.rsqrt(var + eps) * g + be

    def conv_ktap(xm, w, bias):
        # xm: (T, Cin) f32, already masked.  w: (K*Cin, Cout) bf16 (im2col).
        T, Cin = xm.shape
        if K == 1:
            xcat = xm
        else:
            # Zero-pad once (value-level, no VMEM scratch slab), take K shifted
            # static slices and lane-concat -> one deep MXU contraction.
            parts = []
            if pad_l:
                parts.append(jnp.zeros((pad_l, Cin), jnp.float32))
            parts.append(xm)
            if pad_r:
                parts.append(jnp.zeros((pad_r, Cin), jnp.float32))
            xp = jnp.concatenate(parts, axis=0)                 # (T+K-1, Cin)
            xcat = jnp.concatenate([xp[j:j + T, :] for j in range(K)], axis=-1)
        return jnp.dot(xcat.astype(jnp.bfloat16), w,
                       preferred_element_type=jnp.float32) + bias

    def run_encoder(x, length, refs):
        (wqkv, bqkv, wo, bo, g1, be1, w1, b1, w2, b2, g2, be2) = refs
        T, C = x.shape
        n_layers = wqkv.shape[0]
        dh = C // n_heads
        # Masks built once per encoder from the length (hoisted out of loops).
        row = jax.lax.broadcasted_iota(jnp.int32, (T, 1), 0)
        mask = (row < length).astype(jnp.float32)               # (T, 1)
        kvalid = jax.lax.broadcasted_iota(jnp.int32, (1, T), 1) < length
        x = x * mask                                            # encoder entry
        for li in range(n_layers):                              # static unroll
            # ---- multi-head self-attention (merged QKV, one bf16 cast) ------
            qkv = jnp.dot(x.astype(jnp.bfloat16), wqkv[li],
                          preferred_element_type=jnp.float32) + bqkv[li]
            qkv = qkv.astype(jnp.bfloat16)                      # (T, 3C)
            heads = []
            for h in range(n_heads):                            # static unroll
                qh = qkv[:, h * dh:(h + 1) * dh]
                kh = qkv[:, C + h * dh:C + (h + 1) * dh]
                vh = qkv[:, 2 * C + h * dh:2 * C + (h + 1) * dh]
                # q @ k^T without materializing a transpose.
                s = jax.lax.dot_general(qh, kh, (((1,), (1,)), ((), ())),
                                        preferred_element_type=jnp.float32)
                s = jnp.where(kvalid, s, jnp.float32(-1e4))     # key-only mask
                s = s - jnp.max(s, axis=-1, keepdims=True)
                p = jnp.exp(s)
                p = p * pl.reciprocal(jnp.sum(p, axis=-1, keepdims=True),
                                      approx=True)
                heads.append(jnp.dot(p.astype(jnp.bfloat16), vh,
                                     preferred_element_type=jnp.float32
                                     ).astype(jnp.bfloat16))
            ocat = jnp.concatenate(heads, axis=-1)              # (T, C) head-major
            attn_out = jnp.dot(ocat, wo[li],
                               preferred_element_type=jnp.float32) + bo[li]
            x = layer_norm(x + attn_out, g1[li], be1[li])
            # ---- FFN: conv(K) + ReLU + conv(K), VITS masking ----------------
            h1 = jnp.maximum(conv_ktap(x * mask, w1[li], b1[li]), 0.0)
            ffn = conv_ktap(h1 * mask, w2[li], b2[li]) * mask
            x = layer_norm(x + ffn, g2[li], be2[li])
        return x * mask, mask                                   # encoder exit

    pre_refs = (pre_wqkv, pre_bqkv, pre_wo, pre_bo, pre_g1, pre_be1,
                pre_w1, pre_b1, pre_w2, pre_b2, pre_g2, pre_be2)
    post_refs = (post_wqkv, post_bqkv, post_wo, post_bo, post_g1, post_be1,
                 post_w1, post_b1, post_w2, post_b2, post_g2, post_be2)

    # pre_attn_encoder over the text axis.
    x_pre, _ = run_encoder(x_ref[0].astype(jnp.float32), xlen, pre_refs)

    # torch.einsum('bht,blt->bhl', x, attn)  ==  attn @ x in time-major layout.
    y0 = jnp.dot(attn_ref[0].astype(jnp.bfloat16), x_pre.astype(jnp.bfloat16),
                 preferred_element_type=jnp.float32)            # (L, C)

    # post_attn_encoder over the spectrogram axis.
    y_post, ymask = run_encoder(y0, ylen, post_refs)

    # Final 1x1 projection, masked (stats = proj(y) * y_mask).
    stats = (jnp.dot(y_post.astype(jnp.bfloat16), pw_ref[...],
                     preferred_element_type=jnp.float32) + pb_ref[...]) * ymask

    y_out_ref[...] = y_post.reshape(y_out_ref.shape).astype(y_out_ref.dtype)
    st_out_ref[...] = stats.reshape(st_out_ref.shape).astype(st_out_ref.dtype)


# ----------------------------------------------------------------------------
# Host wrapper: embedding gather outside, everything else in one pallas_call
# ----------------------------------------------------------------------------

def prior_encoder_forward(params, cfg, x_tokens, x_lengths, y_lengths, attn):
    out_ch = cfg["out_channels"]
    H = cfg["hidden_channels"]
    x_lengths = x_lengths.astype(jnp.int32)
    y_lengths = y_lengths.astype(jnp.int32)

    # Embedding gather (XLA); the sqrt(H) scale is pre-folded into the table.
    x = jnp.take(params["emb"], x_tokens, axis=0)               # [B, Tx, H]
    B, Tx, _ = x.shape
    L = attn.shape[1]
    S = 2 * out_ch

    def const_spec(shape):
        nd = len(shape)
        return pl.BlockSpec(shape, lambda b, *_: (0,) * nd)     # resident weight

    in_specs = [
        pl.BlockSpec((1, Tx, H), lambda b, *_: (b, 0, 0)),      # x (per batch)
        pl.BlockSpec((1, L, Tx), lambda b, *_: (b, 0, 0)),      # attn (per batch)
    ]
    operands = [x, attn]
    for enc in ("pre", "post"):
        for k in _WKEYS:
            w = params[enc][k]
            in_specs.append(const_spec(w.shape))
            operands.append(w)
    in_specs += [const_spec(params["proj_w"].shape),
                 const_spec(params["proj_b"].shape)]
    operands += [params["proj_w"], params["proj_b"]]

    grid_spec = pltpu.PrefetchScalarGridSpec(
        num_scalar_prefetch=2,                                  # x_lengths, y_lengths
        grid=(B,),
        in_specs=in_specs,
        out_specs=(pl.BlockSpec((1, L, H), lambda b, *_: (b, 0, 0)),
                   pl.BlockSpec((1, L, S), lambda b, *_: (b, 0, 0))),
    )
    kern = functools.partial(_prior_forward_kernel,
                             n_heads=cfg["n_heads"],
                             kernel_size=cfg["kernel_size"],
                             eps=1e-5)
    y_enc, stats = pl.pallas_call(
        kern,
        out_shape=(jax.ShapeDtypeStruct((B, L, H), jnp.float32),
                   jax.ShapeDtypeStruct((B, L, S), jnp.float32)),
        grid_spec=grid_spec,
        compiler_params=pltpu.CompilerParams(
            dimension_semantics=("parallel",)),
    )(x_lengths, y_lengths, *operands)

    m, logs = stats[..., :out_ch], stats[..., out_ch:]
    y_mask = (jnp.arange(L)[None, :] < y_lengths[:, None]).astype(jnp.float32)

    # Convert to PyTorch NCT layout for outputs.
    return (jnp.transpose(y_enc, (0, 2, 1)),     # [B, H, L]
            jnp.transpose(m, (0, 2, 1)),         # [B, out, L]
            jnp.transpose(logs, (0, 2, 1)),      # [B, out, L]
            y_mask[:, None, :])                  # [B, 1, L]


# ----------------------------------------------------------------------------
# Deterministic parameter init (kernel-ready: fused QKV, bf16 weights,
# attention scale folded into wq, sqrt(H) folded into the embedding,
# conv weights pre-im2col'd, per-encoder layer stacks)
# ----------------------------------------------------------------------------

def init_params(key, cfg):
    H = cfg["hidden_channels"]
    Fc = cfg["filter_channels"]
    K = cfg["kernel_size"]
    out_ch = cfg["out_channels"]
    nl = cfg["n_layers"]
    n_heads = cfg["n_heads"]
    dh = H // n_heads
    q_scale = dh ** -0.5

    keys = iter(jax.random.split(key, 512))

    def nrm(shape, scale):
        return jax.random.normal(next(keys), shape, jnp.float32) * scale

    def enc_stack(n):
        layers = {k: [] for k in _WKEYS}
        for _ in range(n):
            wq = nrm((H, H), H ** -0.5)
            wk = nrm((H, H), H ** -0.5)
            wv = nrm((H, H), H ** -0.5)
            layers["wqkv"].append(jnp.concatenate(
                [wq * q_scale, wk, wv], axis=1).astype(jnp.bfloat16))
            layers["bqkv"].append(jnp.zeros((1, 3 * H), jnp.float32))
            layers["wo"].append(nrm((H, H), H ** -0.5).astype(jnp.bfloat16))
            layers["bo"].append(jnp.zeros((1, H), jnp.float32))
            layers["g1"].append(jnp.ones((1, H), jnp.float32))
            layers["be1"].append(jnp.zeros((1, H), jnp.float32))
            # conv weights pre-im2col'd: [K, Cin, Cout] -> [K*Cin, Cout]
            layers["w1"].append(nrm((K, H, Fc), (H * K) ** -0.5)
                                .reshape(K * H, Fc).astype(jnp.bfloat16))
            layers["b1"].append(jnp.zeros((1, Fc), jnp.float32))
            layers["w2"].append(nrm((K, Fc, H), (Fc * K) ** -0.5)
                                .reshape(K * Fc, H).astype(jnp.bfloat16))
            layers["b2"].append(jnp.zeros((1, H), jnp.float32))
            layers["g2"].append(jnp.ones((1, H), jnp.float32))
            layers["be2"].append(jnp.zeros((1, H), jnp.float32))
        return {k: jnp.stack(v, axis=0) for k, v in layers.items()}

    return {
        # nn.init.normal_(emb, 0, H^-0.5); the module's * sqrt(H) is pre-folded.
        "emb": nrm((cfg["n_vocab"], H), H ** -0.5) * math.sqrt(H),
        "pre": enc_stack(nl // 2),
        "post": enc_stack(nl - nl // 2),
        "proj_w": nrm((H, 2 * out_ch), H ** -0.5).astype(jnp.bfloat16),
        "proj_b": jnp.zeros((1, 2 * out_ch), jnp.float32),
    }


# ----------------------------------------------------------------------------
# Main
# ----------------------------------------------------------------------------

if __name__ == "__main__":
    cfg = dict(
        n_vocab=40,
        out_channels=8,
        hidden_channels=32,
        filter_channels=64,
        n_heads=2,
        n_layers=4,
        kernel_size=3,
        p_dropout=0.1,   # identity at inference
    )

    B, T_text, T_spec = 2, 8, 12

    key = jax.random.PRNGKey(0)
    k_par, k_tok, k_attn = jax.random.split(key, 3)

    params = init_params(k_par, cfg)

    x_tokens = jax.random.randint(k_tok, (B, T_text), 0, cfg["n_vocab"])
    x_lengths = jnp.array([T_text, 6], dtype=jnp.int32)
    y_lengths = jnp.array([T_spec, 9], dtype=jnp.int32)
    attn = jax.random.uniform(k_attn, (B, T_spec, T_text), jnp.float32)  # [B, L, T_x]

    forward = jax.jit(lambda p, tok, xl, yl, at:
                      prior_encoder_forward(p, cfg, tok, xl, yl, at))

    y, m, logs, y_mask = forward(params, x_tokens, x_lengths, y_lengths, attn)
    jax.block_until_ready((y, m, logs, y_mask))

    assert y.shape == (B, cfg["hidden_channels"], T_spec)
    assert m.shape == (B, cfg["out_channels"], T_spec)
    assert logs.shape == (B, cfg["out_channels"], T_spec)
    assert y_mask.shape == (B, 1, T_spec)
    assert bool(jnp.all(jnp.isfinite(y))) and bool(jnp.all(jnp.isfinite(m)))

    print("KERNEL_OK")
</pallas_src>

<mosaic_0001>
module attributes {stable_mosaic.version = 11 : i64} {
  func.func @_prior_forward_kernel(%arg0: i32, %arg1: memref<2xi32, #tpu.memory_space<smem>>, %arg2: memref<2xi32, #tpu.memory_space<smem>>, %arg3: memref<1x8x32xf32, #tpu.memory_space<vmem>>, %arg4: memref<1x12x8xf32, #tpu.memory_space<vmem>>, %arg5: memref<2x32x96xbf16, #tpu.memory_space<vmem>>, %arg6: memref<2x1x96xf32, #tpu.memory_space<vmem>>, %arg7: memref<2x32x32xbf16, #tpu.memory_space<vmem>>, %arg8: memref<2x1x32xf32, #tpu.memory_space<vmem>>, %arg9: memref<2x1x32xf32, #tpu.memory_space<vmem>>, %arg10: memref<2x1x32xf32, #tpu.memory_space<vmem>>, %arg11: memref<2x96x64xbf16, #tpu.memory_space<vmem>>, %arg12: memref<2x1x64xf32, #tpu.memory_space<vmem>>, %arg13: memref<2x192x32xbf16, #tpu.memory_space<vmem>>, %arg14: memref<2x1x32xf32, #tpu.memory_space<vmem>>, %arg15: memref<2x1x32xf32, #tpu.memory_space<vmem>>, %arg16: memref<2x1x32xf32, #tpu.memory_space<vmem>>, %arg17: memref<2x32x96xbf16, #tpu.memory_space<vmem>>, %arg18: memref<2x1x96xf32, #tpu.memory_space<vmem>>, %arg19: memref<2x32x32xbf16, #tpu.memory_space<vmem>>, %arg20: memref<2x1x32xf32, #tpu.memory_space<vmem>>, %arg21: memref<2x1x32xf32, #tpu.memory_space<vmem>>, %arg22: memref<2x1x32xf32, #tpu.memory_space<vmem>>, %arg23: memref<2x96x64xbf16, #tpu.memory_space<vmem>>, %arg24: memref<2x1x64xf32, #tpu.memory_space<vmem>>, %arg25: memref<2x192x32xbf16, #tpu.memory_space<vmem>>, %arg26: memref<2x1x32xf32, #tpu.memory_space<vmem>>, %arg27: memref<2x1x32xf32, #tpu.memory_space<vmem>>, %arg28: memref<2x1x32xf32, #tpu.memory_space<vmem>>, %arg29: memref<32x16xbf16, #tpu.memory_space<vmem>>, %arg30: memref<1x16xf32, #tpu.memory_space<vmem>>, %arg31: memref<1x12x32xf32, #tpu.memory_space<vmem>>, %arg32: memref<1x12x16xf32, #tpu.memory_space<vmem>>) attributes {dimension_semantics = [#tpu.dimension_semantics<parallel>], iteration_bounds = array<i64: 2>, scalar_prefetch = 2 : i64, scratch_operands = 0 : i64, tpu.core_type = #tpu.core_type<tc>, window_params = [{transform_indices = @transform_0, window_bounds = array<i64: 1, 8, 32>}, {transform_indices = @transform_1, window_bounds = array<i64: 1, 12, 8>}, {pipeline_mode = #tpu.pipeline_mode<synchronous>, transform_indices = @transform_2, window_bounds = array<i64: 2, 32, 96>}, {pipeline_mode = #tpu.pipeline_mode<synchronous>, transform_indices = @transform_3, window_bounds = array<i64: 2, 1, 96>}, {pipeline_mode = #tpu.pipeline_mode<synchronous>, transform_indices = @transform_4, window_bounds = array<i64: 2, 32, 32>}, {pipeline_mode = #tpu.pipeline_mode<synchronous>, transform_indices = @transform_5, window_bounds = array<i64: 2, 1, 32>}, {pipeline_mode = #tpu.pipeline_mode<synchronous>, transform_indices = @transform_6, window_bounds = array<i64: 2, 1, 32>}, {pipeline_mode = #tpu.pipeline_mode<synchronous>, transform_indices = @transform_7, window_bounds = array<i64: 2, 1, 32>}, {pipeline_mode = #tpu.pipeline_mode<synchronous>, transform_indices = @transform_8, window_bounds = array<i64: 2, 96, 64>}, {pipeline_mode = #tpu.pipeline_mode<synchronous>, transform_indices = @transform_9, window_bounds = array<i64: 2, 1, 64>}, {pipeline_mode = #tpu.pipeline_mode<synchronous>, transform_indices = @transform_10, window_bounds = array<i64: 2, 192, 32>}, {pipeline_mode = #tpu.pipeline_mode<synchronous>, transform_indices = @transform_11, window_bounds = array<i64: 2, 1, 32>}, {pipeline_mode = #tpu.pipeline_mode<synchronous>, transform_indices = @transform_12, window_bounds = array<i64: 2, 1, 32>}, {pipeline_mode = #tpu.pipeline_mode<synchronous>, transform_indices = @transform_13, window_bounds = array<i64: 2, 1, 32>}, {pipeline_mode = #tpu.pipeline_mode<synchronous>, transform_indices = @transform_14, window_bounds = array<i64: 2, 32, 96>}, {pipeline_mode = #tpu.pipeline_mode<synchronous>, transform_indices = @transform_15, window_bounds = array<i64: 2, 1, 96>}, {pipeline_mode = #tpu.pipeline_mode<synchronous>, transform_indices = @transform_16, window_bounds = array<i64: 2, 32, 32>}, {pipeline_mode = #tpu.pipeline_mode<synchronous>, transform_indices = @transform_17, window_bounds = array<i64: 2, 1, 32>}, {pipeline_mode = #tpu.pipeline_mode<synchronous>, transform_indices = @transform_18, window_bounds = array<i64: 2, 1, 32>}, {pipeline_mode = #tpu.pipeline_mode<synchronous>, transform_indices = @transform_19, window_bounds = array<i64: 2, 1, 32>}, {pipeline_mode = #tpu.pipeline_mode<synchronous>, transform_indices = @transform_20, window_bounds = array<i64: 2, 96, 64>}, {pipeline_mode = #tpu.pipeline_mode<synchronous>, transform_indices = @transform_21, window_bounds = array<i64: 2, 1, 64>}, {pipeline_mode = #tpu.pipeline_mode<synchronous>, transform_indices = @transform_22, window_bounds = array<i64: 2, 192, 32>}, {pipeline_mode = #tpu.pipeline_mode<synchronous>, transform_indices = @transform_23, window_bounds = array<i64: 2, 1, 32>}, {pipeline_mode = #tpu.pipeline_mode<synchronous>, transform_indices = @transform_24, window_bounds = array<i64: 2, 1, 32>}, {pipeline_mode = #tpu.pipeline_mode<synchronous>, transform_indices = @transform_25, window_bounds = array<i64: 2, 1, 32>}, {pipeline_mode = #tpu.pipeline_mode<synchronous>, transform_indices = @transform_26, window_bounds = array<i64: 32, 16>}, {pipeline_mode = #tpu.pipeline_mode<synchronous>, transform_indices = @transform_27, window_bounds = array<i64: 1, 16>}, {transform_indices = @transform_28, window_bounds = array<i64: 1, 12, 32>}, {transform_indices = @transform_29, window_bounds = array<i64: 1, 12, 16>}]} {
    %0 = arith.index_cast %arg0 : i32 to index
    %1 = memref.load %arg1[%0] : memref<2xi32, #tpu.memory_space<smem>>
    %2 = arith.index_cast %arg0 : i32 to index
    %3 = memref.load %arg2[%2] : memref<2xi32, #tpu.memory_space<smem>>
    %c0 = arith.constant 0 : index
    %c0_0 = arith.constant 0 : index
    %c0_1 = arith.constant 0 : index
    %4 = vector.load %arg3[%c0, %c0_0, %c0_1] : memref<1x8x32xf32, #tpu.memory_space<vmem>>, vector<1x8x32xf32>
    %5 = vector.shape_cast %4 : vector<1x8x32xf32> to vector<8x32xf32>
    %6 = tpu.iota {dimensions = array<i32: 0>} : vector<8x1xi32>
    %7 = vector.broadcast %1 : i32 to vector<8x1xi32>
    %8 = arith.cmpi slt, %6, %7 : vector<8x1xi32>
    %9 = arith.extui %8 : vector<8x1xi1> to vector<8x1xi32>
    %10 = arith.sitofp %9 : vector<8x1xi32> to vector<8x1xf32>
    %11 = tpu.iota {dimensions = array<i32: 1>} : vector<1x8xi32>
    %12 = vector.broadcast %1 : i32 to vector<1x8xi32>
    %13 = arith.cmpi slt, %11, %12 : vector<1x8xi32>
    %14 = vector.broadcast %10 : vector<8x1xf32> to vector<8x32xf32>
    %15 = arith.mulf %5, %14 : vector<8x32xf32>
    %16 = arith.truncf %15 : vector<8x32xf32> to vector<8x32xbf16>
    %c0_2 = arith.constant 0 : index
    %c0_3 = arith.constant 0 : index
    %c0_4 = arith.constant 0 : index
    %17 = vector.load %arg5[%c0_2, %c0_3, %c0_4] : memref<2x32x96xbf16, #tpu.memory_space<vmem>>, vector<1x32x96xbf16>
    %18 = vector.shape_cast %17 : vector<1x32x96xbf16> to vector<32x96xbf16>
    %cst = arith.constant dense<0.000000e+00> : vector<8x96xf32>
    %19 = tpu.matmul %16, %18, %cst {dimension_numbers = #tpu.dot_dimension_numbers<[1], [0], [0], [1], [0, 0, 1, 1], [], []>} : vector<8x32xbf16>, vector<32x96xbf16>, vector<8x96xf32> -> vector<8x96xf32>
    %c0_5 = arith.constant 0 : index
    %c0_6 = arith.constant 0 : index
    %c0_7 = arith.constant 0 : index
    %20 = vector.load %arg6[%c0_5, %c0_6, %c0_7] : memref<2x1x96xf32, #tpu.memory_space<vmem>>, vector<1x1x96xf32>
    %21 = vector.shape_cast %20 : vector<1x1x96xf32> to vector<1x96xf32>
    %22 = vector.broadcast %21 : vector<1x96xf32> to vector<8x96xf32>
    %23 = arith.addf %19, %22 : vector<8x96xf32>
    %24 = arith.truncf %23 : vector<8x96xf32> to vector<8x96xbf16>
    %25 = vector.extract_strided_slice %24 {offsets = [0, 0], sizes = [8, 16], strides = [1, 1]} : vector<8x96xbf16> to vector<8x16xbf16>
    %26 = vector.extract_strided_slice %24 {offsets = [0, 32], sizes = [8, 16], strides = [1, 1]} : vector<8x96xbf16> to vector<8x16xbf16>
    %27 = vector.extract_strided_slice %24 {offsets = [0, 64], sizes = [8, 16], strides = [1, 1]} : vector<8x96xbf16> to vector<8x16xbf16>
    %cst_8 = arith.constant dense<0.000000e+00> : vector<8x8xf32>
    %28 = tpu.matmul %25, %26, %cst_8 {dimension_numbers = #tpu.dot_dimension_numbers<[1], [1], [0], [0], [0, 0, 1, 0], [], []>} : vector<8x16xbf16>, vector<8x16xbf16>, vector<8x8xf32> -> vector<8x8xf32>
    %cst_9 = arith.constant -1.000000e+04 : f32
    %29 = vector.shape_cast %13 : vector<1x8xi1> to vector<1x8xi1>
    %30 = vector.broadcast %29 : vector<1x8xi1> to vector<8x8xi1>
    %31 = vector.broadcast %cst_9 : f32 to vector<8x8xf32>
    %32 = arith.select %30, %28, %31 : vector<8x8xi1>, vector<8x8xf32>
    %cst_10 = arith.constant dense<0xFF800000> : vector<8xf32>
    %33 = vector.multi_reduction <maximumf>, %32, %cst_10 [1] : vector<8x8xf32> to vector<8xf32>
    %34 = vector.shape_cast %33 : vector<8xf32> to vector<8x1xf32>
    %35 = vector.broadcast %34 : vector<8x1xf32> to vector<8x8xf32>
    %36 = arith.subf %32, %35 : vector<8x8xf32>
    %37 = math.exp %36 : vector<8x8xf32>
    %cst_11 = arith.constant dense<0.000000e+00> : vector<8xf32>
    %38 = vector.multi_reduction <add>, %37, %cst_11 [1] : vector<8x8xf32> to vector<8xf32>
    %39 = vector.shape_cast %38 : vector<8xf32> to vector<8x1xf32>
    %40 = tpu.reciprocal %39 {approx = true} : vector<8x1xf32> -> vector<8x1xf32>
    %41 = vector.broadcast %40 : vector<8x1xf32> to vector<8x8xf32>
    %42 = arith.mulf %37, %41 : vector<8x8xf32>
    %43 = arith.truncf %42 : vector<8x8xf32> to vector<8x8xbf16>
    %cst_12 = arith.constant dense<0.000000e+00> : vector<8x16xf32>
    %44 = tpu.matmul %43, %27, %cst_12 {dimension_numbers = #tpu.dot_dimension_numbers<[1], [0], [0], [1], [0, 0, 1, 1], [], []>} : vector<8x8xbf16>, vector<8x16xbf16>, vector<8x16xf32> -> vector<8x16xf32>
    %45 = arith.truncf %44 : vector<8x16xf32> to vector<8x16xbf16>
    %46 = vector.extract_strided_slice %24 {offsets = [0, 16], sizes = [8, 16], strides = [1, 1]} : vector<8x96xbf16> to vector<8x16xbf16>
    %47 = vector.extract_strided_slice %24 {offsets = [0, 48], sizes = [8, 16], strides = [1, 1]} : vector<8x96xbf16> to vector<8x16xbf16>
    %48 = vector.extract_strided_slice %24 {offsets = [0, 80], sizes = [8, 16], strides = [1, 1]} : vector<8x96xbf16> to vector<8x16xbf16>
    %cst_13 = arith.constant dense<0.000000e+00> : vector<8x8xf32>
    %49 = tpu.matmul %46, %47, %cst_13 {dimension_numbers = #tpu.dot_dimension_numbers<[1], [1], [0], [0], [0, 0, 1, 0], [], []>} : vector<8x16xbf16>, vector<8x16xbf16>, vector<8x8xf32> -> vector<8x8xf32>
    %cst_14 = arith.constant -1.000000e+04 : f32
    %50 = vector.shape_cast %13 : vector<1x8xi1> to vector<1x8xi1>
    %51 = vector.broadcast %50 : vector<1x8xi1> to vector<8x8xi1>
    %52 = vector.broadcast %cst_14 : f32 to vector<8x8xf32>
    %53 = arith.select %51, %49, %52 : vector<8x8xi1>, vector<8x8xf32>
    %cst_15 = arith.constant dense<0xFF800000> : vector<8xf32>
    %54 = vector.multi_reduction <maximumf>, %53, %cst_15 [1] : vector<8x8xf32> to vector<8xf32>
    %55 = vector.shape_cast %54 : vector<8xf32> to vector<8x1xf32>
    %56 = vector.broadcast %55 : vector<8x1xf32> to vector<8x8xf32>
    %57 = arith.subf %53, %56 : vector<8x8xf32>
    %58 = math.exp %57 : vector<8x8xf32>
    %cst_16 = arith.constant dense<0.000000e+00> : vector<8xf32>
    %59 = vector.multi_reduction <add>, %58, %cst_16 [1] : vector<8x8xf32> to vector<8xf32>
    %60 = vector.shape_cast %59 : vector<8xf32> to vector<8x1xf32>
    %61 = tpu.reciprocal %60 {approx = true} : vector<8x1xf32> -> vector<8x1xf32>
    %62 = vector.broadcast %61 : vector<8x1xf32> to vector<8x8xf32>
    %63 = arith.mulf %58, %62 : vector<8x8xf32>
    %64 = arith.truncf %63 : vector<8x8xf32> to vector<8x8xbf16>
    %cst_17 = arith.constant dense<0.000000e+00> : vector<8x16xf32>
    %65 = tpu.matmul %64, %48, %cst_17 {dimension_numbers = #tpu.dot_dimension_numbers<[1], [0], [0], [1], [0, 0, 1, 1], [], []>} : vector<8x8xbf16>, vector<8x16xbf16>, vector<8x16xf32> -> vector<8x16xf32>
    %66 = arith.truncf %65 : vector<8x16xf32> to vector<8x16xbf16>
    %67 = tpu.concatenate %45, %66 in 1 : vector<8x16xbf16>, vector<8x16xbf16> -> vector<8x32xbf16>
    %c0_18 = arith.constant 0 : index
    %c0_19 = arith.constant 0 : index
    %c0_20 = arith.constant 0 : index
    %68 = vector.load %arg7[%c0_18, %c0_19, %c0_20] : memref<2x32x32xbf16, #tpu.memory_space<vmem>>, vector<1x32x32xbf16>
    %69 = vector.shape_cast %68 : vector<1x32x32xbf16> to vector<32x32xbf16>
    %cst_21 = arith.constant dense<0.000000e+00> : vector<8x32xf32>
    %70 = tpu.matmul %67, %69, %cst_21 {dimension_numbers = #tpu.dot_dimension_numbers<[1], [0], [0], [1], [0, 0, 1, 1], [], []>} : vector<8x32xbf16>, vector<32x32xbf16>, vector<8x32xf32> -> vector<8x32xf32>
    %c0_22 = arith.constant 0 : index
    %c0_23 = arith.constant 0 : index
    %c0_24 = arith.constant 0 : index
    %71 = vector.load %arg8[%c0_22, %c0_23, %c0_24] : memref<2x1x32xf32, #tpu.memory_space<vmem>>, vector<1x1x32xf32>
    %72 = vector.shape_cast %71 : vector<1x1x32xf32> to vector<1x32xf32>
    %73 = vector.broadcast %72 : vector<1x32xf32> to vector<8x32xf32>
    %74 = arith.addf %70, %73 : vector<8x32xf32>
    %75 = arith.addf %15, %74 : vector<8x32xf32>
    %c0_25 = arith.constant 0 : index
    %c0_26 = arith.constant 0 : index
    %c0_27 = arith.constant 0 : index
    %76 = vector.load %arg9[%c0_25, %c0_26, %c0_27] : memref<2x1x32xf32, #tpu.memory_space<vmem>>, vector<1x1x32xf32>
    %77 = vector.shape_cast %76 : vector<1x1x32xf32> to vector<1x32xf32>
    %c0_28 = arith.constant 0 : index
    %c0_29 = arith.constant 0 : index
    %c0_30 = arith.constant 0 : index
    %78 = vector.load %arg10[%c0_28, %c0_29, %c0_30] : memref<2x1x32xf32, #tpu.memory_space<vmem>>, vector<1x1x32xf32>
    %79 = vector.shape_cast %78 : vector<1x1x32xf32> to vector<1x32xf32>
    %cst_31 = arith.constant dense<0.000000e+00> : vector<8xf32>
    %80 = vector.multi_reduction <add>, %75, %cst_31 [1] : vector<8x32xf32> to vector<8xf32>
    %81 = vector.shape_cast %80 : vector<8xf32> to vector<8x1xf32>
    %cst_32 = arith.constant 3.200000e+01 : f32
    %82 = vector.broadcast %cst_32 : f32 to vector<8x1xf32>
    %83 = arith.divf %81, %82 : vector<8x1xf32>
    %84 = vector.broadcast %83 : vector<8x1xf32> to vector<8x32xf32>
    %85 = arith.subf %75, %84 : vector<8x32xf32>
    %86 = arith.mulf %85, %85 : vector<8x32xf32>
    %cst_33 = arith.constant dense<0.000000e+00> : vector<8xf32>
    %87 = vector.multi_reduction <add>, %86, %cst_33 [1] : vector<8x32xf32> to vector<8xf32>
    %88 = vector.shape_cast %87 : vector<8xf32> to vector<8x1xf32>
    %cst_34 = arith.constant 3.200000e+01 : f32
    %89 = vector.broadcast %cst_34 : f32 to vector<8x1xf32>
    %90 = arith.divf %88, %89 : vector<8x1xf32>
    %cst_35 = arith.constant 9.99999974E-6 : f32
    %91 = vector.broadcast %cst_35 : f32 to vector<8x1xf32>
    %92 = arith.addf %90, %91 : vector<8x1xf32>
    %93 = math.rsqrt %92 : vector<8x1xf32>
    %94 = vector.broadcast %93 : vector<8x1xf32> to vector<8x32xf32>
    %95 = arith.mulf %85, %94 : vector<8x32xf32>
    %96 = vector.broadcast %77 : vector<1x32xf32> to vector<8x32xf32>
    %97 = arith.mulf %95, %96 : vector<8x32xf32>
    %98 = vector.broadcast %79 : vector<1x32xf32> to vector<8x32xf32>
    %99 = arith.addf %97, %98 : vector<8x32xf32>
    %100 = vector.broadcast %10 : vector<8x1xf32> to vector<8x32xf32>
    %101 = arith.mulf %99, %100 : vector<8x32xf32>
    %c0_36 = arith.constant 0 : index
    %c0_37 = arith.constant 0 : index
    %c0_38 = arith.constant 0 : index
    %102 = vector.load %arg11[%c0_36, %c0_37, %c0_38] : memref<2x96x64xbf16, #tpu.memory_space<vmem>>, vector<1x96x64xbf16>
    %103 = vector.shape_cast %102 : vector<1x96x64xbf16> to vector<96x64xbf16>
    %c0_39 = arith.constant 0 : index
    %c0_40 = arith.constant 0 : index
    %c0_41 = arith.constant 0 : index
    %104 = vector.load %arg12[%c0_39, %c0_40, %c0_41] : memref<2x1x64xf32, #tpu.memory_space<vmem>>, vector<1x1x64xf32>
    %105 = vector.shape_cast %104 : vector<1x1x64xf32> to vector<1x64xf32>
    %cst_42 = arith.constant 0.000000e+00 : f32
    %106 = vector.broadcast %cst_42 : f32 to vector<1x32xf32>
    %cst_43 = arith.constant 0.000000e+00 : f32
    %107 = vector.broadcast %cst_43 : f32 to vector<1x32xf32>
    %108 = tpu.concatenate %106, %101, %107 in 0 : vector<1x32xf32>, vector<8x32xf32>, vector<1x32xf32> -> vector<10x32xf32>
    %109 = vector.extract_strided_slice %108 {offsets = [0, 0], sizes = [8, 32], strides = [1, 1]} : vector<10x32xf32> to vector<8x32xf32>
    %110 = vector.extract_strided_slice %108 {offsets = [1, 0], sizes = [8, 32], strides = [1, 1]} : vector<10x32xf32> to vector<8x32xf32>
    %111 = vector.extract_strided_slice %108 {offsets = [2, 0], sizes = [8, 32], strides = [1, 1]} : vector<10x32xf32> to vector<8x32xf32>
    %112 = tpu.concatenate %109, %110, %111 in 1 : vector<8x32xf32>, vector<8x32xf32>, vector<8x32xf32> -> vector<8x96xf32>
    %113 = arith.truncf %112 : vector<8x96xf32> to vector<8x96xbf16>
    %cst_44 = arith.constant dense<0.000000e+00> : vector<8x64xf32>
    %114 = tpu.matmul %113, %103, %cst_44 {dimension_numbers = #tpu.dot_dimension_numbers<[1], [0], [0], [1], [0, 0, 1, 1], [], []>} : vector<8x96xbf16>, vector<96x64xbf16>, vector<8x64xf32> -> vector<8x64xf32>
    %115 = vector.broadcast %105 : vector<1x64xf32> to vector<8x64xf32>
    %116 = arith.addf %114, %115 : vector<8x64xf32>
    %cst_45 = arith.constant 0.000000e+00 : f32
    %117 = vector.broadcast %cst_45 : f32 to vector<8x64xf32>
    %118 = arith.maximumf %116, %117 : vector<8x64xf32>
    %119 = vector.broadcast %10 : vector<8x1xf32> to vector<8x64xf32>
    %120 = arith.mulf %118, %119 : vector<8x64xf32>
    %c0_46 = arith.constant 0 : index
    %c0_47 = arith.constant 0 : index
    %c0_48 = arith.constant 0 : index
    %121 = vector.load %arg13[%c0_46, %c0_47, %c0_48] : memref<2x192x32xbf16, #tpu.memory_space<vmem>>, vector<1x192x32xbf16>
    %122 = vector.shape_cast %121 : vector<1x192x32xbf16> to vector<192x32xbf16>
    %c0_49 = arith.constant 0 : index
    %c0_50 = arith.constant 0 : index
    %c0_51 = arith.constant 0 : index
    %123 = vector.load %arg14[%c0_49, %c0_50, %c0_51] : memref<2x1x32xf32, #tpu.memory_space<vmem>>, vector<1x1x32xf32>
    %124 = vector.shape_cast %123 : vector<1x1x32xf32> to vector<1x32xf32>
    %cst_52 = arith.constant 0.000000e+00 : f32
    %125 = vector.broadcast %cst_52 : f32 to vector<1x64xf32>
    %cst_53 = arith.constant 0.000000e+00 : f32
    %126 = vector.broadcast %cst_53 : f32 to vector<1x64xf32>
    %127 = tpu.concatenate %125, %120, %126 in 0 : vector<1x64xf32>, vector<8x64xf32>, vector<1x64xf32> -> vector<10x64xf32>
    %128 = vector.extract_strided_slice %127 {offsets = [0, 0], sizes = [8, 64], strides = [1, 1]} : vector<10x64xf32> to vector<8x64xf32>
    %129 = vector.extract_strided_slice %127 {offsets = [1, 0], sizes = [8, 64], strides = [1, 1]} : vector<10x64xf32> to vector<8x64xf32>
    %130 = vector.extract_strided_slice %127 {offsets = [2, 0], sizes = [8, 64], strides = [1, 1]} : vector<10x64xf32> to vector<8x64xf32>
    %131 = tpu.concatenate %128, %129, %130 in 1 : vector<8x64xf32>, vector<8x64xf32>, vector<8x64xf32> -> vector<8x192xf32>
    %132 = arith.truncf %131 : vector<8x192xf32> to vector<8x192xbf16>
    %cst_54 = arith.constant dense<0.000000e+00> : vector<8x32xf32>
    %133 = tpu.matmul %132, %122, %cst_54 {dimension_numbers = #tpu.dot_dimension_numbers<[1], [0], [0], [1], [0, 0, 1, 1], [], []>} : vector<8x192xbf16>, vector<192x32xbf16>, vector<8x32xf32> -> vector<8x32xf32>
    %134 = vector.broadcast %124 : vector<1x32xf32> to vector<8x32xf32>
    %135 = arith.addf %133, %134 : vector<8x32xf32>
    %136 = vector.broadcast %10 : vector<8x1xf32> to vector<8x32xf32>
    %137 = arith.mulf %135, %136 : vector<8x32xf32>
    %138 = arith.addf %99, %137 : vector<8x32xf32>
    %c0_55 = arith.constant 0 : index
    %c0_56 = arith.constant 0 : index
    %c0_57 = arith.constant 0 : index
    %139 = vector.load %arg15[%c0_55, %c0_56, %c0_57] : memref<2x1x32xf32, #tpu.memory_space<vmem>>, vector<1x1x32xf32>
    %140 = vector.shape_cast %139 : vector<1x1x32xf32> to vector<1x32xf32>
    %c0_58 = arith.constant 0 : index
    %c0_59 = arith.constant 0 : index
    %c0_60 = arith.constant 0 : index
    %141 = vector.load %arg16[%c0_58, %c0_59, %c0_60] : memref<2x1x32xf32, #tpu.memory_space<vmem>>, vector<1x1x32xf32>
    %142 = vector.shape_cast %141 : vector<1x1x32xf32> to vector<1x32xf32>
    %cst_61 = arith.constant dense<0.000000e+00> : vector<8xf32>
    %143 = vector.multi_reduction <add>, %138, %cst_61 [1] : vector<8x32xf32> to vector<8xf32>
    %144 = vector.shape_cast %143 : vector<8xf32> to vector<8x1xf32>
    %cst_62 = arith.constant 3.200000e+01 : f32
    %145 = vector.broadcast %cst_62 : f32 to vector<8x1xf32>
    %146 = arith.divf %144, %145 : vector<8x1xf32>
    %147 = vector.broadcast %146 : vector<8x1xf32> to vector<8x32xf32>
    %148 = arith.subf %138, %147 : vector<8x32xf32>
    %149 = arith.mulf %148, %148 : vector<8x32xf32>
    %cst_63 = arith.constant dense<0.000000e+00> : vector<8xf32>
    %150 = vector.multi_reduction <add>, %149, %cst_63 [1] : vector<8x32xf32> to vector<8xf32>
    %151 = vector.shape_cast %150 : vector<8xf32> to vector<8x1xf32>
    %cst_64 = arith.constant 3.200000e+01 : f32
    %152 = vector.broadcast %cst_64 : f32 to vector<8x1xf32>
    %153 = arith.divf %151, %152 : vector<8x1xf32>
    %cst_65 = arith.constant 9.99999974E-6 : f32
    %154 = vector.broadcast %cst_65 : f32 to vector<8x1xf32>
    %155 = arith.addf %153, %154 : vector<8x1xf32>
    %156 = math.rsqrt %155 : vector<8x1xf32>
    %157 = vector.broadcast %156 : vector<8x1xf32> to vector<8x32xf32>
    %158 = arith.mulf %148, %157 : vector<8x32xf32>
    %159 = vector.broadcast %140 : vector<1x32xf32> to vector<8x32xf32>
    %160 = arith.mulf %158, %159 : vector<8x32xf32>
    %161 = vector.broadcast %142 : vector<1x32xf32> to vector<8x32xf32>
    %162 = arith.addf %160, %161 : vector<8x32xf32>
    %163 = arith.truncf %162 : vector<8x32xf32> to vector<8x32xbf16>
    %c1 = arith.constant 1 : index
    %c0_66 = arith.constant 0 : index
    %c0_67 = arith.constant 0 : index
    %164 = vector.load %arg5[%c1, %c0_66, %c0_67] : memref<2x32x96xbf16, #tpu.memory_space<vmem>>, vector<1x32x96xbf16>
    %165 = vector.shape_cast %164 : vector<1x32x96xbf16> to vector<32x96xbf16>
    %cst_68 = arith.constant dense<0.000000e+00> : vector<8x96xf32>
    %166 = tpu.matmul %163, %165, %cst_68 {dimension_numbers = #tpu.dot_dimension_numbers<[1], [0], [0], [1], [0, 0, 1, 1], [], []>} : vector<8x32xbf16>, vector<32x96xbf16>, vector<8x96xf32> -> vector<8x96xf32>
    %c1_69 = arith.constant 1 : index
    %c0_70 = arith.constant 0 : index
    %c0_71 = arith.constant 0 : index
    %167 = vector.load %arg6[%c1_69, %c0_70, %c0_71] : memref<2x1x96xf32, #tpu.memory_space<vmem>>, vector<1x1x96xf32>
    %168 = vector.shape_cast %167 : vector<1x1x96xf32> to vector<1x96xf32>
    %169 = vector.broadcast %168 : vector<1x96xf32> to vector<8x96xf32>
    %170 = arith.addf %166, %169 : vector<8x96xf32>
    %171 = arith.truncf %170 : vector<8x96xf32> to vector<8x96xbf16>
    %172 = vector.extract_strided_slice %171 {offsets = [0, 0], sizes = [8, 16], strides = [1, 1]} : vector<8x96xbf16> to vector<8x16xbf16>
    %173 = vector.extract_strided_slice %171 {offsets = [0, 32], sizes = [8, 16], strides = [1, 1]} : vector<8x96xbf16> to vector<8x16xbf16>
    %174 = vector.extract_strided_slice %171 {offsets = [0, 64], sizes = [8, 16], strides = [1, 1]} : vector<8x96xbf16> to vector<8x16xbf16>
    %cst_72 = arith.constant dense<0.000000e+00> : vector<8x8xf32>
    %175 = tpu.matmul %172, %173, %cst_72 {dimension_numbers = #tpu.dot_dimension_numbers<[1], [1], [0], [0], [0, 0, 1, 0], [], []>} : vector<8x16xbf16>, vector<8x16xbf16>, vector<8x8xf32> -> vector<8x8xf32>
    %cst_73 = arith.constant -1.000000e+04 : f32
    %176 = vector.shape_cast %13 : vector<1x8xi1> to vector<1x8xi1>
    %177 = vector.broadcast %176 : vector<1x8xi1> to vector<8x8xi1>
    %178 = vector.broadcast %cst_73 : f32 to vector<8x8xf32>
    %179 = arith.select %177, %175, %178 : vector<8x8xi1>, vector<8x8xf32>
    %cst_74 = arith.constant dense<0xFF800000> : vector<8xf32>
    %180 = vector.multi_reduction <maximumf>, %179, %cst_74 [1] : vector<8x8xf32> to vector<8xf32>
    %181 = vector.shape_cast %180 : vector<8xf32> to vector<8x1xf32>
    %182 = vector.broadcast %181 : vector<8x1xf32> to vector<8x8xf32>
    %183 = arith.subf %179, %182 : vector<8x8xf32>
    %184 = math.exp %183 : vector<8x8xf32>
    %cst_75 = arith.constant dense<0.000000e+00> : vector<8xf32>
    %185 = vector.multi_reduction <add>, %184, %cst_75 [1] : vector<8x8xf32> to vector<8xf32>
    %186 = vector.shape_cast %185 : vector<8xf32> to vector<8x1xf32>
    %187 = tpu.reciprocal %186 {approx = true} : vector<8x1xf32> -> vector<8x1xf32>
    %188 = vector.broadcast %187 : vector<8x1xf32> to vector<8x8xf32>
    %189 = arith.mulf %184, %188 : vector<8x8xf32>
    %190 = arith.truncf %189 : vector<8x8xf32> to vector<8x8xbf16>
    %cst_76 = arith.constant dense<0.000000e+00> : vector<8x16xf32>
    %191 = tpu.matmul %190, %174, %cst_76 {dimension_numbers = #tpu.dot_dimension_numbers<[1], [0], [0], [1], [0, 0, 1, 1], [], []>} : vector<8x8xbf16>, vector<8x16xbf16>, vector<8x16xf32> -> vector<8x16xf32>
    %192 = arith.truncf %191 : vector<8x16xf32> to vector<8x16xbf16>
    %193 = vector.extract_strided_slice %171 {offsets = [0, 16], sizes = [8, 16], strides = [1, 1]} : vector<8x96xbf16> to vector<8x16xbf16>
    %194 = vector.extract_strided_slice %171 {offsets = [0, 48], sizes = [8, 16], strides = [1, 1]} : vector<8x96xbf16> to vector<8x16xbf16>
    %195 = vector.extract_strided_slice %171 {offsets = [0, 80], sizes = [8, 16], strides = [1, 1]} : vector<8x96xbf16> to vector<8x16xbf16>
    %cst_77 = arith.constant dense<0.000000e+00> : vector<8x8xf32>
    %196 = tpu.matmul %193, %194, %cst_77 {dimension_numbers = #tpu.dot_dimension_numbers<[1], [1], [0], [0], [0, 0, 1, 0], [], []>} : vector<8x16xbf16>, vector<8x16xbf16>, vector<8x8xf32> -> vector<8x8xf32>
    %cst_78 = arith.constant -1.000000e+04 : f32
    %197 = vector.shape_cast %13 : vector<1x8xi1> to vector<1x8xi1>
    %198 = vector.broadcast %197 : vector<1x8xi1> to vector<8x8xi1>
    %199 = vector.broadcast %cst_78 : f32 to vector<8x8xf32>
    %200 = arith.select %198, %196, %199 : vector<8x8xi1>, vector<8x8xf32>
    %cst_79 = arith.constant dense<0xFF800000> : vector<8xf32>
    %201 = vector.multi_reduction <maximumf>, %200, %cst_79 [1] : vector<8x8xf32> to vector<8xf32>
    %202 = vector.shape_cast %201 : vector<8xf32> to vector<8x1xf32>
    %203 = vector.broadcast %202 : vector<8x1xf32> to vector<8x8xf32>
    %204 = arith.subf %200, %203 : vector<8x8xf32>
    %205 = math.exp %204 : vector<8x8xf32>
    %cst_80 = arith.constant dense<0.000000e+00> : vector<8xf32>
    %206 = vector.multi_reduction <add>, %205, %cst_80 [1] : vector<8x8xf32> to vector<8xf32>
    %207 = vector.shape_cast %206 : vector<8xf32> to vector<8x1xf32>
    %208 = tpu.reciprocal %207 {approx = true} : vector<8x1xf32> -> vector<8x1xf32>
    %209 = vector.broadcast %208 : vector<8x1xf32> to vector<8x8xf32>
    %210 = arith.mulf %205, %209 : vector<8x8xf32>
    %211 = arith.truncf %210 : vector<8x8xf32> to vector<8x8xbf16>
    %cst_81 = arith.constant dense<0.000000e+00> : vector<8x16xf32>
    %212 = tpu.matmul %211, %195, %cst_81 {dimension_numbers = #tpu.dot_dimension_numbers<[1], [0], [0], [1], [0, 0, 1, 1], [], []>} : vector<8x8xbf16>, vector<8x16xbf16>, vector<8x16xf32> -> vector<8x16xf32>
    %213 = arith.truncf %212 : vector<8x16xf32> to vector<8x16xbf16>
    %214 = tpu.concatenate %192, %213 in 1 : vector<8x16xbf16>, vector<8x16xbf16> -> vector<8x32xbf16>
    %c1_82 = arith.constant 1 : index
    %c0_83 = arith.constant 0 : index
    %c0_84 = arith.constant 0 : index
    %215 = vector.load %arg7[%c1_82, %c0_83, %c0_84] : memref<2x32x32xbf16, #tpu.memory_space<vmem>>, vector<1x32x32xbf16>
    %216 = vector.shape_cast %215 : vector<1x32x32xbf16> to vector<32x32xbf16>
    %cst_85 = arith.constant dense<0.000000e+00> : vector<8x32xf32>
    %217 = tpu.matmul %214, %216, %cst_85 {dimension_numbers = #tpu.dot_dimension_numbers<[1], [0], [0], [1], [0, 0, 1, 1], [], []>} : vector<8x32xbf16>, vector<32x32xbf16>, vector<8x32xf32> -> vector<8x32xf32>
    %c1_86 = arith.constant 1 : index
    %c0_87 = arith.constant 0 : index
    %c0_88 = arith.constant 0 : index
    %218 = vector.load %arg8[%c1_86, %c0_87, %c0_88] : memref<2x1x32xf32, #tpu.memory_space<vmem>>, vector<1x1x32xf32>
    %219 = vector.shape_cast %218 : vector<1x1x32xf32> to vector<1x32xf32>
    %220 = vector.broadcast %219 : vector<1x32xf32> to vector<8x32xf32>
    %221 = arith.addf %217, %220 : vector<8x32xf32>
    %222 = arith.addf %162, %221 : vector<8x32xf32>
    %c1_89 = arith.constant 1 : index
    %c0_90 = arith.constant 0 : index
    %c0_91 = arith.constant 0 : index
    %223 = vector.load %arg9[%c1_89, %c0_90, %c0_91] : memref<2x1x32xf32, #tpu.memory_space<vmem>>, vector<1x1x32xf32>
    %224 = vector.shape_cast %223 : vector<1x1x32xf32> to vector<1x32xf32>
    %c1_92 = arith.constant 1 : index
    %c0_93 = arith.constant 0 : index
    %c0_94 = arith.constant 0 : index
    %225 = vector.load %arg10[%c1_92, %c0_93, %c0_94] : memref<2x1x32xf32, #tpu.memory_space<vmem>>, vector<1x1x32xf32>
    %226 = vector.shape_cast %225 : vector<1x1x32xf32> to vector<1x32xf32>
    %cst_95 = arith.constant dense<0.000000e+00> : vector<8xf32>
    %227 = vector.multi_reduction <add>, %222, %cst_95 [1] : vector<8x32xf32> to vector<8xf32>
    %228 = vector.shape_cast %227 : vector<8xf32> to vector<8x1xf32>
    %cst_96 = arith.constant 3.200000e+01 : f32
    %229 = vector.broadcast %cst_96 : f32 to vector<8x1xf32>
    %230 = arith.divf %228, %229 : vector<8x1xf32>
    %231 = vector.broadcast %230 : vector<8x1xf32> to vector<8x32xf32>
    %232 = arith.subf %222, %231 : vector<8x32xf32>
    %233 = arith.mulf %232, %232 : vector<8x32xf32>
    %cst_97 = arith.constant dense<0.000000e+00> : vector<8xf32>
    %234 = vector.multi_reduction <add>, %233, %cst_97 [1] : vector<8x32xf32> to vector<8xf32>
    %235 = vector.shape_cast %234 : vector<8xf32> to vector<8x1xf32>
    %cst_98 = arith.constant 3.200000e+01 : f32
    %236 = vector.broadcast %cst_98 : f32 to vector<8x1xf32>
    %237 = arith.divf %235, %236 : vector<8x1xf32>
    %cst_99 = arith.constant 9.99999974E-6 : f32
    %238 = vector.broadcast %cst_99 : f32 to vector<8x1xf32>
    %239 = arith.addf %237, %238 : vector<8x1xf32>
    %240 = math.rsqrt %239 : vector<8x1xf32>
    %241 = vector.broadcast %240 : vector<8x1xf32> to vector<8x32xf32>
    %242 = arith.mulf %232, %241 : vector<8x32xf32>
    %243 = vector.broadcast %224 : vector<1x32xf32> to vector<8x32xf32>
    %244 = arith.mulf %242, %243 : vector<8x32xf32>
    %245 = vector.broadcast %226 : vector<1x32xf32> to vector<8x32xf32>
    %246 = arith.addf %244, %245 : vector<8x32xf32>
    %247 = vector.broadcast %10 : vector<8x1xf32> to vector<8x32xf32>
    %248 = arith.mulf %246, %247 : vector<8x32xf32>
    %c1_100 = arith.constant 1 : index
    %c0_101 = arith.constant 0 : index
    %c0_102 = arith.constant 0 : index
    %249 = vector.load %arg11[%c1_100, %c0_101, %c0_102] : memref<2x96x64xbf16, #tpu.memory_space<vmem>>, vector<1x96x64xbf16>
    %250 = vector.shape_cast %249 : vector<1x96x64xbf16> to vector<96x64xbf16>
    %c1_103 = arith.constant 1 : index
    %c0_104 = arith.constant 0 : index
    %c0_105 = arith.constant 0 : index
    %251 = vector.load %arg12[%c1_103, %c0_104, %c0_105] : memref<2x1x64xf32, #tpu.memory_space<vmem>>, vector<1x1x64xf32>
    %252 = vector.shape_cast %251 : vector<1x1x64xf32> to vector<1x64xf32>
    %cst_106 = arith.constant 0.000000e+00 : f32
    %253 = vector.broadcast %cst_106 : f32 to vector<1x32xf32>
    %cst_107 = arith.constant 0.000000e+00 : f32
    %254 = vector.broadcast %cst_107 : f32 to vector<1x32xf32>
    %255 = tpu.concatenate %253, %248, %254 in 0 : vector<1x32xf32>, vector<8x32xf32>, vector<1x32xf32> -> vector<10x32xf32>
    %256 = vector.extract_strided_slice %255 {offsets = [0, 0], sizes = [8, 32], strides = [1, 1]} : vector<10x32xf32> to vector<8x32xf32>
    %257 = vector.extract_strided_slice %255 {offsets = [1, 0], sizes = [8, 32], strides = [1, 1]} : vector<10x32xf32> to vector<8x32xf32>
    %258 = vector.extract_strided_slice %255 {offsets = [2, 0], sizes = [8, 32], strides = [1, 1]} : vector<10x32xf32> to vector<8x32xf32>
    %259 = tpu.concatenate %256, %257, %258 in 1 : vector<8x32xf32>, vector<8x32xf32>, vector<8x32xf32> -> vector<8x96xf32>
    %260 = arith.truncf %259 : vector<8x96xf32> to vector<8x96xbf16>
    %cst_108 = arith.constant dense<0.000000e+00> : vector<8x64xf32>
    %261 = tpu.matmul %260, %250, %cst_108 {dimension_numbers = #tpu.dot_dimension_numbers<[1], [0], [0], [1], [0, 0, 1, 1], [], []>} : vector<8x96xbf16>, vector<96x64xbf16>, vector<8x64xf32> -> vector<8x64xf32>
    %262 = vector.broadcast %252 : vector<1x64xf32> to vector<8x64xf32>
    %263 = arith.addf %261, %262 : vector<8x64xf32>
    %cst_109 = arith.constant 0.000000e+00 : f32
    %264 = vector.broadcast %cst_109 : f32 to vector<8x64xf32>
    %265 = arith.maximumf %263, %264 : vector<8x64xf32>
    %266 = vector.broadcast %10 : vector<8x1xf32> to vector<8x64xf32>
    %267 = arith.mulf %265, %266 : vector<8x64xf32>
    %c1_110 = arith.constant 1 : index
    %c0_111 = arith.constant 0 : index
    %c0_112 = arith.constant 0 : index
    %268 = vector.load %arg13[%c1_110, %c0_111, %c0_112] : memref<2x192x32xbf16, #tpu.memory_space<vmem>>, vector<1x192x32xbf16>
    %269 = vector.shape_cast %268 : vector<1x192x32xbf16> to vector<192x32xbf16>
    %c1_113 = arith.constant 1 : index
    %c0_114 = arith.constant 0 : index
    %c0_115 = arith.constant 0 : index
    %270 = vector.load %arg14[%c1_113, %c0_114, %c0_115] : memref<2x1x32xf32, #tpu.memory_space<vmem>>, vector<1x1x32xf32>
    %271 = vector.shape_cast %270 : vector<1x1x32xf32> to vector<1x32xf32>
    %cst_116 = arith.constant 0.000000e+00 : f32
    %272 = vector.broadcast %cst_116 : f32 to vector<1x64xf32>
    %cst_117 = arith.constant 0.000000e+00 : f32
    %273 = vector.broadcast %cst_117 : f32 to vector<1x64xf32>
    %274 = tpu.concatenate %272, %267, %273 in 0 : vector<1x64xf32>, vector<8x64xf32>, vector<1x64xf32> -> vector<10x64xf32>
    %275 = vector.extract_strided_slice %274 {offsets = [0, 0], sizes = [8, 64], strides = [1, 1]} : vector<10x64xf32> to vector<8x64xf32>
    %276 = vector.extract_strided_slice %274 {offsets = [1, 0], sizes = [8, 64], strides = [1, 1]} : vector<10x64xf32> to vector<8x64xf32>
    %277 = vector.extract_strided_slice %274 {offsets = [2, 0], sizes = [8, 64], strides = [1, 1]} : vector<10x64xf32> to vector<8x64xf32>
    %278 = tpu.concatenate %275, %276, %277 in 1 : vector<8x64xf32>, vector<8x64xf32>, vector<8x64xf32> -> vector<8x192xf32>
    %279 = arith.truncf %278 : vector<8x192xf32> to vector<8x192xbf16>
    %cst_118 = arith.constant dense<0.000000e+00> : vector<8x32xf32>
    %280 = tpu.matmul %279, %269, %cst_118 {dimension_numbers = #tpu.dot_dimension_numbers<[1], [0], [0], [1], [0, 0, 1, 1], [], []>} : vector<8x192xbf16>, vector<192x32xbf16>, vector<8x32xf32> -> vector<8x32xf32>
    %281 = vector.broadcast %271 : vector<1x32xf32> to vector<8x32xf32>
    %282 = arith.addf %280, %281 : vector<8x32xf32>
    %283 = vector.broadcast %10 : vector<8x1xf32> to vector<8x32xf32>
    %284 = arith.mulf %282, %283 : vector<8x32xf32>
    %285 = arith.addf %246, %284 : vector<8x32xf32>
    %c1_119 = arith.constant 1 : index
    %c0_120 = arith.constant 0 : index
    %c0_121 = arith.constant 0 : index
    %286 = vector.load %arg15[%c1_119, %c0_120, %c0_121] : memref<2x1x32xf32, #tpu.memory_space<vmem>>, vector<1x1x32xf32>
    %287 = vector.shape_cast %286 : vector<1x1x32xf32> to vector<1x32xf32>
    %c1_122 = arith.constant 1 : index
    %c0_123 = arith.constant 0 : index
    %c0_124 = arith.constant 0 : index
    %288 = vector.load %arg16[%c1_122, %c0_123, %c0_124] : memref<2x1x32xf32, #tpu.memory_space<vmem>>, vector<1x1x32xf32>
    %289 = vector.shape_cast %288 : vector<1x1x32xf32> to vector<1x32xf32>
    %cst_125 = arith.constant dense<0.000000e+00> : vector<8xf32>
    %290 = vector.multi_reduction <add>, %285, %cst_125 [1] : vector<8x32xf32> to vector<8xf32>
    %291 = vector.shape_cast %290 : vector<8xf32> to vector<8x1xf32>
    %cst_126 = arith.constant 3.200000e+01 : f32
    %292 = vector.broadcast %cst_126 : f32 to vector<8x1xf32>
    %293 = arith.divf %291, %292 : vector<8x1xf32>
    %294 = vector.broadcast %293 : vector<8x1xf32> to vector<8x32xf32>
    %295 = arith.subf %285, %294 : vector<8x32xf32>
    %296 = arith.mulf %295, %295 : vector<8x32xf32>
    %cst_127 = arith.constant dense<0.000000e+00> : vector<8xf32>
    %297 = vector.multi_reduction <add>, %296, %cst_127 [1] : vector<8x32xf32> to vector<8xf32>
    %298 = vector.shape_cast %297 : vector<8xf32> to vector<8x1xf32>
    %cst_128 = arith.constant 3.200000e+01 : f32
    %299 = vector.broadcast %cst_128 : f32 to vector<8x1xf32>
    %300 = arith.divf %298, %299 : vector<8x1xf32>
    %cst_129 = arith.constant 9.99999974E-6 : f32
    %301 = vector.broadcast %cst_129 : f32 to vector<8x1xf32>
    %302 = arith.addf %300, %301 : vector<8x1xf32>
    %303 = math.rsqrt %302 : vector<8x1xf32>
    %304 = vector.broadcast %303 : vector<8x1xf32> to vector<8x32xf32>
    %305 = arith.mulf %295, %304 : vector<8x32xf32>
    %306 = vector.broadcast %287 : vector<1x32xf32> to vector<8x32xf32>
    %307 = arith.mulf %305, %306 : vector<8x32xf32>
    %308 = vector.broadcast %289 : vector<1x32xf32> to vector<8x32xf32>
    %309 = arith.addf %307, %308 : vector<8x32xf32>
    %310 = vector.broadcast %10 : vector<8x1xf32> to vector<8x32xf32>
    %311 = arith.mulf %309, %310 : vector<8x32xf32>
    %c0_130 = arith.constant 0 : index
    %c0_131 = arith.constant 0 : index
    %c0_132 = arith.constant 0 : index
    %312 = vector.load %arg4[%c0_130, %c0_131, %c0_132] : memref<1x12x8xf32, #tpu.memory_space<vmem>>, vector<1x12x8xf32>
    %313 = vector.shape_cast %312 : vector<1x12x8xf32> to vector<12x8xf32>
    %314 = arith.truncf %313 : vector<12x8xf32> to vector<12x8xbf16>
    %315 = arith.truncf %311 : vector<8x32xf32> to vector<8x32xbf16>
    %cst_133 = arith.constant dense<0.000000e+00> : vector<12x32xf32>
    %316 = tpu.matmul %314, %315, %cst_133 {dimension_numbers = #tpu.dot_dimension_numbers<[1], [0], [0], [1], [0, 0, 1, 1], [], []>} : vector<12x8xbf16>, vector<8x32xbf16>, vector<12x32xf32> -> vector<12x32xf32>
    %317 = tpu.iota {dimensions = array<i32: 0>} : vector<12x1xi32>
    %318 = vector.broadcast %3 : i32 to vector<12x1xi32>
    %319 = arith.cmpi slt, %317, %318 : vector<12x1xi32>
    %320 = arith.extui %319 : vector<12x1xi1> to vector<12x1xi32>
    %321 = arith.sitofp %320 : vector<12x1xi32> to vector<12x1xf32>
    %322 = tpu.iota {dimensions = array<i32: 1>} : vector<1x12xi32>
    %323 = vector.broadcast %3 : i32 to vector<1x12xi32>
    %324 = arith.cmpi slt, %322, %323 : vector<1x12xi32>
    %325 = vector.broadcast %321 : vector<12x1xf32> to vector<12x32xf32>
    %326 = arith.mulf %316, %325 : vector<12x32xf32>
    %327 = arith.truncf %326 : vector<12x32xf32> to vector<12x32xbf16>
    %c0_134 = arith.constant 0 : index
    %c0_135 = arith.constant 0 : index
    %c0_136 = arith.constant 0 : index
    %328 = vector.load %arg17[%c0_134, %c0_135, %c0_136] : memref<2x32x96xbf16, #tpu.memory_space<vmem>>, vector<1x32x96xbf16>
    %329 = vector.shape_cast %328 : vector<1x32x96xbf16> to vector<32x96xbf16>
    %cst_137 = arith.constant dense<0.000000e+00> : vector<12x96xf32>
    %330 = tpu.matmul %327, %329, %cst_137 {dimension_numbers = #tpu.dot_dimension_numbers<[1], [0], [0], [1], [0, 0, 1, 1], [], []>} : vector<12x32xbf16>, vector<32x96xbf16>, vector<12x96xf32> -> vector<12x96xf32>
    %c0_138 = arith.constant 0 : index
    %c0_139 = arith.constant 0 : index
    %c0_140 = arith.constant 0 : index
    %331 = vector.load %arg18[%c0_138, %c0_139, %c0_140] : memref<2x1x96xf32, #tpu.memory_space<vmem>>, vector<1x1x96xf32>
    %332 = vector.shape_cast %331 : vector<1x1x96xf32> to vector<1x96xf32>
    %333 = vector.broadcast %332 : vector<1x96xf32> to vector<12x96xf32>
    %334 = arith.addf %330, %333 : vector<12x96xf32>
    %335 = arith.truncf %334 : vector<12x96xf32> to vector<12x96xbf16>
    %336 = vector.extract_strided_slice %335 {offsets = [0, 0], sizes = [12, 16], strides = [1, 1]} : vector<12x96xbf16> to vector<12x16xbf16>
    %337 = vector.extract_strided_slice %335 {offsets = [0, 32], sizes = [12, 16], strides = [1, 1]} : vector<12x96xbf16> to vector<12x16xbf16>
    %338 = vector.extract_strided_slice %335 {offsets = [0, 64], sizes = [12, 16], strides = [1, 1]} : vector<12x96xbf16> to vector<12x16xbf16>
    %cst_141 = arith.constant dense<0.000000e+00> : vector<12x12xf32>
    %339 = tpu.matmul %336, %337, %cst_141 {dimension_numbers = #tpu.dot_dimension_numbers<[1], [1], [0], [0], [0, 0, 1, 0], [], []>} : vector<12x16xbf16>, vector<12x16xbf16>, vector<12x12xf32> -> vector<12x12xf32>
    %cst_142 = arith.constant -1.000000e+04 : f32
    %340 = vector.shape_cast %324 : vector<1x12xi1> to vector<1x12xi1>
    %341 = vector.broadcast %340 : vector<1x12xi1> to vector<12x12xi1>
    %342 = vector.broadcast %cst_142 : f32 to vector<12x12xf32>
    %343 = arith.select %341, %339, %342 : vector<12x12xi1>, vector<12x12xf32>
    %cst_143 = arith.constant dense<0xFF800000> : vector<12xf32>
    %344 = vector.multi_reduction <maximumf>, %343, %cst_143 [1] : vector<12x12xf32> to vector<12xf32>
    %345 = vector.shape_cast %344 : vector<12xf32> to vector<12x1xf32>
    %346 = vector.broadcast %345 : vector<12x1xf32> to vector<12x12xf32>
    %347 = arith.subf %343, %346 : vector<12x12xf32>
    %348 = math.exp %347 : vector<12x12xf32>
    %cst_144 = arith.constant dense<0.000000e+00> : vector<12xf32>
    %349 = vector.multi_reduction <add>, %348, %cst_144 [1] : vector<12x12xf32> to vector<12xf32>
    %350 = vector.shape_cast %349 : vector<12xf32> to vector<12x1xf32>
    %351 = tpu.reciprocal %350 {approx = true} : vector<12x1xf32> -> vector<12x1xf32>
    %352 = vector.broadcast %351 : vector<12x1xf32> to vector<12x12xf32>
    %353 = arith.mulf %348, %352 : vector<12x12xf32>
    %354 = arith.truncf %353 : vector<12x12xf32> to vector<12x12xbf16>
    %cst_145 = arith.constant dense<0.000000e+00> : vector<12x16xf32>
    %355 = tpu.matmul %354, %338, %cst_145 {dimension_numbers = #tpu.dot_dimension_numbers<[1], [0], [0], [1], [0, 0, 1, 1], [], []>} : vector<12x12xbf16>, vector<12x16xbf16>, vector<12x16xf32> -> vector<12x16xf32>
    %356 = arith.truncf %355 : vector<12x16xf32> to vector<12x16xbf16>
    %357 = vector.extract_strided_slice %335 {offsets = [0, 16], sizes = [12, 16], strides = [1, 1]} : vector<12x96xbf16> to vector<12x16xbf16>
    %358 = vector.extract_strided_slice %335 {offsets = [0, 48], sizes = [12, 16], strides = [1, 1]} : vector<12x96xbf16> to vector<12x16xbf16>
    %359 = vector.extract_strided_slice %335 {offsets = [0, 80], sizes = [12, 16], strides = [1, 1]} : vector<12x96xbf16> to vector<12x16xbf16>
    %cst_146 = arith.constant dense<0.000000e+00> : vector<12x12xf32>
    %360 = tpu.matmul %357, %358, %cst_146 {dimension_numbers = #tpu.dot_dimension_numbers<[1], [1], [0], [0], [0, 0, 1, 0], [], []>} : vector<12x16xbf16>, vector<12x16xbf16>, vector<12x12xf32> -> vector<12x12xf32>
    %cst_147 = arith.constant -1.000000e+04 : f32
    %361 = vector.shape_cast %324 : vector<1x12xi1> to vector<1x12xi1>
    %362 = vector.broadcast %361 : vector<1x12xi1> to vector<12x12xi1>
    %363 = vector.broadcast %cst_147 : f32 to vector<12x12xf32>
    %364 = arith.select %362, %360, %363 : vector<12x12xi1>, vector<12x12xf32>
    %cst_148 = arith.constant dense<0xFF800000> : vector<12xf32>
    %365 = vector.multi_reduction <maximumf>, %364, %cst_148 [1] : vector<12x12xf32> to vector<12xf32>
    %366 = vector.shape_cast %365 : vector<12xf32> to vector<12x1xf32>
    %367 = vector.broadcast %366 : vector<12x1xf32> to vector<12x12xf32>
    %368 = arith.subf %364, %367 : vector<12x12xf32>
    %369 = math.exp %368 : vector<12x12xf32>
    %cst_149 = arith.constant dense<0.000000e+00> : vector<12xf32>
    %370 = vector.multi_reduction <add>, %369, %cst_149 [1] : vector<12x12xf32> to vector<12xf32>
    %371 = vector.shape_cast %370 : vector<12xf32> to vector<12x1xf32>
    %372 = tpu.reciprocal %371 {approx = true} : vector<12x1xf32> -> vector<12x1xf32>
    %373 = vector.broadcast %372 : vector<12x1xf32> to vector<12x12xf32>
    %374 = arith.mulf %369, %373 : vector<12x12xf32>
    %375 = arith.truncf %374 : vector<12x12xf32> to vector<12x12xbf16>
    %cst_150 = arith.constant dense<0.000000e+00> : vector<12x16xf32>
    %376 = tpu.matmul %375, %359, %cst_150 {dimension_numbers = #tpu.dot_dimension_numbers<[1], [0], [0], [1], [0, 0, 1, 1], [], []>} : vector<12x12xbf16>, vector<12x16xbf16>, vector<12x16xf32> -> vector<12x16xf32>
    %377 = arith.truncf %376 : vector<12x16xf32> to vector<12x16xbf16>
    %378 = tpu.concatenate %356, %377 in 1 : vector<12x16xbf16>, vector<12x16xbf16> -> vector<12x32xbf16>
    %c0_151 = arith.constant 0 : index
    %c0_152 = arith.constant 0 : index
    %c0_153 = arith.constant 0 : index
    %379 = vector.load %arg19[%c0_151, %c0_152, %c0_153] : memref<2x32x32xbf16, #tpu.memory_space<vmem>>, vector<1x32x32xbf16>
    %380 = vector.shape_cast %379 : vector<1x32x32xbf16> to vector<32x32xbf16>
    %cst_154 = arith.constant dense<0.000000e+00> : vector<12x32xf32>
    %381 = tpu.matmul %378, %380, %cst_154 {dimension_numbers = #tpu.dot_dimension_numbers<[1], [0], [0], [1], [0, 0, 1, 1], [], []>} : vector<12x32xbf16>, vector<32x32xbf16>, vector<12x32xf32> -> vector<12x32xf32>
    %c0_155 = arith.constant 0 : index
    %c0_156 = arith.constant 0 : index
    %c0_157 = arith.constant 0 : index
    %382 = vector.load %arg20[%c0_155, %c0_156, %c0_157] : memref<2x1x32xf32, #tpu.memory_space<vmem>>, vector<1x1x32xf32>
    %383 = vector.shape_cast %382 : vector<1x1x32xf32> to vector<1x32xf32>
    %384 = vector.broadcast %383 : vector<1x32xf32> to vector<12x32xf32>
    %385 = arith.addf %381, %384 : vector<12x32xf32>
    %386 = arith.addf %326, %385 : vector<12x32xf32>
    %c0_158 = arith.constant 0 : index
    %c0_159 = arith.constant 0 : index
    %c0_160 = arith.constant 0 : index
    %387 = vector.load %arg21[%c0_158, %c0_159, %c0_160] : memref<2x1x32xf32, #tpu.memory_space<vmem>>, vector<1x1x32xf32>
    %388 = vector.shape_cast %387 : vector<1x1x32xf32> to vector<1x32xf32>
    %c0_161 = arith.constant 0 : index
    %c0_162 = arith.constant 0 : index
    %c0_163 = arith.constant 0 : index
    %389 = vector.load %arg22[%c0_161, %c0_162, %c0_163] : memref<2x1x32xf32, #tpu.memory_space<vmem>>, vector<1x1x32xf32>
    %390 = vector.shape_cast %389 : vector<1x1x32xf32> to vector<1x32xf32>
    %cst_164 = arith.constant dense<0.000000e+00> : vector<12xf32>
    %391 = vector.multi_reduction <add>, %386, %cst_164 [1] : vector<12x32xf32> to vector<12xf32>
    %392 = vector.shape_cast %391 : vector<12xf32> to vector<12x1xf32>
    %cst_165 = arith.constant 3.200000e+01 : f32
    %393 = vector.broadcast %cst_165 : f32 to vector<12x1xf32>
    %394 = arith.divf %392, %393 : vector<12x1xf32>
    %395 = vector.broadcast %394 : vector<12x1xf32> to vector<12x32xf32>
    %396 = arith.subf %386, %395 : vector<12x32xf32>
    %397 = arith.mulf %396, %396 : vector<12x32xf32>
    %cst_166 = arith.constant dense<0.000000e+00> : vector<12xf32>
    %398 = vector.multi_reduction <add>, %397, %cst_166 [1] : vector<12x32xf32> to vector<12xf32>
    %399 = vector.shape_cast %398 : vector<12xf32> to vector<12x1xf32>
    %cst_167 = arith.constant 3.200000e+01 : f32
    %400 = vector.broadcast %cst_167 : f32 to vector<12x1xf32>
    %401 = arith.divf %399, %400 : vector<12x1xf32>
    %cst_168 = arith.constant 9.99999974E-6 : f32
    %402 = vector.broadcast %cst_168 : f32 to vector<12x1xf32>
    %403 = arith.addf %401, %402 : vector<12x1xf32>
    %404 = math.rsqrt %403 : vector<12x1xf32>
    %405 = vector.broadcast %404 : vector<12x1xf32> to vector<12x32xf32>
    %406 = arith.mulf %396, %405 : vector<12x32xf32>
    %407 = vector.broadcast %388 : vector<1x32xf32> to vector<12x32xf32>
    %408 = arith.mulf %406, %407 : vector<12x32xf32>
    %409 = vector.broadcast %390 : vector<1x32xf32> to vector<12x32xf32>
    %410 = arith.addf %408, %409 : vector<12x32xf32>
    %411 = vector.broadcast %321 : vector<12x1xf32> to vector<12x32xf32>
    %412 = arith.mulf %410, %411 : vector<12x32xf32>
    %c0_169 = arith.constant 0 : index
    %c0_170 = arith.constant 0 : index
    %c0_171 = arith.constant 0 : index
    %413 = vector.load %arg23[%c0_169, %c0_170, %c0_171] : memref<2x96x64xbf16, #tpu.memory_space<vmem>>, vector<1x96x64xbf16>
    %414 = vector.shape_cast %413 : vector<1x96x64xbf16> to vector<96x64xbf16>
    %c0_172 = arith.constant 0 : index
    %c0_173 = arith.constant 0 : index
    %c0_174 = arith.constant 0 : index
    %415 = vector.load %arg24[%c0_172, %c0_173, %c0_174] : memref<2x1x64xf32, #tpu.memory_space<vmem>>, vector<1x1x64xf32>
    %416 = vector.shape_cast %415 : vector<1x1x64xf32> to vector<1x64xf32>
    %cst_175 = arith.constant 0.000000e+00 : f32
    %417 = vector.broadcast %cst_175 : f32 to vector<1x32xf32>
    %cst_176 = arith.constant 0.000000e+00 : f32
    %418 = vector.broadcast %cst_176 : f32 to vector<1x32xf32>
    %419 = tpu.concatenate %417, %412, %418 in 0 : vector<1x32xf32>, vector<12x32xf32>, vector<1x32xf32> -> vector<14x32xf32>
    %420 = vector.extract_strided_slice %419 {offsets = [0, 0], sizes = [12, 32], strides = [1, 1]} : vector<14x32xf32> to vector<12x32xf32>
    %421 = vector.extract_strided_slice %419 {offsets = [1, 0], sizes = [12, 32], strides = [1, 1]} : vector<14x32xf32> to vector<12x32xf32>
    %422 = vector.extract_strided_slice %419 {offsets = [2, 0], sizes = [12, 32], strides = [1, 1]} : vector<14x32xf32> to vector<12x32xf32>
    %423 = tpu.concatenate %420, %421, %422 in 1 : vector<12x32xf32>, vector<12x32xf32>, vector<12x32xf32> -> vector<12x96xf32>
    %424 = arith.truncf %423 : vector<12x96xf32> to vector<12x96xbf16>
    %cst_177 = arith.constant dense<0.000000e+00> : vector<12x64xf32>
    %425 = tpu.matmul %424, %414, %cst_177 {dimension_numbers = #tpu.dot_dimension_numbers<[1], [0], [0], [1], [0, 0, 1, 1], [], []>} : vector<12x96xbf16>, vector<96x64xbf16>, vector<12x64xf32> -> vector<12x64xf32>
    %426 = vector.broadcast %416 : vector<1x64xf32> to vector<12x64xf32>
    %427 = arith.addf %425, %426 : vector<12x64xf32>
    %cst_178 = arith.constant 0.000000e+00 : f32
    %428 = vector.broadcast %cst_178 : f32 to vector<12x64xf32>
    %429 = arith.maximumf %427, %428 : vector<12x64xf32>
    %430 = vector.broadcast %321 : vector<12x1xf32> to vector<12x64xf32>
    %431 = arith.mulf %429, %430 : vector<12x64xf32>
    %c0_179 = arith.constant 0 : index
    %c0_180 = arith.constant 0 : index
    %c0_181 = arith.constant 0 : index
    %432 = vector.load %arg25[%c0_179, %c0_180, %c0_181] : memref<2x192x32xbf16, #tpu.memory_space<vmem>>, vector<1x192x32xbf16>
    %433 = vector.shape_cast %432 : vector<1x192x32xbf16> to vector<192x32xbf16>
    %c0_182 = arith.constant 0 : index
    %c0_183 = arith.constant 0 : index
    %c0_184 = arith.constant 0 : index
    %434 = vector.load %arg26[%c0_182, %c0_183, %c0_184] : memref<2x1x32xf32, #tpu.memory_space<vmem>>, vector<1x1x32xf32>
    %435 = vector.shape_cast %434 : vector<1x1x32xf32> to vector<1x32xf32>
    %cst_185 = arith.constant 0.000000e+00 : f32
    %436 = vector.broadcast %cst_185 : f32 to vector<1x64xf32>
    %cst_186 = arith.constant 0.000000e+00 : f32
    %437 = vector.broadcast %cst_186 : f32 to vector<1x64xf32>
    %438 = tpu.concatenate %436, %431, %437 in 0 : vector<1x64xf32>, vector<12x64xf32>, vector<1x64xf32> -> vector<14x64xf32>
    %439 = vector.extract_strided_slice %438 {offsets = [0, 0], sizes = [12, 64], strides = [1, 1]} : vector<14x64xf32> to vector<12x64xf32>
    %440 = vector.extract_strided_slice %438 {offsets = [1, 0], sizes = [12, 64], strides = [1, 1]} : vector<14x64xf32> to vector<12x64xf32>
    %441 = vector.extract_strided_slice %438 {offsets = [2, 0], sizes = [12, 64], strides = [1, 1]} : vector<14x64xf32> to vector<12x64xf32>
    %442 = tpu.concatenate %439, %440, %441 in 1 : vector<12x64xf32>, vector<12x64xf32>, vector<12x64xf32> -> vector<12x192xf32>
    %443 = arith.truncf %442 : vector<12x192xf32> to vector<12x192xbf16>
    %cst_187 = arith.constant dense<0.000000e+00> : vector<12x32xf32>
    %444 = tpu.matmul %443, %433, %cst_187 {dimension_numbers = #tpu.dot_dimension_numbers<[1], [0], [0], [1], [0, 0, 1, 1], [], []>} : vector<12x192xbf16>, vector<192x32xbf16>, vector<12x32xf32> -> vector<12x32xf32>
    %445 = vector.broadcast %435 : vector<1x32xf32> to vector<12x32xf32>
    %446 = arith.addf %444, %445 : vector<12x32xf32>
    %447 = vector.broadcast %321 : vector<12x1xf32> to vector<12x32xf32>
    %448 = arith.mulf %446, %447 : vector<12x32xf32>
    %449 = arith.addf %410, %448 : vector<12x32xf32>
    %c0_188 = arith.constant 0 : index
    %c0_189 = arith.constant 0 : index
    %c0_190 = arith.constant 0 : index
    %450 = vector.load %arg27[%c0_188, %c0_189, %c0_190] : memref<2x1x32xf32, #tpu.memory_space<vmem>>, vector<1x1x32xf32>
    %451 = vector.shape_cast %450 : vector<1x1x32xf32> to vector<1x32xf32>
    %c0_191 = arith.constant 0 : index
    %c0_192 = arith.constant 0 : index
    %c0_193 = arith.constant 0 : index
    %452 = vector.load %arg28[%c0_191, %c0_192, %c0_193] : memref<2x1x32xf32, #tpu.memory_space<vmem>>, vector<1x1x32xf32>
    %453 = vector.shape_cast %452 : vector<1x1x32xf32> to vector<1x32xf32>
    %cst_194 = arith.constant dense<0.000000e+00> : vector<12xf32>
    %454 = vector.multi_reduction <add>, %449, %cst_194 [1] : vector<12x32xf32> to vector<12xf32>
    %455 = vector.shape_cast %454 : vector<12xf32> to vector<12x1xf32>
    %cst_195 = arith.constant 3.200000e+01 : f32
    %456 = vector.broadcast %cst_195 : f32 to vector<12x1xf32>
    %457 = arith.divf %455, %456 : vector<12x1xf32>
    %458 = vector.broadcast %457 : vector<12x1xf32> to vector<12x32xf32>
    %459 = arith.subf %449, %458 : vector<12x32xf32>
    %460 = arith.mulf %459, %459 : vector<12x32xf32>
    %cst_196 = arith.constant dense<0.000000e+00> : vector<12xf32>
    %461 = vector.multi_reduction <add>, %460, %cst_196 [1] : vector<12x32xf32> to vector<12xf32>
    %462 = vector.shape_cast %461 : vector<12xf32> to vector<12x1xf32>
    %cst_197 = arith.constant 3.200000e+01 : f32
    %463 = vector.broadcast %cst_197 : f32 to vector<12x1xf32>
    %464 = arith.divf %462, %463 : vector<12x1xf32>
    %cst_198 = arith.constant 9.99999974E-6 : f32
    %465 = vector.broadcast %cst_198 : f32 to vector<12x1xf32>
    %466 = arith.addf %464, %465 : vector<12x1xf32>
    %467 = math.rsqrt %466 : vector<12x1xf32>
    %468 = vector.broadcast %467 : vector<12x1xf32> to vector<12x32xf32>
    %469 = arith.mulf %459, %468 : vector<12x32xf32>
    %470 = vector.broadcast %451 : vector<1x32xf32> to vector<12x32xf32>
    %471 = arith.mulf %469, %470 : vector<12x32xf32>
    %472 = vector.broadcast %453 : vector<1x32xf32> to vector<12x32xf32>
    %473 = arith.addf %471, %472 : vector<12x32xf32>
    %474 = arith.truncf %473 : vector<12x32xf32> to vector<12x32xbf16>
    %c1_199 = arith.constant 1 : index
    %c0_200 = arith.constant 0 : index
    %c0_201 = arith.constant 0 : index
    %475 = vector.load %arg17[%c1_199, %c0_200, %c0_201] : memref<2x32x96xbf16, #tpu.memory_space<vmem>>, vector<1x32x96xbf16>
    %476 = vector.shape_cast %475 : vector<1x32x96xbf16> to vector<32x96xbf16>
    %cst_202 = arith.constant dense<0.000000e+00> : vector<12x96xf32>
    %477 = tpu.matmul %474, %476, %cst_202 {dimension_numbers = #tpu.dot_dimension_numbers<[1], [0], [0], [1], [0, 0, 1, 1], [], []>} : vector<12x32xbf16>, vector<32x96xbf16>, vector<12x96xf32> -> vector<12x96xf32>
    %c1_203 = arith.constant 1 : index
    %c0_204 = arith.constant 0 : index
    %c0_205 = arith.constant 0 : index
    %478 = vector.load %arg18[%c1_203, %c0_204, %c0_205] : memref<2x1x96xf32, #tpu.memory_space<vmem>>, vector<1x1x96xf32>
    %479 = vector.shape_cast %478 : vector<1x1x96xf32> to vector<1x96xf32>
    %480 = vector.broadcast %479 : vector<1x96xf32> to vector<12x96xf32>
    %481 = arith.addf %477, %480 : vector<12x96xf32>
    %482 = arith.truncf %481 : vector<12x96xf32> to vector<12x96xbf16>
    %483 = vector.extract_strided_slice %482 {offsets = [0, 0], sizes = [12, 16], strides = [1, 1]} : vector<12x96xbf16> to vector<12x16xbf16>
    %484 = vector.extract_strided_slice %482 {offsets = [0, 32], sizes = [12, 16], strides = [1, 1]} : vector<12x96xbf16> to vector<12x16xbf16>
    %485 = vector.extract_strided_slice %482 {offsets = [0, 64], sizes = [12, 16], strides = [1, 1]} : vector<12x96xbf16> to vector<12x16xbf16>
    %cst_206 = arith.constant dense<0.000000e+00> : vector<12x12xf32>
    %486 = tpu.matmul %483, %484, %cst_206 {dimension_numbers = #tpu.dot_dimension_numbers<[1], [1], [0], [0], [0, 0, 1, 0], [], []>} : vector<12x16xbf16>, vector<12x16xbf16>, vector<12x12xf32> -> vector<12x12xf32>
    %cst_207 = arith.constant -1.000000e+04 : f32
    %487 = vector.shape_cast %324 : vector<1x12xi1> to vector<1x12xi1>
    %488 = vector.broadcast %487 : vector<1x12xi1> to vector<12x12xi1>
    %489 = vector.broadcast %cst_207 : f32 to vector<12x12xf32>
    %490 = arith.select %488, %486, %489 : vector<12x12xi1>, vector<12x12xf32>
    %cst_208 = arith.constant dense<0xFF800000> : vector<12xf32>
    %491 = vector.multi_reduction <maximumf>, %490, %cst_208 [1] : vector<12x12xf32> to vector<12xf32>
    %492 = vector.shape_cast %491 : vector<12xf32> to vector<12x1xf32>
    %493 = vector.broadcast %492 : vector<12x1xf32> to vector<12x12xf32>
    %494 = arith.subf %490, %493 : vector<12x12xf32>
    %495 = math.exp %494 : vector<12x12xf32>
    %cst_209 = arith.constant dense<0.000000e+00> : vector<12xf32>
    %496 = vector.multi_reduction <add>, %495, %cst_209 [1] : vector<12x12xf32> to vector<12xf32>
    %497 = vector.shape_cast %496 : vector<12xf32> to vector<12x1xf32>
    %498 = tpu.reciprocal %497 {approx = true} : vector<12x1xf32> -> vector<12x1xf32>
    %499 = vector.broadcast %498 : vector<12x1xf32> to vector<12x12xf32>
    %500 = arith.mulf %495, %499 : vector<12x12xf32>
    %501 = arith.truncf %500 : vector<12x12xf32> to vector<12x12xbf16>
    %cst_210 = arith.constant dense<0.000000e+00> : vector<12x16xf32>
    %502 = tpu.matmul %501, %485, %cst_210 {dimension_numbers = #tpu.dot_dimension_numbers<[1], [0], [0], [1], [0, 0, 1, 1], [], []>} : vector<12x12xbf16>, vector<12x16xbf16>, vector<12x16xf32> -> vector<12x16xf32>
    %503 = arith.truncf %502 : vector<12x16xf32> to vector<12x16xbf16>
    %504 = vector.extract_strided_slice %482 {offsets = [0, 16], sizes = [12, 16], strides = [1, 1]} : vector<12x96xbf16> to vector<12x16xbf16>
    %505 = vector.extract_strided_slice %482 {offsets = [0, 48], sizes = [12, 16], strides = [1, 1]} : vector<12x96xbf16> to vector<12x16xbf16>
    %506 = vector.extract_strided_slice %482 {offsets = [0, 80], sizes = [12, 16], strides = [1, 1]} : vector<12x96xbf16> to vector<12x16xbf16>
    %cst_211 = arith.constant dense<0.000000e+00> : vector<12x12xf32>
    %507 = tpu.matmul %504, %505, %cst_211 {dimension_numbers = #tpu.dot_dimension_numbers<[1], [1], [0], [0], [0, 0, 1, 0], [], []>} : vector<12x16xbf16>, vector<12x16xbf16>, vector<12x12xf32> -> vector<12x12xf32>
    %cst_212 = arith.constant -1.000000e+04 : f32
    %508 = vector.shape_cast %324 : vector<1x12xi1> to vector<1x12xi1>
    %509 = vector.broadcast %508 : vector<1x12xi1> to vector<12x12xi1>
    %510 = vector.broadcast %cst_212 : f32 to vector<12x12xf32>
    %511 = arith.select %509, %507, %510 : vector<12x12xi1>, vector<12x12xf32>
    %cst_213 = arith.constant dense<0xFF800000> : vector<12xf32>
    %512 = vector.multi_reduction <maximumf>, %511, %cst_213 [1] : vector<12x12xf32> to vector<12xf32>
    %513 = vector.shape_cast %512 : vector<12xf32> to vector<12x1xf32>
    %514 = vector.broadcast %513 : vector<12x1xf32> to vector<12x12xf32>
    %515 = arith.subf %511, %514 : vector<12x12xf32>
    %516 = math.exp %515 : vector<12x12xf32>
    %cst_214 = arith.constant dense<0.000000e+00> : vector<12xf32>
    %517 = vector.multi_reduction <add>, %516, %cst_214 [1] : vector<12x12xf32> to vector<12xf32>
    %518 = vector.shape_cast %517 : vector<12xf32> to vector<12x1xf32>
    %519 = tpu.reciprocal %518 {approx = true} : vector<12x1xf32> -> vector<12x1xf32>
    %520 = vector.broadcast %519 : vector<12x1xf32> to vector<12x12xf32>
    %521 = arith.mulf %516, %520 : vector<12x12xf32>
    %522 = arith.truncf %521 : vector<12x12xf32> to vector<12x12xbf16>
    %cst_215 = arith.constant dense<0.000000e+00> : vector<12x16xf32>
    %523 = tpu.matmul %522, %506, %cst_215 {dimension_numbers = #tpu.dot_dimension_numbers<[1], [0], [0], [1], [0, 0, 1, 1], [], []>} : vector<12x12xbf16>, vector<12x16xbf16>, vector<12x16xf32> -> vector<12x16xf32>
    %524 = arith.truncf %523 : vector<12x16xf32> to vector<12x16xbf16>
    %525 = tpu.concatenate %503, %524 in 1 : vector<12x16xbf16>, vector<12x16xbf16> -> vector<12x32xbf16>
    %c1_216 = arith.constant 1 : index
    %c0_217 = arith.constant 0 : index
    %c0_218 = arith.constant 0 : index
    %526 = vector.load %arg19[%c1_216, %c0_217, %c0_218] : memref<2x32x32xbf16, #tpu.memory_space<vmem>>, vector<1x32x32xbf16>
    %527 = vector.shape_cast %526 : vector<1x32x32xbf16> to vector<32x32xbf16>
    %cst_219 = arith.constant dense<0.000000e+00> : vector<12x32xf32>
    %528 = tpu.matmul %525, %527, %cst_219 {dimension_numbers = #tpu.dot_dimension_numbers<[1], [0], [0], [1], [0, 0, 1, 1], [], []>} : vector<12x32xbf16>, vector<32x32xbf16>, vector<12x32xf32> -> vector<12x32xf32>
    %c1_220 = arith.constant 1 : index
    %c0_221 = arith.constant 0 : index
    %c0_222 = arith.constant 0 : index
    %529 = vector.load %arg20[%c1_220, %c0_221, %c0_222] : memref<2x1x32xf32, #tpu.memory_space<vmem>>, vector<1x1x32xf32>
    %530 = vector.shape_cast %529 : vector<1x1x32xf32> to vector<1x32xf32>
    %531 = vector.broadcast %530 : vector<1x32xf32> to vector<12x32xf32>
    %532 = arith.addf %528, %531 : vector<12x32xf32>
    %533 = arith.addf %473, %532 : vector<12x32xf32>
    %c1_223 = arith.constant 1 : index
    %c0_224 = arith.constant 0 : index
    %c0_225 = arith.constant 0 : index
    %534 = vector.load %arg21[%c1_223, %c0_224, %c0_225] : memref<2x1x32xf32, #tpu.memory_space<vmem>>, vector<1x1x32xf32>
    %535 = vector.shape_cast %534 : vector<1x1x32xf32> to vector<1x32xf32>
    %c1_226 = arith.constant 1 : index
    %c0_227 = arith.constant 0 : index
    %c0_228 = arith.constant 0 : index
    %536 = vector.load %arg22[%c1_226, %c0_227, %c0_228] : memref<2x1x32xf32, #tpu.memory_space<vmem>>, vector<1x1x32xf32>
    %537 = vector.shape_cast %536 : vector<1x1x32xf32> to vector<1x32xf32>
    %cst_229 = arith.constant dense<0.000000e+00> : vector<12xf32>
    %538 = vector.multi_reduction <add>, %533, %cst_229 [1] : vector<12x32xf32> to vector<12xf32>
    %539 = vector.shape_cast %538 : vector<12xf32> to vector<12x1xf32>
    %cst_230 = arith.constant 3.200000e+01 : f32
    %540 = vector.broadcast %cst_230 : f32 to vector<12x1xf32>
    %541 = arith.divf %539, %540 : vector<12x1xf32>
    %542 = vector.broadcast %541 : vector<12x1xf32> to vector<12x32xf32>
    %543 = arith.subf %533, %542 : vector<12x32xf32>
    %544 = arith.mulf %543, %543 : vector<12x32xf32>
    %cst_231 = arith.constant dense<0.000000e+00> : vector<12xf32>
    %545 = vector.multi_reduction <add>, %544, %cst_231 [1] : vector<12x32xf32> to vector<12xf32>
    %546 = vector.shape_cast %545 : vector<12xf32> to vector<12x1xf32>
    %cst_232 = arith.constant 3.200000e+01 : f32
    %547 = vector.broadcast %cst_232 : f32 to vector<12x1xf32>
    %548 = arith.divf %546, %547 : vector<12x1xf32>
    %cst_233 = arith.constant 9.99999974E-6 : f32
    %549 = vector.broadcast %cst_233 : f32 to vector<12x1xf32>
    %550 = arith.addf %548, %549 : vector<12x1xf32>
    %551 = math.rsqrt %550 : vector<12x1xf32>
    %552 = vector.broadcast %551 : vector<12x1xf32> to vector<12x32xf32>
    %553 = arith.mulf %543, %552 : vector<12x32xf32>
    %554 = vector.broadcast %535 : vector<1x32xf32> to vector<12x32xf32>
    %555 = arith.mulf %553, %554 : vector<12x32xf32>
    %556 = vector.broadcast %537 : vector<1x32xf32> to vector<12x32xf32>
    %557 = arith.addf %555, %556 : vector<12x32xf32>
    %558 = vector.broadcast %321 : vector<12x1xf32> to vector<12x32xf32>
    %559 = arith.mulf %557, %558 : vector<12x32xf32>
    %c1_234 = arith.constant 1 : index
    %c0_235 = arith.constant 0 : index
    %c0_236 = arith.constant 0 : index
    %560 = vector.load %arg23[%c1_234, %c0_235, %c0_236] : memref<2x96x64xbf16, #tpu.memory_space<vmem>>, vector<1x96x64xbf16>
    %561 = vector.shape_cast %560 : vector<1x96x64xbf16> to vector<96x64xbf16>
    %c1_237 = arith.constant 1 : index
    %c0_238 = arith.constant 0 : index
    %c0_239 = arith.constant 0 : index
    %562 = vector.load %arg24[%c1_237, %c0_238, %c0_239] : memref<2x1x64xf32, #tpu.memory_space<vmem>>, vector<1x1x64xf32>
    %563 = vector.shape_cast %562 : vector<1x1x64xf32> to vector<1x64xf32>
    %cst_240 = arith.constant 0.000000e+00 : f32
    %564 = vector.broadcast %cst_240 : f32 to vector<1x32xf32>
    %cst_241 = arith.constant 0.000000e+00 : f32
    %565 = vector.broadcast %cst_241 : f32 to vector<1x32xf32>
    %566 = tpu.concatenate %564, %559, %565 in 0 : vector<1x32xf32>, vector<12x32xf32>, vector<1x32xf32> -> vector<14x32xf32>
    %567 = vector.extract_strided_slice %566 {offsets = [0, 0], sizes = [12, 32], strides = [1, 1]} : vector<14x32xf32> to vector<12x32xf32>
    %568 = vector.extract_strided_slice %566 {offsets = [1, 0], sizes = [12, 32], strides = [1, 1]} : vector<14x32xf32> to vector<12x32xf32>
    %569 = vector.extract_strided_slice %566 {offsets = [2, 0], sizes = [12, 32], strides = [1, 1]} : vector<14x32xf32> to vector<12x32xf32>
    %570 = tpu.concatenate %567, %568, %569 in 1 : vector<12x32xf32>, vector<12x32xf32>, vector<12x32xf32> -> vector<12x96xf32>
    %571 = arith.truncf %570 : vector<12x96xf32> to vector<12x96xbf16>
    %cst_242 = arith.constant dense<0.000000e+00> : vector<12x64xf32>
    %572 = tpu.matmul %571, %561, %cst_242 {dimension_numbers = #tpu.dot_dimension_numbers<[1], [0], [0], [1], [0, 0, 1, 1], [], []>} : vector<12x96xbf16>, vector<96x64xbf16>, vector<12x64xf32> -> vector<12x64xf32>
    %573 = vector.broadcast %563 : vector<1x64xf32> to vector<12x64xf32>
    %574 = arith.addf %572, %573 : vector<12x64xf32>
    %cst_243 = arith.constant 0.000000e+00 : f32
    %575 = vector.broadcast %cst_243 : f32 to vector<12x64xf32>
    %576 = arith.maximumf %574, %575 : vector<12x64xf32>
    %577 = vector.broadcast %321 : vector<12x1xf32> to vector<12x64xf32>
    %578 = arith.mulf %576, %577 : vector<12x64xf32>
    %c1_244 = arith.constant 1 : index
    %c0_245 = arith.constant 0 : index
    %c0_246 = arith.constant 0 : index
    %579 = vector.load %arg25[%c1_244, %c0_245, %c0_246] : memref<2x192x32xbf16, #tpu.memory_space<vmem>>, vector<1x192x32xbf16>
    %580 = vector.shape_cast %579 : vector<1x192x32xbf16> to vector<192x32xbf16>
    %c1_247 = arith.constant 1 : index
    %c0_248 = arith.constant 0 : index
    %c0_249 = arith.constant 0 : index
    %581 = vector.load %arg26[%c1_247, %c0_248, %c0_249] : memref<2x1x32xf32, #tpu.memory_space<vmem>>, vector<1x1x32xf32>
    %582 = vector.shape_cast %581 : vector<1x1x32xf32> to vector<1x32xf32>
    %cst_250 = arith.constant 0.000000e+00 : f32
    %583 = vector.broadcast %cst_250 : f32 to vector<1x64xf32>
    %cst_251 = arith.constant 0.000000e+00 : f32
    %584 = vector.broadcast %cst_251 : f32 to vector<1x64xf32>
    %585 = tpu.concatenate %583, %578, %584 in 0 : vector<1x64xf32>, vector<12x64xf32>, vector<1x64xf32> -> vector<14x64xf32>
    %586 = vector.extract_strided_slice %585 {offsets = [0, 0], sizes = [12, 64], strides = [1, 1]} : vector<14x64xf32> to vector<12x64xf32>
    %587 = vector.extract_strided_slice %585 {offsets = [1, 0], sizes = [12, 64], strides = [1, 1]} : vector<14x64xf32> to vector<12x64xf32>
    %588 = vector.extract_strided_slice %585 {offsets = [2, 0], sizes = [12, 64], strides = [1, 1]} : vector<14x64xf32> to vector<12x64xf32>
    %589 = tpu.concatenate %586, %587, %588 in 1 : vector<12x64xf32>, vector<12x64xf32>, vector<12x64xf32> -> vector<12x192xf32>
    %590 = arith.truncf %589 : vector<12x192xf32> to vector<12x192xbf16>
    %cst_252 = arith.constant dense<0.000000e+00> : vector<12x32xf32>
    %591 = tpu.matmul %590, %580, %cst_252 {dimension_numbers = #tpu.dot_dimension_numbers<[1], [0], [0], [1], [0, 0, 1, 1], [], []>} : vector<12x192xbf16>, vector<192x32xbf16>, vector<12x32xf32> -> vector<12x32xf32>
    %592 = vector.broadcast %582 : vector<1x32xf32> to vector<12x32xf32>
    %593 = arith.addf %591, %592 : vector<12x32xf32>
    %594 = vector.broadcast %321 : vector<12x1xf32> to vector<12x32xf32>
    %595 = arith.mulf %593, %594 : vector<12x32xf32>
    %596 = arith.addf %557, %595 : vector<12x32xf32>
    %c1_253 = arith.constant 1 : index
    %c0_254 = arith.constant 0 : index
    %c0_255 = arith.constant 0 : index
    %597 = vector.load %arg27[%c1_253, %c0_254, %c0_255] : memref<2x1x32xf32, #tpu.memory_space<vmem>>, vector<1x1x32xf32>
    %598 = vector.shape_cast %597 : vector<1x1x32xf32> to vector<1x32xf32>
    %c1_256 = arith.constant 1 : index
    %c0_257 = arith.constant 0 : index
    %c0_258 = arith.constant 0 : index
    %599 = vector.load %arg28[%c1_256, %c0_257, %c0_258] : memref<2x1x32xf32, #tpu.memory_space<vmem>>, vector<1x1x32xf32>
    %600 = vector.shape_cast %599 : vector<1x1x32xf32> to vector<1x32xf32>
    %cst_259 = arith.constant dense<0.000000e+00> : vector<12xf32>
    %601 = vector.multi_reduction <add>, %596, %cst_259 [1] : vector<12x32xf32> to vector<12xf32>
    %602 = vector.shape_cast %601 : vector<12xf32> to vector<12x1xf32>
    %cst_260 = arith.constant 3.200000e+01 : f32
    %603 = vector.broadcast %cst_260 : f32 to vector<12x1xf32>
    %604 = arith.divf %602, %603 : vector<12x1xf32>
    %605 = vector.broadcast %604 : vector<12x1xf32> to vector<12x32xf32>
    %606 = arith.subf %596, %605 : vector<12x32xf32>
    %607 = arith.mulf %606, %606 : vector<12x32xf32>
    %cst_261 = arith.constant dense<0.000000e+00> : vector<12xf32>
    %608 = vector.multi_reduction <add>, %607, %cst_261 [1] : vector<12x32xf32> to vector<12xf32>
    %609 = vector.shape_cast %608 : vector<12xf32> to vector<12x1xf32>
    %cst_262 = arith.constant 3.200000e+01 : f32
    %610 = vector.broadcast %cst_262 : f32 to vector<12x1xf32>
    %611 = arith.divf %609, %610 : vector<12x1xf32>
    %cst_263 = arith.constant 9.99999974E-6 : f32
    %612 = vector.broadcast %cst_263 : f32 to vector<12x1xf32>
    %613 = arith.addf %611, %612 : vector<12x1xf32>
    %614 = math.rsqrt %613 : vector<12x1xf32>
    %615 = vector.broadcast %614 : vector<12x1xf32> to vector<12x32xf32>
    %616 = arith.mulf %606, %615 : vector<12x32xf32>
    %617 = vector.broadcast %598 : vector<1x32xf32> to vector<12x32xf32>
    %618 = arith.mulf %616, %617 : vector<12x32xf32>
    %619 = vector.broadcast %600 : vector<1x32xf32> to vector<12x32xf32>
    %620 = arith.addf %618, %619 : vector<12x32xf32>
    %621 = vector.broadcast %321 : vector<12x1xf32> to vector<12x32xf32>
    %622 = arith.mulf %620, %621 : vector<12x32xf32>
    %623 = arith.truncf %622 : vector<12x32xf32> to vector<12x32xbf16>
    %c0_264 = arith.constant 0 : index
    %c0_265 = arith.constant 0 : index
    %624 = vector.load %arg29[%c0_264, %c0_265] : memref<32x16xbf16, #tpu.memory_space<vmem>>, vector<32x16xbf16>
    %cst_266 = arith.constant dense<0.000000e+00> : vector<12x16xf32>
    %625 = tpu.matmul %623, %624, %cst_266 {dimension_numbers = #tpu.dot_dimension_numbers<[1], [0], [0], [1], [0, 0, 1, 1], [], []>} : vector<12x32xbf16>, vector<32x16xbf16>, vector<12x16xf32> -> vector<12x16xf32>
    %c0_267 = arith.constant 0 : index
    %c0_268 = arith.constant 0 : index
    %626 = vector.load %arg30[%c0_267, %c0_268] : memref<1x16xf32, #tpu.memory_space<vmem>>, vector<1x16xf32>
    %627 = vector.broadcast %626 : vector<1x16xf32> to vector<12x16xf32>
    %628 = arith.addf %625, %627 : vector<12x16xf32>
    %629 = vector.broadcast %321 : vector<12x1xf32> to vector<12x16xf32>
    %630 = arith.mulf %628, %629 : vector<12x16xf32>
    %631 = vector.shape_cast %622 : vector<12x32xf32> to vector<1x12x32xf32>
    %c0_269 = arith.constant 0 : index
    %c0_270 = arith.constant 0 : index
    %c0_271 = arith.constant 0 : index
    %632 = vector.load %arg31[%c0_269, %c0_270, %c0_271] : memref<1x12x32xf32, #tpu.memory_space<vmem>>, vector<1x12x32xf32>
    tpu.vector_store %arg31[%c0_269, %c0_270, %c0_271], %631 {strides = array<i32>} : memref<1x12x32xf32, #tpu.memory_space<vmem>>, vector<1x12x32xf32>,
    %633 = vector.shape_cast %630 : vector<12x16xf32> to vector<1x12x16xf32>
    %c0_272 = arith.constant 0 : index
    %c0_273 = arith.constant 0 : index
    %c0_274 = arith.constant 0 : index
    %634 = vector.load %arg32[%c0_272, %c0_273, %c0_274] : memref<1x12x16xf32, #tpu.memory_space<vmem>>, vector<1x12x16xf32>
    tpu.vector_store %arg32[%c0_272, %c0_273, %c0_274], %633 {strides = array<i32>} : memref<1x12x16xf32, #tpu.memory_space<vmem>>, vector<1x12x16xf32>,
    return
  }
  func.func @transform_0(%arg0: i32, %arg1: memref<2xi32, #tpu.memory_space<smem>>, %arg2: memref<2xi32, #tpu.memory_space<smem>>) -> (i32, i32, i32) {
    %c0_i32 = arith.constant 0 : i32
    %c0_i32_0 = arith.constant 0 : i32
    %c0_i32_1 = arith.constant 0 : i32
    return %arg0, %c0_i32, %c0_i32_0 : i32, i32, i32
  }
  func.func @transform_1(%arg0: i32, %arg1: memref<2xi32, #tpu.memory_space<smem>>, %arg2: memref<2xi32, #tpu.memory_space<smem>>) -> (i32, i32, i32) {
    %c0_i32 = arith.constant 0 : i32
    %c0_i32_0 = arith.constant 0 : i32
    %c0_i32_1 = arith.constant 0 : i32
    return %arg0, %c0_i32, %c0_i32_0 : i32, i32, i32
  }
  func.func @transform_2(%arg0: i32, %arg1: memref<2xi32, #tpu.memory_space<smem>>, %arg2: memref<2xi32, #tpu.memory_space<smem>>) -> (i32, i32, i32) {
    %c0_i32 = arith.constant 0 : i32
    %c0_i32_0 = arith.constant 0 : i32
    %c0_i32_1 = arith.constant 0 : i32
    %c0_i32_2 = arith.constant 0 : i32
    return %c0_i32, %c0_i32_0, %c0_i32_1 : i32, i32, i32
  }
  func.func @transform_3(%arg0: i32, %arg1: memref<2xi32, #tpu.memory_space<smem>>, %arg2: memref<2xi32, #tpu.memory_space<smem>>) -> (i32, i32, i32) {
    %c0_i32 = arith.constant 0 : i32
    %c0_i32_0 = arith.constant 0 : i32
    %c0_i32_1 = arith.constant 0 : i32
    %c0_i32_2 = arith.constant 0 : i32
    return %c0_i32, %c0_i32_0, %c0_i32_1 : i32, i32, i32
  }
  func.func @transform_4(%arg0: i32, %arg1: memref<2xi32, #tpu.memory_space<smem>>, %arg2: memref<2xi32, #tpu.memory_space<smem>>) -> (i32, i32, i32) {
    %c0_i32 = arith.constant 0 : i32
    %c0_i32_0 = arith.constant 0 : i32
    %c0_i32_1 = arith.constant 0 : i32
    %c0_i32_2 = arith.constant 0 : i32
    return %c0_i32, %c0_i32_0, %c0_i32_1 : i32, i32, i32
  }
  func.func @transform_5(%arg0: i32, %arg1: memref<2xi32, #tpu.memory_space<smem>>, %arg2: memref<2xi32, #tpu.memory_space<smem>>) -> (i32, i32, i32) {
    %c0_i32 = arith.constant 0 : i32
    %c0_i32_0 = arith.constant 0 : i32
    %c0_i32_1 = arith.constant 0 : i32
    %c0_i32_2 = arith.constant 0 : i32
    return %c0_i32, %c0_i32_0, %c0_i32_1 : i32, i32, i32
  }
  func.func @transform_6(%arg0: i32, %arg1: memref<2xi32, #tpu.memory_space<smem>>, %arg2: memref<2xi32, #tpu.memory_space<smem>>) -> (i32, i32, i32) {
    %c0_i32 = arith.constant 0 : i32
    %c0_i32_0 = arith.constant 0 : i32
    %c0_i32_1 = arith.constant 0 : i32
    %c0_i32_2 = arith.constant 0 : i32
    return %c0_i32, %c0_i32_0, %c0_i32_1 : i32, i32, i32
  }
  func.func @transform_7(%arg0: i32, %arg1: memref<2xi32, #tpu.memory_space<smem>>, %arg2: memref<2xi32, #tpu.memory_space<smem>>) -> (i32, i32, i32) {
    %c0_i32 = arith.constant 0 : i32
    %c0_i32_0 = arith.constant 0 : i32
    %c0_i32_1 = arith.constant 0 : i32
    %c0_i32_2 = arith.constant 0 : i32
    return %c0_i32, %c0_i32_0, %c0_i32_1 : i32, i32, i32
  }
  func.func @transform_8(%arg0: i32, %arg1: memref<2xi32, #tpu.memory_space<smem>>, %arg2: memref<2xi32, #tpu.memory_space<smem>>) -> (i32, i32, i32) {
    %c0_i32 = arith.constant 0 : i32
    %c0_i32_0 = arith.constant 0 : i32
    %c0_i32_1 = arith.constant 0 : i32
    %c0_i32_2 = arith.constant 0 : i32
    return %c0_i32, %c0_i32_0, %c0_i32_1 : i32, i32, i32
  }
  func.func @transform_9(%arg0: i32, %arg1: memref<2xi32, #tpu.memory_space<smem>>, %arg2: memref<2xi32, #tpu.memory_space<smem>>) -> (i32, i32, i32) {
    %c0_i32 = arith.constant 0 : i32
    %c0_i32_0 = arith.constant 0 : i32
    %c0_i32_1 = arith.constant 0 : i32
    %c0_i32_2 = arith.constant 0 : i32
    return %c0_i32, %c0_i32_0, %c0_i32_1 : i32, i32, i32
  }
  func.func @transform_10(%arg0: i32, %arg1: memref<2xi32, #tpu.memory_space<smem>>, %arg2: memref<2xi32, #tpu.memory_space<smem>>) -> (i32, i32, i32) {
    %c0_i32 = arith.constant 0 : i32
    %c0_i32_0 = arith.constant 0 : i32
    %c0_i32_1 = arith.constant 0 : i32
    %c0_i32_2 = arith.constant 0 : i32
    return %c0_i32, %c0_i32_0, %c0_i32_1 : i32, i32, i32
  }
  func.func @transform_11(%arg0: i32, %arg1: memref<2xi32, #tpu.memory_space<smem>>, %arg2: memref<2xi32, #tpu.memory_space<smem>>) -> (i32, i32, i32) {
    %c0_i32 = arith.constant 0 : i32
    %c0_i32_0 = arith.constant 0 : i32
    %c0_i32_1 = arith.constant 0 : i32
    %c0_i32_2 = arith.constant 0 : i32
    return %c0_i32, %c0_i32_0, %c0_i32_1 : i32, i32, i32
  }
  func.func @transform_12(%arg0: i32, %arg1: memref<2xi32, #tpu.memory_space<smem>>, %arg2: memref<2xi32, #tpu.memory_space<smem>>) -> (i32, i32, i32) {
    %c0_i32 = arith.constant 0 : i32
    %c0_i32_0 = arith.constant 0 : i32
    %c0_i32_1 = arith.constant 0 : i32
    %c0_i32_2 = arith.constant 0 : i32
    return %c0_i32, %c0_i32_0, %c0_i32_1 : i32, i32, i32
  }
  func.func @transform_13(%arg0: i32, %arg1: memref<2xi32, #tpu.memory_space<smem>>, %arg2: memref<2xi32, #tpu.memory_space<smem>>) -> (i32, i32, i32) {
    %c0_i32 = arith.constant 0 : i32
    %c0_i32_0 = arith.constant 0 : i32
    %c0_i32_1 = arith.constant 0 : i32
    %c0_i32_2 = arith.constant 0 : i32
    return %c0_i32, %c0_i32_0, %c0_i32_1 : i32, i32, i32
  }
  func.func @transform_14(%arg0: i32, %arg1: memref<2xi32, #tpu.memory_space<smem>>, %arg2: memref<2xi32, #tpu.memory_space<smem>>) -> (i32, i32, i32) {
    %c0_i32 = arith.constant 0 : i32
    %c0_i32_0 = arith.constant 0 : i32
    %c0_i32_1 = arith.constant 0 : i32
    %c0_i32_2 = arith.constant 0 : i32
    return %c0_i32, %c0_i32_0, %c0_i32_1 : i32, i32, i32
  }
  func.func @transform_15(%arg0: i32, %arg1: memref<2xi32, #tpu.memory_space<smem>>, %arg2: memref<2xi32, #tpu.memory_space<smem>>) -> (i32, i32, i32) {
    %c0_i32 = arith.constant 0 : i32
    %c0_i32_0 = arith.constant 0 : i32
    %c0_i32_1 = arith.constant 0 : i32
    %c0_i32_2 = arith.constant 0 : i32
    return %c0_i32, %c0_i32_0, %c0_i32_1 : i32, i32, i32
  }
  func.func @transform_16(%arg0: i32, %arg1: memref<2xi32, #tpu.memory_space<smem>>, %arg2: memref<2xi32, #tpu.memory_space<smem>>) -> (i32, i32, i32) {
    %c0_i32 = arith.constant 0 : i32
    %c0_i32_0 = arith.constant 0 : i32
    %c0_i32_1 = arith.constant 0 : i32
    %c0_i32_2 = arith.constant 0 : i32
    return %c0_i32, %c0_i32_0, %c0_i32_1 : i32, i32, i32
  }
  func.func @transform_17(%arg0: i32, %arg1: memref<2xi32, #tpu.memory_space<smem>>, %arg2: memref<2xi32, #tpu.memory_space<smem>>) -> (i32, i32, i32) {
    %c0_i32 = arith.constant 0 : i32
    %c0_i32_0 = arith.constant 0 : i32
    %c0_i32_1 = arith.constant 0 : i32
    %c0_i32_2 = arith.constant 0 : i32
    return %c0_i32, %c0_i32_0, %c0_i32_1 : i32, i32, i32
  }
  func.func @transform_18(%arg0: i32, %arg1: memref<2xi32, #tpu.memory_space<smem>>, %arg2: memref<2xi32, #tpu.memory_space<smem>>) -> (i32, i32, i32) {
    %c0_i32 = arith.constant 0 : i32
    %c0_i32_0 = arith.constant 0 : i32
    %c0_i32_1 = arith.constant 0 : i32
    %c0_i32_2 = arith.constant 0 : i32
    return %c0_i32, %c0_i32_0, %c0_i32_1 : i32, i32, i32
  }
  func.func @transform_19(%arg0: i32, %arg1: memref<2xi32, #tpu.memory_space<smem>>, %arg2: memref<2xi32, #tpu.memory_space<smem>>) -> (i32, i32, i32) {
    %c0_i32 = arith.constant 0 : i32
    %c0_i32_0 = arith.constant 0 : i32
    %c0_i32_1 = arith.constant 0 : i32
    %c0_i32_2 = arith.constant 0 : i32
    return %c0_i32, %c0_i32_0, %c0_i32_1 : i32, i32, i32
  }
  func.func @transform_20(%arg0: i32, %arg1: memref<2xi32, #tpu.memory_space<smem>>, %arg2: memref<2xi32, #tpu.memory_space<smem>>) -> (i32, i32, i32) {
    %c0_i32 = arith.constant 0 : i32
    %c0_i32_0 = arith.constant 0 : i32
    %c0_i32_1 = arith.constant 0 : i32
    %c0_i32_2 = arith.constant 0 : i32
    return %c0_i32, %c0_i32_0, %c0_i32_1 : i32, i32, i32
  }
  func.func @transform_21(%arg0: i32, %arg1: memref<2xi32, #tpu.memory_space<smem>>, %arg2: memref<2xi32, #tpu.memory_space<smem>>) -> (i32, i32, i32) {
    %c0_i32 = arith.constant 0 : i32
    %c0_i32_0 = arith.constant 0 : i32
    %c0_i32_1 = arith.constant 0 : i32
    %c0_i32_2 = arith.constant 0 : i32
    return %c0_i32, %c0_i32_0, %c0_i32_1 : i32, i32, i32
  }
  func.func @transform_22(%arg0: i32, %arg1: memref<2xi32, #tpu.memory_space<smem>>, %arg2: memref<2xi32, #tpu.memory_space<smem>>) -> (i32, i32, i32) {
    %c0_i32 = arith.constant 0 : i32
    %c0_i32_0 = arith.constant 0 : i32
    %c0_i32_1 = arith.constant 0 : i32
    %c0_i32_2 = arith.constant 0 : i32
    return %c0_i32, %c0_i32_0, %c0_i32_1 : i32, i32, i32
  }
  func.func @transform_23(%arg0: i32, %arg1: memref<2xi32, #tpu.memory_space<smem>>, %arg2: memref<2xi32, #tpu.memory_space<smem>>) -> (i32, i32, i32) {
    %c0_i32 = arith.constant 0 : i32
    %c0_i32_0 = arith.constant 0 : i32
    %c0_i32_1 = arith.constant 0 : i32
    %c0_i32_2 = arith.constant 0 : i32
    return %c0_i32, %c0_i32_0, %c0_i32_1 : i32, i32, i32
  }
  func.func @transform_24(%arg0: i32, %arg1: memref<2xi32, #tpu.memory_space<smem>>, %arg2: memref<2xi32, #tpu.memory_space<smem>>) -> (i32, i32, i32) {
    %c0_i32 = arith.constant 0 : i32
    %c0_i32_0 = arith.constant 0 : i32
    %c0_i32_1 = arith.constant 0 : i32
    %c0_i32_2 = arith.constant 0 : i32
    return %c0_i32, %c0_i32_0, %c0_i32_1 : i32, i32, i32
  }
  func.func @transform_25(%arg0: i32, %arg1: memref<2xi32, #tpu.memory_space<smem>>, %arg2: memref<2xi32, #tpu.memory_space<smem>>) -> (i32, i32, i32) {
    %c0_i32 = arith.constant 0 : i32
    %c0_i32_0 = arith.constant 0 : i32
    %c0_i32_1 = arith.constant 0 : i32
    %c0_i32_2 = arith.constant 0 : i32
    return %c0_i32, %c0_i32_0, %c0_i32_1 : i32, i32, i32
  }
  func.func @transform_26(%arg0: i32, %arg1: memref<2xi32, #tpu.memory_space<smem>>, %arg2: memref<2xi32, #tpu.memory_space<smem>>) -> (i32, i32) {
    %c0_i32 = arith.constant 0 : i32
    %c0_i32_0 = arith.constant 0 : i32
    %c0_i32_1 = arith.constant 0 : i32
    return %c0_i32, %c0_i32_0 : i32, i32
  }
  func.func @transform_27(%arg0: i32, %arg1: memref<2xi32, #tpu.memory_space<smem>>, %arg2: memref<2xi32, #tpu.memory_space<smem>>) -> (i32, i32) {
    %c0_i32 = arith.constant 0 : i32
    %c0_i32_0 = arith.constant 0 : i32
    %c0_i32_1 = arith.constant 0 : i32
    return %c0_i32, %c0_i32_0 : i32, i32
  }
  func.func @transform_28(%arg0: i32, %arg1: memref<2xi32, #tpu.memory_space<smem>>, %arg2: memref<2xi32, #tpu.memory_space<smem>>) -> (i32, i32, i32) {
    %c0_i32 = arith.constant 0 : i32
    %c0_i32_0 = arith.constant 0 : i32
    %c0_i32_1 = arith.constant 0 : i32
    return %arg0, %c0_i32, %c0_i32_0 : i32, i32, i32
  }
  func.func @transform_29(%arg0: i32, %arg1: memref<2xi32, #tpu.memory_space<smem>>, %arg2: memref<2xi32, #tpu.memory_space<smem>>) -> (i32, i32, i32) {
    %c0_i32 = arith.constant 0 : i32
    %c0_i32_0 = arith.constant 0 : i32
    %c0_i32_1 = arith.constant 0 : i32
    return %arg0, %c0_i32, %c0_i32_0 : i32, i32, i32
  }
}

</mosaic_0001>

<llo_original>
// kernel: _lambda_.1
$region0: #{_lambda_.1}
  #allocation0 [shape = 'u32[]', space=smem, size = 0x4, offset = 0x4, fixed_abs, tag = 'smem constant byte address 0x4 - core index']
  #allocation1 [shape = 'u32[144,128]{1,0:T(1,128)}', space=vmem, size = 0x12000, scoped, tag = 'internal scratch']
  #allocation2 [shape = 's32[1]{0}', space=sflag, size = 0x4, scoped, tag = 'scoped memory for _lambda_.1']
  #allocation3 [shape = 'u8[512]{0}', space=smem, size = 0x200, scoped, tag = 'prefetched SMEM operand 0']
  #allocation4 [shape = 'u8[512]{0}', space=smem, size = 0x200, scoped, tag = 'prefetched SMEM operand 1']
  %s0 = inlined_call_operand.smem [shape: u32[32], index: -1, kind: input, shape index: {}]
  %s1 = sld [smem:[%s0]]
  %s2 = scalar_lea.smem %s0, 1
  %s3 = sld [smem:[%s2]]
  %s4 = scalar_lea.smem %s0, 2
  %s5 = sld [smem:[%s4]]
  %s6 = scalar_lea.smem %s0, 3
  %s7 = sld [smem:[%s6]]
  %s8 = scalar_lea.smem %s0, 4
  %s9 = sld [smem:[%s8]]
  %s10 = scalar_lea.smem %s0, 5
  %s11 = sld [smem:[%s10]]
  %s12 = scalar_lea.smem %s0, 6
  %s13 = sld [smem:[%s12]]
  %s14 = scalar_lea.smem %s0, 7
  %s15 = sld [smem:[%s14]]
  %s16 = scalar_lea.smem %s0, 8
  %s17 = sld [smem:[%s16]]
  %s18 = scalar_lea.smem %s0, 9
  %s19 = sld [smem:[%s18]]
  %s20 = scalar_lea.smem %s0, 10
  %s21 = sld [smem:[%s20]]
  %s22 = scalar_lea.smem %s0, 11
  %s23 = sld [smem:[%s22]]
  %s24 = scalar_lea.smem %s0, 12
  %s25 = sld [smem:[%s24]]
  %s26 = scalar_lea.smem %s0, 13
  %s27 = sld [smem:[%s26]]
  %s28 = scalar_lea.smem %s0, 14
  %s29 = sld [smem:[%s28]]
  %s30 = scalar_lea.smem %s0, 15
  %s31 = sld [smem:[%s30]]
  %s32 = scalar_lea.smem %s0, 16
  %s33 = sld [smem:[%s32]]
  %s34 = scalar_lea.smem %s0, 17
  %s35 = sld [smem:[%s34]]
  %s36 = scalar_lea.smem %s0, 18
  %s37 = sld [smem:[%s36]]
  %s38 = scalar_lea.smem %s0, 19
  %s39 = sld [smem:[%s38]]
  %s40 = scalar_lea.smem %s0, 20
  %s41 = sld [smem:[%s40]]
  %s42 = scalar_lea.smem %s0, 21
  %s43 = sld [smem:[%s42]]
  %s44 = scalar_lea.smem %s0, 22
  %s45 = sld [smem:[%s44]]
  %s46 = scalar_lea.smem %s0, 23
  %s47 = sld [smem:[%s46]]
  %s48 = scalar_lea.smem %s0, 24
  %s49 = sld [smem:[%s48]]
  %s50 = scalar_lea.smem %s0, 25
  %s51 = sld [smem:[%s50]]
  %s52 = scalar_lea.smem %s0, 26
  %s53 = sld [smem:[%s52]]
  %s54 = scalar_lea.smem %s0, 27
  %s55 = sld [smem:[%s54]]
  %s56 = scalar_lea.smem %s0, 28
  %s57 = sld [smem:[%s56]]
  %s58 = scalar_lea.smem %s0, 29
  %s59 = sld [smem:[%s58]]
  %s60 = scalar_lea.smem %s0, 30
  %s61 = sld [smem:[%s60]]
  %s62 = scalar_lea.smem %s0, 31
  %s63 = sld [smem:[%s62]]
  %64 = xla_tuple %s61, %s63
  %s65 = sld [smem:[#allocation0]]
  $region153: #{_lambda_.1} parent=0
    _
  %s67 = ssub.s32 1, %s65
  %s68 = scalar_select 0, %s67, %s65
  %s69 = sshll.u32 %s1, 4
  %s70 = int_to_ptr.vmem [resolvable:$true] %s69
  %72 = dma.vmem_to_smem %s70, 16, [#allocation3], [#allocation2]
  %s73 = sshll.u32 %s3, 4
  %s74 = int_to_ptr.vmem [resolvable:$true] %s73
  %76 = dma.vmem_to_smem %s74, 16, [#allocation4], [#allocation2]
  %77 = dma.done [#allocation2], 32
  %78 = sfence
  loop: start=0, step=1, limit=4
  $region2: #{_lambda_.1} parent=0 // loop_pre_header
    _
  $region3: #{_lambda_.1} parent=0 // loop_header
    %s80 = sphi 0, %s84
    %p81 = scmp.ge.s32.totalorder %s80, 4
    %s90 = sphi 0, %s92
    %s93 = sphi 0, %s90
    %s94 = sphi 0, %s93
    %s110 = sphi 0, %s94
    %s116 = sphi 0, %s118
    %s119 = sphi 0, %s116
    %s120 = sphi 0, %s119
    %s136 = sphi 0, %s120
    %s140 = sphi 0, %s140
    %s142 = sphi 0, %s140
    %s143 = sphi 0, %s142
    %s157 = sphi 0, %s143
    %s161 = sphi 0, %s161
    %s163 = sphi 0, %s161
    %s164 = sphi 0, %s163
    %s178 = sphi 0, %s164
    %s182 = sphi 0, %s182
    %s184 = sphi 0, %s182
    %s185 = sphi 0, %s184
    %s199 = sphi 0, %s185
    %s203 = sphi 0, %s203
    %s205 = sphi 0, %s203
    %s206 = sphi 0, %s205
    %s220 = sphi 0, %s206
    %s224 = sphi 0, %s224
    %s226 = sphi 0, %s224
    %s227 = sphi 0, %s226
    %s241 = sphi 0, %s227
    %s245 = sphi 0, %s245
    %s247 = sphi 0, %s245
    %s248 = sphi 0, %s247
    %s262 = sphi 0, %s248
    %s266 = sphi 0, %s266
    %s268 = sphi 0, %s266
    %s269 = sphi 0, %s268
    %s283 = sphi 0, %s269
    %s287 = sphi 0, %s287
    %s289 = sphi 0, %s287
    %s290 = sphi 0, %s289
    %s304 = sphi 0, %s290
    %s308 = sphi 0, %s308
    %s310 = sphi 0, %s308
    %s311 = sphi 0, %s310
    %s325 = sphi 0, %s311
    %s329 = sphi 0, %s329
    %s331 = sphi 0, %s329
    %s332 = sphi 0, %s331
    %s346 = sphi 0, %s332
    %s350 = sphi 0, %s350
    %s352 = sphi 0, %s350
    %s353 = sphi 0, %s352
    %s367 = sphi 0, %s353
    %s371 = sphi 0, %s371
    %s373 = sphi 0, %s371
    %s374 = sphi 0, %s373
    %s388 = sphi 0, %s374
    %s392 = sphi 0, %s392
    %s394 = sphi 0, %s392
    %s395 = sphi 0, %s394
    %s409 = sphi 0, %s395
    %s413 = sphi 0, %s413
    %s415 = sphi 0, %s413
    %s416 = sphi 0, %s415
    %s430 = sphi 0, %s416
    %s434 = sphi 0, %s434
    %s436 = sphi 0, %s434
    %s437 = sphi 0, %s436
    %s451 = sphi 0, %s437
    %s455 = sphi 0, %s455
    %s457 = sphi 0, %s455
    %s458 = sphi 0, %s457
    %s472 = sphi 0, %s458
    %s476 = sphi 0, %s476
    %s478 = sphi 0, %s476
    %s479 = sphi 0, %s478
    %s493 = sphi 0, %s479
    %s497 = sphi 0, %s497
    %s499 = sphi 0, %s497
    %s500 = sphi 0, %s499
    %s514 = sphi 0, %s500
    %s518 = sphi 0, %s518
    %s520 = sphi 0, %s518
    %s521 = sphi 0, %s520
    %s535 = sphi 0, %s521
    %s539 = sphi 0, %s539
    %s541 = sphi 0, %s539
    %s542 = sphi 0, %s541
    %s556 = sphi 0, %s542
    %s560 = sphi 0, %s560
    %s562 = sphi 0, %s560
    %s563 = sphi 0, %s562
    %s577 = sphi 0, %s563
    %s581 = sphi 0, %s581
    %s583 = sphi 0, %s581
    %s584 = sphi 0, %s583
    %s598 = sphi 0, %s584
    %s602 = sphi 0, %s602
    %s604 = sphi 0, %s602
    %s605 = sphi 0, %s604
    %s619 = sphi 0, %s605
    %s623 = sphi 0, %s623
    %s625 = sphi 0, %s623
    %s626 = sphi 0, %s625
    %s640 = sphi 0, %s626
    %s644 = sphi 0, %s644
    %s646 = sphi 0, %s644
    %s647 = sphi 0, %s646
    %s661 = sphi 0, %s647
    %s665 = sphi 0, %s665
    %s667 = sphi 0, %s665
    %s668 = sphi 0, %s667
    %s682 = sphi 0, %s668
    %s688 = sphi 0, %s690
    %s691 = sphi 0, %s688
    %s692 = sphi 0, %s691
    %s708 = sphi 0, %s692
    %s714 = sphi 0, %s716
    %s717 = sphi 0, %s714
    %s718 = sphi 0, %s717
    %s734 = sphi 0, %s718
  $region4: #{_lambda_.1} parent=0 // loop_header_branch
    %83 = sbr.rel (%p81) target = $region8
  $region5: #{_lambda_.1} parent=0 // loop_body
    %s85 = ssub.s32 %s80, 1
    %s86 = ssub.s32 %s80, 2
    %s87 = sadd.s32 %s80, 1
    %s88 = ssub.s32 %s80, %s87
    %p89 = scmp.eq.s32.totalorder %s88, 0
    %s91 = sadd.s32 %s90, 1
    %s92 = scalar_select %p89, %s90, %s91
    %p95 = pneg %p89
    %p96 = scmp.eq.s32.totalorder %s80, 1
    %p97 = por %p95, %p96
    %p98 = scmp.ne.s32.totalorder %s90, %s93
    %p99 = scmp.eq.s32.totalorder %s80, 0
    %p100 = por %p98, %p99
    %p101 = scmp.ne.s32.totalorder %s90, %s93
    %p102 = scmp.eq.s32.totalorder %s85, 1
    %p103 = por %p101, %p102
    %p104 = scmp.ne.s32.totalorder %s93, %s94
    %p105 = scmp.eq.s32.totalorder %s85, 0
    %p106 = por %p104, %p105
    %p107 = scmp.ne.s32.totalorder %s93, %s94
    %p108 = scmp.eq.s32.totalorder %s86, 1
    %p109 = por %p107, %p108
    %p111 = scmp.ne.s32.totalorder %s94, %s110
    %p112 = scmp.eq.s32.totalorder %s86, 0
    %p113 = por %p111, %p112
    %s114 = ssub.s32 %s80, %s87
    %p115 = scmp.eq.s32.totalorder %s114, 0
    %s117 = sadd.s32 %s116, 1
    %s118 = scalar_select %p115, %s116, %s117
    %p121 = pneg %p115
    %p122 = scmp.eq.s32.totalorder %s80, 1
    %p123 = por %p121, %p122
    %p124 = scmp.ne.s32.totalorder %s116, %s119
    %p125 = scmp.eq.s32.totalorder %s80, 0
    %p126 = por %p124, %p125
    %p127 = scmp.ne.s32.totalorder %s116, %s119
    %p128 = scmp.eq.s32.totalorder %s85, 1
    %p129 = por %p127, %p128
    %p130 = scmp.ne.s32.totalorder %s119, %s120
    %p131 = scmp.eq.s32.totalorder %s85, 0
    %p132 = por %p130, %p131
    %p133 = scmp.ne.s32.totalorder %s119, %s120
    %p134 = scmp.eq.s32.totalorder %s86, 1
    %p135 = por %p133, %p134
    %p137 = scmp.ne.s32.totalorder %s120, %s136
    %p138 = scmp.eq.s32.totalorder %s86, 0
    %p139 = por %p137, %p138
    %s141 = sadd.s32 %s140, 1
    %p144 = scmp.eq.s32.totalorder %s80, 1
    %p145 = scmp.ne.s32.totalorder %s140, %s142
    %p146 = scmp.eq.s32.totalorder %s80, 0
    %p147 = por %p145, %p146
    %p148 = scmp.ne.s32.totalorder %s140, %s142
    %p149 = scmp.eq.s32.totalorder %s85, 1
    %p150 = por %p148, %p149
    %p151 = scmp.ne.s32.totalorder %s142, %s143
    %p152 = scmp.eq.s32.totalorder %s85, 0
    %p153 = por %p151, %p152
    %p154 = scmp.ne.s32.totalorder %s142, %s143
    %p155 = scmp.eq.s32.totalorder %s86, 1
    %p156 = por %p154, %p155
    %p158 = scmp.ne.s32.totalorder %s143, %s157
    %p159 = scmp.eq.s32.totalorder %s86, 0
    %p160 = por %p158, %p159
    %s162 = sadd.s32 %s161, 1
    %p165 = scmp.eq.s32.totalorder %s80, 1
    %p166 = scmp.ne.s32.totalorder %s161, %s163
    %p167 = scmp.eq.s32.totalorder %s80, 0
    %p168 = por %p166, %p167
    %p169 = scmp.ne.s32.totalorder %s161, %s163
    %p170 = scmp.eq.s32.totalorder %s85, 1
    %p171 = por %p169, %p170
    %p172 = scmp.ne.s32.totalorder %s163, %s164
    %p173 = scmp.eq.s32.totalorder %s85, 0
    %p174 = por %p172, %p173
    %p175 = scmp.ne.s32.totalorder %s163, %s164
    %p176 = scmp.eq.s32.totalorder %s86, 1
    %p177 = por %p175, %p176
    %p179 = scmp.ne.s32.totalorder %s164, %s178
    %p180 = scmp.eq.s32.totalorder %s86, 0
    %p181 = por %p179, %p180
    %s183 = sadd.s32 %s182, 1
    %p186 = scmp.eq.s32.totalorder %s80, 1
    %p187 = scmp.ne.s32.totalorder %s182, %s184
    %p188 = scmp.eq.s32.totalorder %s80, 0
    %p189 = por %p187, %p188
    %p190 = scmp.ne.s32.totalorder %s182, %s184
    %p191 = scmp.eq.s32.totalorder %s85, 1
    %p192 = por %p190, %p191
    %p193 = scmp.ne.s32.totalorder %s184, %s185
    %p194 = scmp.eq.s32.totalorder %s85, 0
    %p195 = por %p193, %p194
    %p196 = scmp.ne.s32.totalorder %s184, %s185
    %p197 = scmp.eq.s32.totalorder %s86, 1
    %p198 = por %p196, %p197
    %p200 = scmp.ne.s32.totalorder %s185, %s199
    %p201 = scmp.eq.s32.totalorder %s86, 0
    %p202 = por %p200, %p201
    %s204 = sadd.s32 %s203, 1
    %p207 = scmp.eq.s32.totalorder %s80, 1
    %p208 = scmp.ne.s32.totalorder %s203, %s205
    %p209 = scmp.eq.s32.totalorder %s80, 0
    %p210 = por %p208, %p209
    %p211 = scmp.ne.s32.totalorder %s203, %s205
    %p212 = scmp.eq.s32.totalorder %s85, 1
    %p213 = por %p211, %p212
    %p214 = scmp.ne.s32.totalorder %s205, %s206
    %p215 = scmp.eq.s32.totalorder %s85, 0
    %p216 = por %p214, %p215
    %p217 = scmp.ne.s32.totalorder %s205, %s206
    %p218 = scmp.eq.s32.totalorder %s86, 1
    %p219 = por %p217, %p218
    %p221 = scmp.ne.s32.totalorder %s206, %s220
    %p222 = scmp.eq.s32.totalorder %s86, 0
    %p223 = por %p221, %p222
    %s225 = sadd.s32 %s224, 1
    %p228 = scmp.eq.s32.totalorder %s80, 1
    %p229 = scmp.ne.s32.totalorder %s224, %s226
    %p230 = scmp.eq.s32.totalorder %s80, 0
    %p231 = por %p229, %p230
    %p232 = scmp.ne.s32.totalorder %s224, %s226
    %p233 = scmp.eq.s32.totalorder %s85, 1
    %p234 = por %p232, %p233
    %p235 = scmp.ne.s32.totalorder %s226, %s227
    %p236 = scmp.eq.s32.totalorder %s85, 0
    %p237 = por %p235, %p236
    %p238 = scmp.ne.s32.totalorder %s226, %s227
    %p239 = scmp.eq.s32.totalorder %s86, 1
    %p240 = por %p238, %p239
    %p242 = scmp.ne.s32.totalorder %s227, %s241
    %p243 = scmp.eq.s32.totalorder %s86, 0
    %p244 = por %p242, %p243
    %s246 = sadd.s32 %s245, 1
    %p249 = scmp.eq.s32.totalorder %s80, 1
    %p250 = scmp.ne.s32.totalorder %s245, %s247
    %p251 = scmp.eq.s32.totalorder %s80, 0
    %p252 = por %p250, %p251
    %p253 = scmp.ne.s32.totalorder %s245, %s247
    %p254 = scmp.eq.s32.totalorder %s85, 1
    %p255 = por %p253, %p254
    %p256 = scmp.ne.s32.totalorder %s247, %s248
    %p257 = scmp.eq.s32.totalorder %s85, 0
    %p258 = por %p256, %p257
    %p259 = scmp.ne.s32.totalorder %s247, %s248
    %p260 = scmp.eq.s32.totalorder %s86, 1
    %p261 = por %p259, %p260
    %p263 = scmp.ne.s32.totalorder %s248, %s262
    %p264 = scmp.eq.s32.totalorder %s86, 0
    %p265 = por %p263, %p264
    %s267 = sadd.s32 %s266, 1
    %p270 = scmp.eq.s32.totalorder %s80, 1
    %p271 = scmp.ne.s32.totalorder %s266, %s268
    %p272 = scmp.eq.s32.totalorder %s80, 0
    %p273 = por %p271, %p272
    %p274 = scmp.ne.s32.totalorder %s266, %s268
    %p275 = scmp.eq.s32.totalorder %s85, 1
    %p276 = por %p274, %p275
    %p277 = scmp.ne.s32.totalorder %s268, %s269
    %p278 = scmp.eq.s32.totalorder %s85, 0
    %p279 = por %p277, %p278
    %p280 = scmp.ne.s32.totalorder %s268, %s269
    %p281 = scmp.eq.s32.totalorder %s86, 1
    %p282 = por %p280, %p281
    %p284 = scmp.ne.s32.totalorder %s269, %s283
    %p285 = scmp.eq.s32.totalorder %s86, 0
    %p286 = por %p284, %p285
    %s288 = sadd.s32 %s287, 1
    %p291 = scmp.eq.s32.totalorder %s80, 1
    %p292 = scmp.ne.s32.totalorder %s287, %s289
    %p293 = scmp.eq.s32.totalorder %s80, 0
    %p294 = por %p292, %p293
    %p295 = scmp.ne.s32.totalorder %s287, %s289
    %p296 = scmp.eq.s32.totalorder %s85, 1
    %p297 = por %p295, %p296
    %p298 = scmp.ne.s32.totalorder %s289, %s290
    %p299 = scmp.eq.s32.totalorder %s85, 0
    %p300 = por %p298, %p299
    %p301 = scmp.ne.s32.totalorder %s289, %s290
    %p302 = scmp.eq.s32.totalorder %s86, 1
    %p303 = por %p301, %p302
    %p305 = scmp.ne.s32.totalorder %s290, %s304
    %p306 = scmp.eq.s32.totalorder %s86, 0
    %p307 = por %p305, %p306
    %s309 = sadd.s32 %s308, 1
    %p312 = scmp.eq.s32.totalorder %s80, 1
    %p313 = scmp.ne.s32.totalorder %s308, %s310
    %p314 = scmp.eq.s32.totalorder %s80, 0
    %p315 = por %p313, %p314
    %p316 = scmp.ne.s32.totalorder %s308, %s310
    %p317 = scmp.eq.s32.totalorder %s85, 1
    %p318 = por %p316, %p317
    %p319 = scmp.ne.s32.totalorder %s310, %s311
    %p320 = scmp.eq.s32.totalorder %s85, 0
    %p321 = por %p319, %p320
    %p322 = scmp.ne.s32.totalorder %s310, %s311
    %p323 = scmp.eq.s32.totalorder %s86, 1
    %p324 = por %p322, %p323
    %p326 = scmp.ne.s32.totalorder %s311, %s325
    %p327 = scmp.eq.s32.totalorder %s86, 0
    %p328 = por %p326, %p327
    %s330 = sadd.s32 %s329, 1
    %p333 = scmp.eq.s32.totalorder %s80, 1
    %p334 = scmp.ne.s32.totalorder %s329, %s331
    %p335 = scmp.eq.s32.totalorder %s80, 0
    %p336 = por %p334, %p335
    %p337 = scmp.ne.s32.totalorder %s329, %s331
    %p338 = scmp.eq.s32.totalorder %s85, 1
    %p339 = por %p337, %p338
    %p340 = scmp.ne.s32.totalorder %s331, %s332
    %p341 = scmp.eq.s32.totalorder %s85, 0
    %p342 = por %p340, %p341
    %p343 = scmp.ne.s32.totalorder %s331, %s332
    %p344 = scmp.eq.s32.totalorder %s86, 1
    %p345 = por %p343, %p344
    %p347 = scmp.ne.s32.totalorder %s332, %s346
    %p348 = scmp.eq.s32.totalorder %s86, 0
    %p349 = por %p347, %p348
    %s351 = sadd.s32 %s350, 1
    %p354 = scmp.eq.s32.totalorder %s80, 1
    %p355 = scmp.ne.s32.totalorder %s350, %s352
    %p356 = scmp.eq.s32.totalorder %s80, 0
    %p357 = por %p355, %p356
    %p358 = scmp.ne.s32.totalorder %s350, %s352
    %p359 = scmp.eq.s32.totalorder %s85, 1
    %p360 = por %p358, %p359
    %p361 = scmp.ne.s32.totalorder %s352, %s353
    %p362 = scmp.eq.s32.totalorder %s85, 0
    %p363 = por %p361, %p362
    %p364 = scmp.ne.s32.totalorder %s352, %s353
    %p365 = scmp.eq.s32.totalorder %s86, 1
    %p366 = por %p364, %p365
    %p368 = scmp.ne.s32.totalorder %s353, %s367
    %p369 = scmp.eq.s32.totalorder %s86, 0
    %p370 = por %p368, %p369
    %s372 = sadd.s32 %s371, 1
    %p375 = scmp.eq.s32.totalorder %s80, 1
    %p376 = scmp.ne.s32.totalorder %s371, %s373
    %p377 = scmp.eq.s32.totalorder %s80, 0
    %p378 = por %p376, %p377
    %p379 = scmp.ne.s32.totalorder %s371, %s373
    %p380 = scmp.eq.s32.totalorder %s85, 1
    %p381 = por %p379, %p380
    %p382 = scmp.ne.s32.totalorder %s373, %s374
    %p383 = scmp.eq.s32.totalorder %s85, 0
    %p384 = por %p382, %p383
    %p385 = scmp.ne.s32.totalorder %s373, %s374
    %p386 = scmp.eq.s32.totalorder %s86, 1
    %p387 = por %p385, %p386
    %p389 = scmp.ne.s32.totalorder %s374, %s388
    %p390 = scmp.eq.s32.totalorder %s86, 0
    %p391 = por %p389, %p390
    %s393 = sadd.s32 %s392, 1
    %p396 = scmp.eq.s32.totalorder %s80, 1
    %p397 = scmp.ne.s32.totalorder %s392, %s394
    %p398 = scmp.eq.s32.totalorder %s80, 0
    %p399 = por %p397, %p398
    %p400 = scmp.ne.s32.totalorder %s392, %s394
    %p401 = scmp.eq.s32.totalorder %s85, 1
    %p402 = por %p400, %p401
    %p403 = scmp.ne.s32.totalorder %s394, %s395
    %p404 = scmp.eq.s32.totalorder %s85, 0
    %p405 = por %p403, %p404
    %p406 = scmp.ne.s32.totalorder %s394, %s395
    %p407 = scmp.eq.s32.totalorder %s86, 1
    %p408 = por %p406, %p407
    %p410 = scmp.ne.s32.totalorder %s395, %s409
    %p411 = scmp.eq.s32.totalorder %s86, 0
    %p412 = por %p410, %p411
    %s414 = sadd.s32 %s413, 1
    %p417 = scmp.eq.s32.totalorder %s80, 1
    %p418 = scmp.ne.s32.totalorder %s413, %s415
    %p419 = scmp.eq.s32.totalorder %s80, 0
    %p420 = por %p418, %p419
    %p421 = scmp.ne.s32.totalorder %s413, %s415
    %p422 = scmp.eq.s32.totalorder %s85, 1
    %p423 = por %p421, %p422
    %p424 = scmp.ne.s32.totalorder %s415, %s416
    %p425 = scmp.eq.s32.totalorder %s85, 0
    %p426 = por %p424, %p425
    %p427 = scmp.ne.s32.totalorder %s415, %s416
    %p428 = scmp.eq.s32.totalorder %s86, 1
    %p429 = por %p427, %p428
    %p431 = scmp.ne.s32.totalorder %s416, %s430
    %p432 = scmp.eq.s32.totalorder %s86, 0
    %p433 = por %p431, %p432
    %s435 = sadd.s32 %s434, 1
    %p438 = scmp.eq.s32.totalorder %s80, 1
    %p439 = scmp.ne.s32.totalorder %s434, %s436
    %p440 = scmp.eq.s32.totalorder %s80, 0
    %p441 = por %p439, %p440
    %p442 = scmp.ne.s32.totalorder %s434, %s436
    %p443 = scmp.eq.s32.totalorder %s85, 1
    %p444 = por %p442, %p443
    %p445 = scmp.ne.s32.totalorder %s436, %s437
    %p446 = scmp.eq.s32.totalorder %s85, 0
    %p447 = por %p445, %p446
    %p448 = scmp.ne.s32.totalorder %s436, %s437
    %p449 = scmp.eq.s32.totalorder %s86, 1
    %p450 = por %p448, %p449
    %p452 = scmp.ne.s32.totalorder %s437, %s451
    %p453 = scmp.eq.s32.totalorder %s86, 0
    %p454 = por %p452, %p453
    %s456 = sadd.s32 %s455, 1
    %p459 = scmp.eq.s32.totalorder %s80, 1
    %p460 = scmp.ne.s32.totalorder %s455, %s457
    %p461 = scmp.eq.s32.totalorder %s80, 0
    %p462 = por %p460, %p461
    %p463 = scmp.ne.s32.totalorder %s455, %s457
    %p464 = scmp.eq.s32.totalorder %s85, 1
    %p465 = por %p463, %p464
    %p466 = scmp.ne.s32.totalorder %s457, %s458
    %p467 = scmp.eq.s32.totalorder %s85, 0
    %p468 = por %p466, %p467
    %p469 = scmp.ne.s32.totalorder %s457, %s458
    %p470 = scmp.eq.s32.totalorder %s86, 1
    %p471 = por %p469, %p470
    %p473 = scmp.ne.s32.totalorder %s458, %s472
    %p474 = scmp.eq.s32.totalorder %s86, 0
    %p475 = por %p473, %p474
    %s477 = sadd.s32 %s476, 1
    %p480 = scmp.eq.s32.totalorder %s80, 1
    %p481 = scmp.ne.s32.totalorder %s476, %s478
    %p482 = scmp.eq.s32.totalorder %s80, 0
    %p483 = por %p481, %p482
    %p484 = scmp.ne.s32.totalorder %s476, %s478
    %p485 = scmp.eq.s32.totalorder %s85, 1
    %p486 = por %p484, %p485
    %p487 = scmp.ne.s32.totalorder %s478, %s479
    %p488 = scmp.eq.s32.totalorder %s85, 0
    %p489 = por %p487, %p488
    %p490 = scmp.ne.s32.totalorder %s478, %s479
    %p491 = scmp.eq.s32.totalorder %s86, 1
    %p492 = por %p490, %p491
    %p494 = scmp.ne.s32.totalorder %s479, %s493
    %p495 = scmp.eq.s32.totalorder %s86, 0
    %p496 = por %p494, %p495
    %s498 = sadd.s32 %s497, 1
    %p501 = scmp.eq.s32.totalorder %s80, 1
    %p502 = scmp.ne.s32.totalorder %s497, %s499
    %p503 = scmp.eq.s32.totalorder %s80, 0
    %p504 = por %p502, %p503
    %p505 = scmp.ne.s32.totalorder %s497, %s499
    %p506 = scmp.eq.s32.totalorder %s85, 1
    %p507 = por %p505, %p506
    %p508 = scmp.ne.s32.totalorder %s499, %s500
    %p509 = scmp.eq.s32.totalorder %s85, 0
    %p510 = por %p508, %p509
    %p511 = scmp.ne.s32.totalorder %s499, %s500
    %p512 = scmp.eq.s32.totalorder %s86, 1
    %p513 = por %p511, %p512
    %p515 = scmp.ne.s32.totalorder %s500, %s514
    %p516 = scmp.eq.s32.totalorder %s86, 0
    %p517 = por %p515, %p516
    %s519 = sadd.s32 %s518, 1
    %p522 = scmp.eq.s32.totalorder %s80, 1
    %p523 = scmp.ne.s32.totalorder %s518, %s520
    %p524 = scmp.eq.s32.totalorder %s80, 0
    %p525 = por %p523, %p524
    %p526 = scmp.ne.s32.totalorder %s518, %s520
    %p527 = scmp.eq.s32.totalorder %s85, 1
    %p528 = por %p526, %p527
    %p529 = scmp.ne.s32.totalorder %s520, %s521
    %p530 = scmp.eq.s32.totalorder %s85, 0
    %p531 = por %p529, %p530
    %p532 = scmp.ne.s32.totalorder %s520, %s521
    %p533 = scmp.eq.s32.totalorder %s86, 1
    %p534 = por %p532, %p533
    %p536 = scmp.ne.s32.totalorder %s521, %s535
    %p537 = scmp.eq.s32.totalorder %s86, 0
    %p538 = por %p536, %p537
    %s540 = sadd.s32 %s539, 1
    %p543 = scmp.eq.s32.totalorder %s80, 1
    %p544 = scmp.ne.s32.totalorder %s539, %s541
    %p545 = scmp.eq.s32.totalorder %s80, 0
    %p546 = por %p544, %p545
    %p547 = scmp.ne.s32.totalorder %s539, %s541
    %p548 = scmp.eq.s32.totalorder %s85, 1
    %p549 = por %p547, %p548
    %p550 = scmp.ne.s32.totalorder %s541, %s542
    %p551 = scmp.eq.s32.totalorder %s85, 0
    %p552 = por %p550, %p551
    %p553 = scmp.ne.s32.totalorder %s541, %s542
    %p554 = scmp.eq.s32.totalorder %s86, 1
    %p555 = por %p553, %p554
    %p557 = scmp.ne.s32.totalorder %s542, %s556
    %p558 = scmp.eq.s32.totalorder %s86, 0
    %p559 = por %p557, %p558
    %s561 = sadd.s32 %s560, 1
    %p564 = scmp.eq.s32.totalorder %s80, 1
    %p565 = scmp.ne.s32.totalorder %s560, %s562
    %p566 = scmp.eq.s32.totalorder %s80, 0
    %p567 = por %p565, %p566
    %p568 = scmp.ne.s32.totalorder %s560, %s562
    %p569 = scmp.eq.s32.totalorder %s85, 1
    %p570 = por %p568, %p569
    %p571 = scmp.ne.s32.totalorder %s562, %s563
    %p572 = scmp.eq.s32.totalorder %s85, 0
    %p573 = por %p571, %p572
    %p574 = scmp.ne.s32.totalorder %s562, %s563
    %p575 = scmp.eq.s32.totalorder %s86, 1
    %p576 = por %p574, %p575
    %p578 = scmp.ne.s32.totalorder %s563, %s577
    %p579 = scmp.eq.s32.totalorder %s86, 0
    %p580 = por %p578, %p579
    %s582 = sadd.s32 %s581, 1
    %p585 = scmp.eq.s32.totalorder %s80, 1
    %p586 = scmp.ne.s32.totalorder %s581, %s583
    %p587 = scmp.eq.s32.totalorder %s80, 0
    %p588 = por %p586, %p587
    %p589 = scmp.ne.s32.totalorder %s581, %s583
    %p590 = scmp.eq.s32.totalorder %s85, 1
    %p591 = por %p589, %p590
    %p592 = scmp.ne.s32.totalorder %s583, %s584
    %p593 = scmp.eq.s32.totalorder %s85, 0
    %p594 = por %p592, %p593
    %p595 = scmp.ne.s32.totalorder %s583, %s584
    %p596 = scmp.eq.s32.totalorder %s86, 1
    %p597 = por %p595, %p596
    %p599 = scmp.ne.s32.totalorder %s584, %s598
    %p600 = scmp.eq.s32.totalorder %s86, 0
    %p601 = por %p599, %p600
    %s603 = sadd.s32 %s602, 1
    %p606 = scmp.eq.s32.totalorder %s80, 1
    %p607 = scmp.ne.s32.totalorder %s602, %s604
    %p608 = scmp.eq.s32.totalorder %s80, 0
    %p609 = por %p607, %p608
    %p610 = scmp.ne.s32.totalorder %s602, %s604
    %p611 = scmp.eq.s32.totalorder %s85, 1
    %p612 = por %p610, %p611
    %p613 = scmp.ne.s32.totalorder %s604, %s605
    %p614 = scmp.eq.s32.totalorder %s85, 0
    %p615 = por %p613, %p614
    %p616 = scmp.ne.s32.totalorder %s604, %s605
    %p617 = scmp.eq.s32.totalorder %s86, 1
    %p618 = por %p616, %p617
    %p620 = scmp.ne.s32.totalorder %s605, %s619
    %p621 = scmp.eq.s32.totalorder %s86, 0
    %p622 = por %p620, %p621
    %s624 = sadd.s32 %s623, 1
    %p627 = scmp.eq.s32.totalorder %s80, 1
    %p628 = scmp.ne.s32.totalorder %s623, %s625
    %p629 = scmp.eq.s32.totalorder %s80, 0
    %p630 = por %p628, %p629
    %p631 = scmp.ne.s32.totalorder %s623, %s625
    %p632 = scmp.eq.s32.totalorder %s85, 1
    %p633 = por %p631, %p632
    %p634 = scmp.ne.s32.totalorder %s625, %s626
    %p635 = scmp.eq.s32.totalorder %s85, 0
    %p636 = por %p634, %p635
    %p637 = scmp.ne.s32.totalorder %s625, %s626
    %p638 = scmp.eq.s32.totalorder %s86, 1
    %p639 = por %p637, %p638
    %p641 = scmp.ne.s32.totalorder %s626, %s640
    %p642 = scmp.eq.s32.totalorder %s86, 0
    %p643 = por %p641, %p642
    %s645 = sadd.s32 %s644, 1
    %p648 = scmp.eq.s32.totalorder %s80, 1
    %p649 = scmp.ne.s32.totalorder %s644, %s646
    %p650 = scmp.eq.s32.totalorder %s80, 0
    %p651 = por %p649, %p650
    %p652 = scmp.ne.s32.totalorder %s644, %s646
    %p653 = scmp.eq.s32.totalorder %s85, 1
    %p654 = por %p652, %p653
    %p655 = scmp.ne.s32.totalorder %s646, %s647
    %p656 = scmp.eq.s32.totalorder %s85, 0
    %p657 = por %p655, %p656
    %p658 = scmp.ne.s32.totalorder %s646, %s647
    %p659 = scmp.eq.s32.totalorder %s86, 1
    %p660 = por %p658, %p659
    %p662 = scmp.ne.s32.totalorder %s647, %s661
    %p663 = scmp.eq.s32.totalorder %s86, 0
    %p664 = por %p662, %p663
    %s666 = sadd.s32 %s665, 1
    %p669 = scmp.eq.s32.totalorder %s80, 1
    %p670 = scmp.ne.s32.totalorder %s665, %s667
    %p671 = scmp.eq.s32.totalorder %s80, 0
    %p672 = por %p670, %p671
    %p673 = scmp.ne.s32.totalorder %s665, %s667
    %p674 = scmp.eq.s32.totalorder %s85, 1
    %p675 = por %p673, %p674
    %p676 = scmp.ne.s32.totalorder %s667, %s668
    %p677 = scmp.eq.s32.totalorder %s85, 0
    %p678 = por %p676, %p677
    %p679 = scmp.ne.s32.totalorder %s667, %s668
    %p680 = scmp.eq.s32.totalorder %s86, 1
    %p681 = por %p679, %p680
    %p683 = scmp.ne.s32.totalorder %s668, %s682
    %p684 = scmp.eq.s32.totalorder %s86, 0
    %p685 = por %p683, %p684
    %s686 = ssub.s32 %s80, %s87
    %p687 = scmp.eq.s32.totalorder %s686, 0
    %s689 = sadd.s32 %s688, 1
    %s690 = scalar_select %p687, %s688, %s689
    %p693 = pneg %p687
    %p694 = scmp.eq.s32.totalorder %s80, 1
    %p695 = por %p693, %p694
    %p696 = scmp.ne.s32.totalorder %s688, %s691
    %p697 = scmp.eq.s32.totalorder %s80, 0
    %p698 = por %p696, %p697
    %p699 = scmp.ne.s32.totalorder %s688, %s691
    %p700 = scmp.eq.s32.totalorder %s85, 1
    %p701 = por %p699, %p700
    %p702 = scmp.ne.s32.totalorder %s691, %s692
    %p703 = scmp.eq.s32.totalorder %s85, 0
    %p704 = por %p702, %p703
    %p705 = scmp.ne.s32.totalorder %s691, %s692
    %p706 = scmp.eq.s32.totalorder %s86, 1
    %p707 = por %p705, %p706
    %p709 = scmp.ne.s32.totalorder %s692, %s708
    %p710 = scmp.eq.s32.totalorder %s86, 0
    %p711 = por %p709, %p710
    %s712 = ssub.s32 %s80, %s87
    %p713 = scmp.eq.s32.totalorder %s712, 0
    %s715 = sadd.s32 %s714, 1
    %s716 = scalar_select %p713, %s714, %s715
    %p719 = pneg %p713
    %p720 = scmp.eq.s32.totalorder %s80, 1
    %p721 = por %p719, %p720
    %p722 = scmp.ne.s32.totalorder %s714, %s717
    %p723 = scmp.eq.s32.totalorder %s80, 0
    %p724 = por %p722, %p723
    %p725 = scmp.ne.s32.totalorder %s714, %s717
    %p726 = scmp.eq.s32.totalorder %s85, 1
    %p727 = por %p725, %p726
    %p728 = scmp.ne.s32.totalorder %s717, %s718
    %p729 = scmp.eq.s32.totalorder %s85, 0
    %p730 = por %p728, %p729
    %p731 = scmp.ne.s32.totalorder %s717, %s718
    %p732 = scmp.eq.s32.totalorder %s86, 1
    %p733 = por %p731, %p732
    %p735 = scmp.ne.s32.totalorder %s718, %s734
    %p736 = scmp.eq.s32.totalorder %s86, 0
    %p737 = por %p735, %p736
    %p738 = scmp.le.s32.totalorder 1, %s80
    %p739 = scmp.lt.s32.totalorder %s80, 3
    %p740 = pnand %p738, %p739
    %p741 = pneg %p740
    // Predicated region
    $region9: #{_lambda_.1} parent=5 // pred_check
      _
    $region10: #{_lambda_.1} parent=5 // pred_check_branch
      %743 = sbr.rel (%p740) target = $region12
    $region11: #{_lambda_.1} parent=5 // pred_region
      %s744 = ssub.s32 %s80, 1
      // Predicated region
      $region13: #{_lambda_.1} parent=11 // pred_check
        %p745 = pneg %p153
      $region14: #{_lambda_.1} parent=11 // pred_check_branch
        %747 = sbr.rel (%p745) target = $region16
      $region15: #{_lambda_.1} parent=11 // pred_region
        _
      $region16: #{_lambda_.1} parent=11 // pred_fallthru
        _
      // Predicated region
      $region17: #{_lambda_.1} parent=11 // pred_check
        %p748 = pneg %p174
      $region18: #{_lambda_.1} parent=11 // pred_check_branch
        %750 = sbr.rel (%p748) target = $region20
      $region19: #{_lambda_.1} parent=11 // pred_region
        _
      $region20: #{_lambda_.1} parent=11 // pred_fallthru
        _
      // Predicated region
      $region21: #{_lambda_.1} parent=11 // pred_check
        %p751 = pneg %p195
      $region22: #{_lambda_.1} parent=11 // pred_check_branch
        %753 = sbr.rel (%p751) target = $region24
      $region23: #{_lambda_.1} parent=11 // pred_region
        _
      $region24: #{_lambda_.1} parent=11 // pred_fallthru
        _
      // Predicated region
      $region25: #{_lambda_.1} parent=11 // pred_check
        %p754 = pneg %p216
      $region26: #{_lambda_.1} parent=11 // pred_check_branch
        %756 = sbr.rel (%p754) target = $region28
      $region27: #{_lambda_.1} parent=11 // pred_region
        _
      $region28: #{_lambda_.1} parent=11 // pred_fallthru
        _
      // Predicated region
      $region29: #{_lambda_.1} parent=11 // pred_check
        %p757 = pneg %p237
      $region30: #{_lambda_.1} parent=11 // pred_check_branch
        %759 = sbr.rel (%p757) target = $region32
      $region31: #{_lambda_.1} parent=11 // pred_region
        _
      $region32: #{_lambda_.1} parent=11 // pred_fallthru
        _
      // Predicated region
      $region33: #{_lambda_.1} parent=11 // pred_check
        %p760 = pneg %p258
      $region34: #{_lambda_.1} parent=11 // pred_check_branch
        %762 = sbr.rel (%p760) target = $region36
      $region35: #{_lambda_.1} parent=11 // pred_region
        _
      $region36: #{_lambda_.1} parent=11 // pred_fallthru
        _
      // Predicated region
      $region37: #{_lambda_.1} parent=11 // pred_check
        %p763 = pneg %p279
      $region38: #{_lambda_.1} parent=11 // pred_check_branch
        %765 = sbr.rel (%p763) target = $region40
      $region39: #{_lambda_.1} parent=11 // pred_region
        _
      $region40: #{_lambda_.1} parent=11 // pred_fallthru
        _
      // Predicated region
      $region41: #{_lambda_.1} parent=11 // pred_check
        %p766 = pneg %p300
      $region42: #{_lambda_.1} parent=11 // pred_check_branch
        %768 = sbr.rel (%p766) target = $region44
      $region43: #{_lambda_.1} parent=11 // pred_region
        _
      $region44: #{_lambda_.1} parent=11 // pred_fallthru
        _
      // Predicated region
      $region45: #{_lambda_.1} parent=11 // pred_check
        %p769 = pneg %p321
      $region46: #{_lambda_.1} parent=11 // pred_check_branch
        %771 = sbr.rel (%p769) target = $region48
      $region47: #{_lambda_.1} parent=11 // pred_region
        _
      $region48: #{_lambda_.1} parent=11 // pred_fallthru
        _
      // Predicated region
      $region49: #{_lambda_.1} parent=11 // pred_check
        %p772 = pneg %p342
      $region50: #{_lambda_.1} parent=11 // pred_check_branch
        %774 = sbr.rel (%p772) target = $region52
      $region51: #{_lambda_.1} parent=11 // pred_region
        _
      $region52: #{_lambda_.1} parent=11 // pred_fallthru
        _
      // Predicated region
      $region53: #{_lambda_.1} parent=11 // pred_check
        %p775 = pneg %p363
      $region54: #{_lambda_.1} parent=11 // pred_check_branch
        %777 = sbr.rel (%p775) target = $region56
      $region55: #{_lambda_.1} parent=11 // pred_region
        _
      $region56: #{_lambda_.1} parent=11 // pred_fallthru
        _
      // Predicated region
      $region57: #{_lambda_.1} parent=11 // pred_check
        %p778 = pneg %p384
      $region58: #{_lambda_.1} parent=11 // pred_check_branch
        %780 = sbr.rel (%p778) target = $region60
      $region59: #{_lambda_.1} parent=11 // pred_region
        _
      $region60: #{_lambda_.1} parent=11 // pred_fallthru
        _
      // Predicated region
      $region61: #{_lambda_.1} parent=11 // pred_check
        %p781 = pneg %p405
      $region62: #{_lambda_.1} parent=11 // pred_check_branch
        %783 = sbr.rel (%p781) target = $region64
      $region63: #{_lambda_.1} parent=11 // pred_region
        _
      $region64: #{_lambda_.1} parent=11 // pred_fallthru
        _
      // Predicated region
      $region65: #{_lambda_.1} parent=11 // pred_check
        %p784 = pneg %p426
      $region66: #{_lambda_.1} parent=11 // pred_check_branch
        %786 = sbr.rel (%p784) target = $region68
      $region67: #{_lambda_.1} parent=11 // pred_region
        _
      $region68: #{_lambda_.1} parent=11 // pred_fallthru
        _
      // Predicated region
      $region69: #{_lambda_.1} parent=11 // pred_check
        %p787 = pneg %p447
      $region70: #{_lambda_.1} parent=11 // pred_check_branch
        %789 = sbr.rel (%p787) target = $region72
      $region71: #{_lambda_.1} parent=11 // pred_region
        _
      $region72: #{_lambda_.1} parent=11 // pred_fallthru
        _
      // Predicated region
      $region73: #{_lambda_.1} parent=11 // pred_check
        %p790 = pneg %p468
      $region74: #{_lambda_.1} parent=11 // pred_check_branch
        %792 = sbr.rel (%p790) target = $region76
      $region75: #{_lambda_.1} parent=11 // pred_region
        _
      $region76: #{_lambda_.1} parent=11 // pred_fallthru
        _
      // Predicated region
      $region77: #{_lambda_.1} parent=11 // pred_check
        %p793 = pneg %p489
      $region78: #{_lambda_.1} parent=11 // pred_check_branch
        %795 = sbr.rel (%p793) target = $region80
      $region79: #{_lambda_.1} parent=11 // pred_region
        _
      $region80: #{_lambda_.1} parent=11 // pred_fallthru
        _
      // Predicated region
      $region81: #{_lambda_.1} parent=11 // pred_check
        %p796 = pneg %p510
      $region82: #{_lambda_.1} parent=11 // pred_check_branch
        %798 = sbr.rel (%p796) target = $region84
      $region83: #{_lambda_.1} parent=11 // pred_region
        _
      $region84: #{_lambda_.1} parent=11 // pred_fallthru
        _
      // Predicated region
      $region85: #{_lambda_.1} parent=11 // pred_check
        %p799 = pneg %p531
      $region86: #{_lambda_.1} parent=11 // pred_check_branch
        %801 = sbr.rel (%p799) target = $region88
      $region87: #{_lambda_.1} parent=11 // pred_region
        _
      $region88: #{_lambda_.1} parent=11 // pred_fallthru
        _
      // Predicated region
      $region89: #{_lambda_.1} parent=11 // pred_check
        %p802 = pneg %p552
      $region90: #{_lambda_.1} parent=11 // pred_check_branch
        %804 = sbr.rel (%p802) target = $region92
      $region91: #{_lambda_.1} parent=11 // pred_region
        _
      $region92: #{_lambda_.1} parent=11 // pred_fallthru
        _
      // Predicated region
      $region93: #{_lambda_.1} parent=11 // pred_check
        %p805 = pneg %p573
      $region94: #{_lambda_.1} parent=11 // pred_check_branch
        %807 = sbr.rel (%p805) target = $region96
      $region95: #{_lambda_.1} parent=11 // pred_region
        _
      $region96: #{_lambda_.1} parent=11 // pred_fallthru
        _
      // Predicated region
      $region97: #{_lambda_.1} parent=11 // pred_check
        %p808 = pneg %p594
      $region98: #{_lambda_.1} parent=11 // pred_check_branch
        %810 = sbr.rel (%p808) target = $region100
      $region99: #{_lambda_.1} parent=11 // pred_region
        _
      $region100: #{_lambda_.1} parent=11 // pred_fallthru
        _
      // Predicated region
      $region101: #{_lambda_.1} parent=11 // pred_check
        %p811 = pneg %p615
      $region102: #{_lambda_.1} parent=11 // pred_check_branch
        %813 = sbr.rel (%p811) target = $region104
      $region103: #{_lambda_.1} parent=11 // pred_region
        _
      $region104: #{_lambda_.1} parent=11 // pred_fallthru
        _
      // Predicated region
      $region105: #{_lambda_.1} parent=11 // pred_check
        %p814 = pneg %p636
      $region106: #{_lambda_.1} parent=11 // pred_check_branch
        %816 = sbr.rel (%p814) target = $region108
      $region107: #{_lambda_.1} parent=11 // pred_region
        _
      $region108: #{_lambda_.1} parent=11 // pred_fallthru
        _
      // Predicated region
      $region109: #{_lambda_.1} parent=11 // pred_check
        %p817 = pneg %p657
      $region110: #{_lambda_.1} parent=11 // pred_check_branch
        %819 = sbr.rel (%p817) target = $region112
      $region111: #{_lambda_.1} parent=11 // pred_region
        _
      $region112: #{_lambda_.1} parent=11 // pred_fallthru
        _
      // Predicated region
      $region113: #{_lambda_.1} parent=11 // pred_check
        %p820 = pneg %p678
      $region114: #{_lambda_.1} parent=11 // pred_check_branch
        %822 = sbr.rel (%p820) target = $region116
      $region115: #{_lambda_.1} parent=11 // pred_region
        _
      $region116: #{_lambda_.1} parent=11 // pred_fallthru
        _
    $region12: #{_lambda_.1} parent=5 // pred_fallthru
      _
    %p823 = scmp.lt.s32.totalorder %s80, 2
    // Predicated region
    $region117: #{_lambda_.1} parent=5 // pred_check
      %p824 = pneg %p823
    $region118: #{_lambda_.1} parent=5 // pred_check_branch
      %826 = sbr.rel (%p824) target = $region120
    $region119: #{_lambda_.1} parent=5 // pred_region
      // Predicated region
      $region121: #{_lambda_.1} parent=119 // pred_check
        %p827 = pneg %p100
      $region122: #{_lambda_.1} parent=119 // pred_check_branch
        %829 = sbr.rel (%p827) target = $region124
      $region123: #{_lambda_.1} parent=119 // pred_region
        %p830 = scmp.lt.s32.totalorder %s80, 1
        %s831 = scalar_select %p830, %s80, 1
        %s832 = smul.addr %s831, 8
        %s833 = scalar_lea.vmem %s5, %s832
      $region124: #{_lambda_.1} parent=119 // pred_fallthru
        _
      // Predicated region
      $region125: #{_lambda_.1} parent=119 // pred_check
        %p834 = pneg %p126
      $region126: #{_lambda_.1} parent=119 // pred_check_branch
        %836 = sbr.rel (%p834) target = $region128
      $region127: #{_lambda_.1} parent=119 // pred_region
        %p837 = scmp.lt.s32.totalorder %s80, 1
        %s838 = scalar_select %p837, %s80, 1
        %s839 = smul.addr %s838, 2
        %s840 = smul.addr %s839, 8
        %s841 = scalar_lea.vmem %s7, %s840
      $region128: #{_lambda_.1} parent=119 // pred_fallthru
        _
    $region120: #{_lambda_.1} parent=5 // pred_fallthru
      _
    %p842 = scmp.le.s32.totalorder 1, %s80
    %p843 = scmp.lt.s32.totalorder %s80, 3
    %p844 = pnand %p842, %p843
    %p845 = pneg %p844
    // Predicated region
    $region129: #{_lambda_.1} parent=5 // pred_check
      _
    $region130: #{_lambda_.1} parent=5 // pred_check_branch
      %847 = sbr.rel (%p844) target = $region132
    $region131: #{_lambda_.1} parent=5 // pred_region
      %s848 = ssub.s32 %s80, 1
      %p849 = scmp.lt.s32.totalorder %s85, 1
      %s850 = scalar_select %p849, %s85, 1
      %s851 = smul.addr %s850, 8
      %s852 = scalar_lea.vmem %s5, %s851
      %p853 = pneg %p106
      %p854 = pneg %p103
      %p855 = scmp.lt.s32.totalorder %s85, 1
      %s856 = scalar_select %p855, %s85, 1
      %s857 = smul.addr %s856, 2
      %s858 = smul.addr %s857, 8
      %s859 = scalar_lea.vmem %s7, %s858
      %p860 = pneg %p132
      %p861 = pneg %p129
      %p862 = pneg %p153
      %p863 = pneg %p150
      %p864 = pneg %p174
      %p865 = pneg %p171
      %p866 = pneg %p195
      %p867 = pneg %p192
      %p868 = pneg %p216
      %p869 = pneg %p213
      %p870 = pneg %p237
      %p871 = pneg %p234
      %p872 = pneg %p258
      %p873 = pneg %p255
      %p874 = pneg %p279
      %p875 = pneg %p276
      %p876 = pneg %p300
      %p877 = pneg %p297
      %p878 = pneg %p321
      %p879 = pneg %p318
      %p880 = pneg %p342
      %p881 = pneg %p339
      %p882 = pneg %p363
      %p883 = pneg %p360
      %p884 = pneg %p384
      %p885 = pneg %p381
      %p886 = pneg %p405
      %p887 = pneg %p402
      %p888 = pneg %p426
      %p889 = pneg %p423
      %p890 = pneg %p447
      %p891 = pneg %p444
      %p892 = pneg %p468
      %p893 = pneg %p465
      %p894 = pneg %p489
      %p895 = pneg %p486
      %p896 = pneg %p510
      %p897 = pneg %p507
      %p898 = pneg %p531
      %p899 = pneg %p528
      %p900 = pneg %p552
      %p901 = pneg %p549
      %p902 = pneg %p573
      %p903 = pneg %p570
      %p904 = pneg %p594
      %p905 = pneg %p591
      %p906 = pneg %p615
      %p907 = pneg %p612
      %p908 = pneg %p636
      %p909 = pneg %p633
      %p910 = pneg %p657
      %p911 = pneg %p654
      %p912 = pneg %p678
      %p913 = pneg %p675
      %p914 = pneg %p704
      %p915 = pneg %p701
      %p916 = scmp.lt.s32.totalorder %s85, 1
      %s917 = scalar_select %p916, %s85, 1
      %s918 = smul.addr %s917, 2
      %s919 = smul.addr %s918, 8
      %s920 = scalar_lea.vmem %s61, %s919
      %p921 = pneg %p730
      %p922 = pneg %p727
      %p923 = scmp.lt.s32.totalorder %s85, 1
      %s924 = scalar_select %p923, %s85, 1
      %s925 = smul.addr %s924, 2
      %s926 = smul.addr %s925, 8
      %s927 = scalar_lea.vmem %s63, %s926
      %p928 = scmp.lt.s32.totalorder %s85, 1
      %s929 = scalar_select %p928, %s85, 1
      %s930 = smul.addr %s929, 8
      %s931 = scalar_lea.vmem %s5, %s930
      %p932 = scmp.lt.s32.totalorder %s85, 1
      %s933 = scalar_select %p932, %s85, 1
      %s934 = smul.addr %s933, 2
      %s935 = smul.addr %s934, 8
      %s936 = scalar_lea.vmem %s7, %s935
      %p937 = scmp.lt.s32.totalorder %s85, 1
      %s938 = scalar_select %p937, %s85, 1
      %s939 = smul.addr %s938, 2
      %s940 = smul.addr %s939, 8
      %s941 = scalar_lea.vmem %s61, %s940
      %p942 = scmp.lt.s32.totalorder %s85, 1
      %s943 = scalar_select %p942, %s85, 1
      %s944 = smul.addr %s943, 2
      %s945 = smul.addr %s944, 8
      %s946 = scalar_lea.vmem %s63, %s945
      %s948 = sld [smem:[#allocation3 + %s85]]
      %s949 = sld [smem:[#allocation4 + %s85]]
      %v950 = vld [vmem:[%s931] sm:$0xff]
      %v951 = vlaneseq
      %v952 = vshrl.u32 %v951, 7
      %v953 = vstv %s948
      %vm954 = vcmp.lt.s32.totalorder %v952, %v953
      %v955 = vsel %vm954, 1, 0
      %v956 = vcvt.s32.f32 %v955
      %v957 = vlaneseq
      %v958 = vand.u32 %v957, 127
      %vm959 = vcmp.lt.s32.totalorder %v958, %v953
      %v960 = vmul.f32 %v950, %v956
      %v961 = vpack.c.bf16 %v960, %v960
      %v962 = vld [vmem:[%s9] sm:$0xf]
      %v963 = vld [vmem:[%s9 + $0x4] sm:$0xf]
      %v964 = vld [vmem:[%s9 + $0x8] sm:$0xf]
      %v965 = vld [vmem:[%s9 + $0xc] sm:$0xf]
      %v966 = vld [vmem:[%s11] sm:$0x1]
      %v968 = vlaneseq
      %v969 = vshrl.u32 %v968, 7
      %v970 = vsub.s32 0, %v969
      %v971 = vrot.slane %v966, %v970
      %v977 = vunpack.c.l.b16 %v962
      %v978 = vunpack.c.l.b16 %v963
      %v979 = vunpack.c.l.b16 %v964
      %v980 = vunpack.c.l.b16 %v965
      %v981 = vpack.c.b16 %v978, %v977
      %v982 = vpack.c.b16 %v980, %v979
      %vm985 = vcmask 261120
      %v987 = vsel %vm985, %v961, 0
      %989 = vmatprep.subr.bf16.mxu0 0
      %990 = vmatpush1.bf16.msra.mxu0 %v981
      %991 = vmatprep.subr.bf16.mxu0 0
      %992 = vmatpush1.bf16.msra.mxu0 %v982
      %993 = vmatprep.subr.bf16.mxu0 0
      %994 = vmatpush1.bf16.msra.mxu0 0
      %995 = vmatprep.subr.bf16.mxu0 0
      %996 = vmatpush1.bf16.msra.mxu0 0
      %997 = vmatprep.subr.bf16.mxu0 0
      %998 = vmatpush1.bf16.msra.mxu0 0
      %999 = vmatprep.subr.bf16.mxu0 0
      %1000 = vmatpush1.bf16.msra.mxu0 0
      %1001 = vmatprep.subr.bf16.mxu0 0
      %1002 = vmatpush1.bf16.msra.mxu0 0
      %1003 = vmatprep.subr.bf16.mxu0 0
      %1004 = vmatpush1.bf16.msra.mxu0 0
      %1005 = vmatprep.subr.bf16.mxu0 0
      %1006 = vmatpush1.bf16.msra.mxu0 0
      %1007 = vmatprep.subr.bf16.mxu0 0
      %1008 = vmatpush1.bf16.msra.mxu0 0
      %1009 = vmatprep.subr.bf16.mxu0 0
      %1010 = vmatpush1.bf16.msra.mxu0 0
      %1011 = vmatprep.subr.bf16.mxu0 0
      %1012 = vmatpush1.bf16.msra.mxu0 0
      %1013 = vmatprep.subr.bf16.mxu0 0
      %1014 = vmatpush1.bf16.msra.mxu0 0
      %1015 = vmatprep.subr.bf16.mxu0 0
      %1016 = vmatpush1.bf16.msra.mxu0 0
      %1017 = vmatprep.subr.bf16.mxu0 0
      %1018 = vmatpush1.bf16.msra.mxu0 0
      %1019 = vmatprep.subr.bf16.mxu0 0
      %1020 = vmatpush1.bf16.msra.mxu0 0
      %1021 = vmatprep.mubr.bf16.mxu0 0
      %1022 = vmatmul.mubr.bf16.gmra.mrb[0].mxu0 %v987
      %v1023 = vpop.f32.mrb[0].mxu0
      %v1024 = vadd.f32 %v971, %v1023
      %v1025 = vpop.f32.mrb[0].mxu0
      %v1026 = vpop.f32.mrb[0].mxu0
      %v1027 = vpop.f32.mrb[0].mxu0
      %1028 = vdwg.mxu0
      %v1029 = vpack.c.bf16 %v1024, %v1024
      %1031 = vrot.lane.b32.xlu0 %v1029, 96
      %v1032 = vpop.permute.xlu0 %1031
      %vm1033 = vcmask 130048
      %v1035 = vsel %vm1033, %v1029, 0
      %v1038 = vsel %vm1033, %v1032, 0
      %1040 = vmatprep.subr.bf16.mxu0 0
      %1041 = vmatpush1.bf16.xpose.msra.mxu0 %v1038
      %1042 = vmatprep.subr.bf16.mxu0 0
      %1043 = vmatpush1.bf16.xpose.msra.mxu0 0
      %1044 = vmatprep.subr.bf16.mxu0 0
      %1045 = vmatpush1.bf16.xpose.msra.mxu0 0
      %1046 = vmatprep.subr.bf16.mxu0 0
      %1047 = vmatpush1.bf16.xpose.msra.mxu0 0
      %1048 = vmatprep.subr.bf16.mxu0 0
      %1049 = vmatpush1.bf16.xpose.msra.mxu0 0
      %1050 = vmatprep.subr.bf16.mxu0 0
      %1051 = vmatpush1.bf16.xpose.msra.mxu0 0
      %1052 = vmatprep.subr.bf16.mxu0 0
      %1053 = vmatpush1.bf16.xpose.msra.mxu0 0
      %1054 = vmatprep.subr.bf16.mxu0 0
      %1055 = vmatpush1.bf16.xpose.msra.mxu0 0
      %1056 = vmatprep.subr.bf16.mxu0 0
      %1057 = vmatpush1.bf16.xpose.msra.mxu0 0
      %1058 = vmatprep.subr.bf16.mxu0 0
      %1059 = vmatpush1.bf16.xpose.msra.mxu0 0
      %1060 = vmatprep.subr.bf16.mxu0 0
      %1061 = vmatpush1.bf16.xpose.msra.mxu0 0
      %1062 = vmatprep.subr.bf16.mxu0 0
      %1063 = vmatpush1.bf16.xpose.msra.mxu0 0
      %1064 = vmatprep.subr.bf16.mxu0 0
      %1065 = vmatpush1.bf16.xpose.msra.mxu0 0
      %1066 = vmatprep.subr.bf16.mxu0 0
      %1067 = vmatpush1.bf16.xpose.msra.mxu0 0
      %1068 = vmatprep.subr.bf16.mxu0 0
      %1069 = vmatpush1.bf16.xpose.msra.mxu0 0
      %1070 = vmatprep.subr.bf16.mxu0 0
      %1071 = vmatpush1.bf16.xpose.msra.mxu0 0
      %1072 = vmatprep.mubr.bf16.mxu0 0
      %1073 = vmatmul.mubr.bf16.gmra.mrb[0].mxu0 %v1035
      %v1074 = vpop.f32.mrb[0].mxu0
      %v1075 = vadd.f32 0.0, %v1074
      %v1076 = vpop.f32.mrb[0].mxu0
      %v1077 = vpop.f32.mrb[0].mxu0
      %v1078 = vpop.f32.mrb[0].mxu0
      %1079 = vdwg.mxu0
      %v1080 = vsel %vm959, 1, 0
      %vm1081 = vcmp.eq.s32.totalorder %v1080, 1
      %v1082 = vsel %vm1081, %v1075, -10000.0
      %vm1083 = vcmask 64512
      %v1084 = vsel %vm1083, %v1082, -inf
      %1085 = vmax.xlane.f32.xlu0 %v1084
      %v1086 = vpop.xlane.xlu0 %1085
      %v1087 = vsub.f32 %v1082, %v1086
      %v1088 = vmul.f32 %v1087, 1.442695
      %v1089 = vpow.pop %v1088
      %v1090 = vsel %vm1083, %v1089, 0.0
      %1091 = vadd.xlane.f32.xlu0 %v1090
      %v1092 = vpop.xlane.xlu0 %1091
      %v1093 = vrcp.pop %v1092
      %v1094 = vmul.f32 %v1089, %v1093
      %v1095 = vpack.c.bf16 %v1094, %v1094
      %1096 = vrot.lane.b32.xlu0 %v1029, 64
      %v1097 = vpop.permute.xlu0 %1096
      %v1099 = vsel %vm1083, %v1095, 0
      %vm1101 = vcmask 1043456
      %v1103 = vsel %vm1101, %v1097, 0
      %1105 = vmatprep.subr.bf16.mxu0 0
      %1106 = vmatpush1.bf16.msra.mxu0 %v1103
      %1107 = vmatprep.subr.bf16.mxu0 0
      %1108 = vmatpush1.bf16.msra.mxu0 0
      %1109 = vmatprep.subr.bf16.mxu0 0
      %1110 = vmatpush1.bf16.msra.mxu0 0
      %1111 = vmatprep.subr.bf16.mxu0 0
      %1112 = vmatpush1.bf16.msra.mxu0 0
      %1113 = vmatprep.subr.bf16.mxu0 0
      %1114 = vmatpush1.bf16.msra.mxu0 0
      %1115 = vmatprep.subr.bf16.mxu0 0
      %1116 = vmatpush1.bf16.msra.mxu0 0
      %1117 = vmatprep.subr.bf16.mxu0 0
      %1118 = vmatpush1.bf16.msra.mxu0 0
      %1119 = vmatprep.subr.bf16.mxu0 0
      %1120 = vmatpush1.bf16.msra.mxu0 0
      %1121 = vmatprep.subr.bf16.mxu0 0
      %1122 = vmatpush1.bf16.msra.mxu0 0
      %1123 = vmatprep.subr.bf16.mxu0 0
      %1124 = vmatpush1.bf16.msra.mxu0 0
      %1125 = vmatprep.subr.bf16.mxu0 0
      %1126 = vmatpush1.bf16.msra.mxu0 0
      %1127 = vmatprep.subr.bf16.mxu0 0
      %1128 = vmatpush1.bf16.msra.mxu0 0
      %1129 = vmatprep.subr.bf16.mxu0 0
      %1130 = vmatpush1.bf16.msra.mxu0 0
      %1131 = vmatprep.subr.bf16.mxu0 0
      %1132 = vmatpush1.bf16.msra.mxu0 0
      %1133 = vmatprep.subr.bf16.mxu0 0
      %1134 = vmatpush1.bf16.msra.mxu0 0
      %1135 = vmatprep.subr.bf16.mxu0 0
      %1136 = vmatpush1.bf16.msra.mxu0 0
      %1137 = vmatprep.mubr.bf16.mxu0 0
      %1138 = vmatmul.mubr.bf16.gmra.mrb[0].mxu0 %v1099
      %v1139 = vpop.f32.mrb[0].mxu0
      %v1140 = vadd.f32 0.0, %v1139
      %v1141 = vpop.f32.mrb[0].mxu0
      %v1142 = vpop.f32.mrb[0].mxu0
      %v1143 = vpop.f32.mrb[0].mxu0
      %1144 = vdwg.mxu0
      %v1145 = vpack.c.bf16 %v1140, %v1140
      %1146 = vrot.lane.b32.xlu0 %v1029, 112
      %v1147 = vpop.permute.xlu0 %1146
      %1148 = vrot.lane.b32.xlu0 %v1029, 80
      %v1149 = vpop.permute.xlu0 %1148
      %v1151 = vsel %vm1033, %v1147, 0
      %v1154 = vsel %vm1033, %v1149, 0
      %1156 = vmatprep.subr.bf16.mxu0 0
      %1157 = vmatpush1.bf16.xpose.msra.mxu0 %v1154
      %1158 = vmatprep.subr.bf16.mxu0 0
      %1159 = vmatpush1.bf16.xpose.msra.mxu0 0
      %1160 = vmatprep.subr.bf16.mxu0 0
      %1161 = vmatpush1.bf16.xpose.msra.mxu0 0
      %1162 = vmatprep.subr.bf16.mxu0 0
      %1163 = vmatpush1.bf16.xpose.msra.mxu0 0
      %1164 = vmatprep.subr.bf16.mxu0 0
      %1165 = vmatpush1.bf16.xpose.msra.mxu0 0
      %1166 = vmatprep.subr.bf16.mxu0 0
      %1167 = vmatpush1.bf16.xpose.msra.mxu0 0
      %1168 = vmatprep.subr.bf16.mxu0 0
      %1169 = vmatpush1.bf16.xpose.msra.mxu0 0
      %1170 = vmatprep.subr.bf16.mxu0 0
      %1171 = vmatpush1.bf16.xpose.msra.mxu0 0
      %1172 = vmatprep.subr.bf16.mxu0 0
      %1173 = vmatpush1.bf16.xpose.msra.mxu0 0
      %1174 = vmatprep.subr.bf16.mxu0 0
      %1175 = vmatpush1.bf16.xpose.msra.mxu0 0
      %1176 = vmatprep.subr.bf16.mxu0 0
      %1177 = vmatpush1.bf16.xpose.msra.mxu0 0
      %1178 = vmatprep.subr.bf16.mxu0 0
      %1179 = vmatpush1.bf16.xpose.msra.mxu0 0
      %1180 = vmatprep.subr.bf16.mxu0 0
      %1181 = vmatpush1.bf16.xpose.msra.mxu0 0
      %1182 = vmatprep.subr.bf16.mxu0 0
      %1183 = vmatpush1.bf16.xpose.msra.mxu0 0
      %1184 = vmatprep.subr.bf16.mxu0 0
      %1185 = vmatpush1.bf16.xpose.msra.mxu0 0
      %1186 = vmatprep.subr.bf16.mxu0 0
      %1187 = vmatpush1.bf16.xpose.msra.mxu0 0
      %1188 = vmatprep.mubr.bf16.mxu0 0
      %1189 = vmatmul.mubr.bf16.gmra.mrb[0].mxu0 %v1151
      %v1190 = vpop.f32.mrb[0].mxu0
      %v1191 = vadd.f32 0.0, %v1190
      %v1192 = vpop.f32.mrb[0].mxu0
      %v1193 = vpop.f32.mrb[0].mxu0
      %v1194 = vpop.f32.mrb[0].mxu0
      %1195 = vdwg.mxu0
      %v1196 = vsel %vm1081, %v1191, -10000.0
      %v1197 = vsel %vm1083, %v1196, -inf
      %1198 = vmax.xlane.f32.xlu0 %v1197
      %v1199 = vpop.xlane.xlu0 %1198
      %v1200 = vsub.f32 %v1196, %v1199
      %v1201 = vmul.f32 %v1200, 1.442695
      %v1202 = vpow.pop %v1201
      %v1203 = vsel %vm1083, %v1202, 0.0
      %1204 = vadd.xlane.f32.xlu0 %v1203
      %v1205 = vpop.xlane.xlu0 %1204
      %v1206 = vrcp.pop %v1205
      %v1207 = vmul.f32 %v1202, %v1206
      %v1208 = vpack.c.bf16 %v1207, %v1207
      %1209 = vrot.lane.b32.xlu0 %v1029, 48
      %v1210 = vpop.permute.xlu0 %1209
      %v1212 = vsel %vm1083, %v1208, 0
      %v1215 = vsel %vm1101, %v1210, 0
      %1217 = vmatprep.subr.bf16.mxu0 0
      %1218 = vmatpush1.bf16.msra.mxu0 %v1215
      %1219 = vmatprep.subr.bf16.mxu0 0
      %1220 = vmatpush1.bf16.msra.mxu0 0
      %1221 = vmatprep.subr.bf16.mxu0 0
      %1222 = vmatpush1.bf16.msra.mxu0 0
      %1223 = vmatprep.subr.bf16.mxu0 0
      %1224 = vmatpush1.bf16.msra.mxu0 0
      %1225 = vmatprep.subr.bf16.mxu0 0
      %1226 = vmatpush1.bf16.msra.mxu0 0
      %1227 = vmatprep.subr.bf16.mxu0 0
      %1228 = vmatpush1.bf16.msra.mxu0 0
      %1229 = vmatprep.subr.bf16.mxu0 0
      %1230 = vmatpush1.bf16.msra.mxu0 0
      %1231 = vmatprep.subr.bf16.mxu0 0
      %1232 = vmatpush1.bf16.msra.mxu0 0
      %1233 = vmatprep.subr.bf16.mxu0 0
      %1234 = vmatpush1.bf16.msra.mxu0 0
      %1235 = vmatprep.subr.bf16.mxu0 0
      %1236 = vmatpush1.bf16.msra.mxu0 0
      %1237 = vmatprep.subr.bf16.mxu0 0
      %1238 = vmatpush1.bf16.msra.mxu0 0
      %1239 = vmatprep.subr.bf16.mxu0 0
      %1240 = vmatpush1.bf16.msra.mxu0 0
      %1241 = vmatprep.subr.bf16.mxu0 0
      %1242 = vmatpush1.bf16.msra.mxu0 0
      %1243 = vmatprep.subr.bf16.mxu0 0
      %1244 = vmatpush1.bf16.msra.mxu0 0
      %1245 = vmatprep.subr.bf16.mxu0 0
      %1246 = vmatpush1.bf16.msra.mxu0 0
      %1247 = vmatprep.subr.bf16.mxu0 0
      %1248 = vmatpush1.bf16.msra.mxu0 0
      %1249 = vmatprep.mubr.bf16.mxu0 0
      %1250 = vmatmul.mubr.bf16.gmra.mrb[0].mxu0 %v1212
      %v1251 = vpop.f32.mrb[0].mxu0
      %v1252 = vadd.f32 0.0, %v1251
      %v1253 = vpop.f32.mrb[0].mxu0
      %v1254 = vpop.f32.mrb[0].mxu0
      %v1255 = vpop.f32.mrb[0].mxu0
      %1256 = vdwg.mxu0
      %v1257 = vpack.c.bf16 %v1252, %v1252
      %1259 = vrot.lane.b32.xlu0 %v1257, 16
      %v1260 = vpop.permute.xlu0 %1259
      %v1263 = vsel %vm1033, %v1145, %v1260
      %v1264 = vld [vmem:[%s13] sm:$0xf]
      %v1265 = vld [vmem:[%s13 + $0x4] sm:$0xf]
      %v1266 = vld [vmem:[%s13 + $0x8] sm:$0xf]
      %v1267 = vld [vmem:[%s13 + $0xc] sm:$0xf]
      %v1268 = vld [vmem:[%s15] sm:$0x1]
      %v1270 = vlaneseq
      %v1271 = vshrl.u32 %v1270, 7
      %v1272 = vsub.s32 0, %v1271
      %v1273 = vrot.slane %v1268, %v1272
      %v1279 = vunpack.c.l.b16 %v1264
      %v1280 = vunpack.c.l.b16 %v1265
      %v1281 = vunpack.c.l.b16 %v1266
      %v1282 = vunpack.c.l.b16 %v1267
      %v1283 = vpack.c.b16 %v1280, %v1279
      %v1284 = vpack.c.b16 %v1282, %v1281
      %v1287 = vsel %vm985, %v1263, 0
      %1289 = vmatprep.subr.bf16.mxu0 0
      %1290 = vmatpush1.bf16.msra.mxu0 %v1283
      %1291 = vmatprep.subr.bf16.mxu0 0
      %1292 = vmatpush1.bf16.msra.mxu0 %v1284
      %1293 = vmatprep.subr.bf16.mxu0 0
      %1294 = vmatpush1.bf16.msra.mxu0 0
      %1295 = vmatprep.subr.bf16.mxu0 0
      %1296 = vmatpush1.bf16.msra.mxu0 0
      %1297 = vmatprep.subr.bf16.mxu0 0
      %1298 = vmatpush1.bf16.msra.mxu0 0
      %1299 = vmatprep.subr.bf16.mxu0 0
      %1300 = vmatpush1.bf16.msra.mxu0 0
      %1301 = vmatprep.subr.bf16.mxu0 0
      %1302 = vmatpush1.bf16.msra.mxu0 0
      %1303 = vmatprep.subr.bf16.mxu0 0
      %1304 = vmatpush1.bf16.msra.mxu0 0
      %1305 = vmatprep.subr.bf16.mxu0 0
      %1306 = vmatpush1.bf16.msra.mxu0 0
      %1307 = vmatprep.subr.bf16.mxu0 0
      %1308 = vmatpush1.bf16.msra.mxu0 0
      %1309 = vmatprep.subr.bf16.mxu0 0
      %1310 = vmatpush1.bf16.msra.mxu0 0
      %1311 = vmatprep.subr.bf16.mxu0 0
      %1312 = vmatpush1.bf16.msra.mxu0 0
      %1313 = vmatprep.subr.bf16.mxu0 0
      %1314 = vmatpush1.bf16.msra.mxu0 0
      %1315 = vmatprep.subr.bf16.mxu0 0
      %1316 = vmatpush1.bf16.msra.mxu0 0
      %1317 = vmatprep.subr.bf16.mxu0 0
      %1318 = vmatpush1.bf16.msra.mxu0 0
      %1319 = vmatprep.subr.bf16.mxu0 0
      %1320 = vmatpush1.bf16.msra.mxu0 0
      %1321 = vmatprep.mubr.bf16.mxu0 0
      %1322 = vmatmul.mubr.bf16.gmra.mrb[0].mxu0 %v1287
      %v1323 = vpop.f32.mrb[0].mxu0
      %v1324 = vadd.f32 %v1273, %v1323
      %v1325 = vpop.f32.mrb[0].mxu0
      %v1326 = vpop.f32.mrb[0].mxu0
      %v1327 = vpop.f32.mrb[0].mxu0
      %1328 = vdwg.mxu0
      %v1329 = vadd.f32 %v960, %v1324
      %v1330 = vld [vmem:[%s17] sm:$0x1]
      %v1331 = vld [vmem:[%s19] sm:$0x1]
      %v1332 = vsel %vm985, %v1329, 0.0
      %1333 = vadd.xlane.f32.xlu0 %v1332
      %v1334 = vpop.xlane.xlu0 %1333
      %v1335 = vrcp.pop 32.0
      %v1336 = vmul.f32 %v1334, %v1335
      %v1337 = vsub.f32 %v1329, %v1336
      %v1338 = vmul.f32 %v1337, %v1337
      %v1339 = vsel %vm985, %v1338, 0.0
      %1340 = vadd.xlane.f32.xlu0 %v1339
      %v1341 = vpop.xlane.xlu0 %1340
      %v1342 = vmul.f32 %v1341, %v1335
      %v1343 = vadd.f32 %v1342, 1e-05
      %v1344 = vrsqrt.pop %v1343
      %v1345 = vmul.f32 %v1337, %v1344
      %v1347 = vlaneseq
      %v1348 = vshrl.u32 %v1347, 7
      %v1349 = vsub.s32 0, %v1348
      %v1350 = vrot.slane %v1330, %v1349
      %v1352 = vmul.f32 %v1345, %v1350
      %v1354 = vlaneseq
      %v1355 = vshrl.u32 %v1354, 7
      %v1356 = vsub.s32 0, %v1355
      %v1357 = vrot.slane %v1331, %v1356
      %v1359 = vadd.f32 %v1352, %v1357
      %v1360 = vmul.f32 %v1359, %v956
      %v1361 = vld [vmem:[%s21] sm:$0xf]
      %v1362 = vld [vmem:[%s21 + $0x4] sm:$0xf]
      %v1363 = vld [vmem:[%s21 + $0x8] sm:$0xf]
      %v1364 = vld [vmem:[%s21 + $0xc] sm:$0xf]
      %v1365 = vld [vmem:[%s21 + $0x10] sm:$0xf]
      %v1366 = vld [vmem:[%s21 + $0x14] sm:$0xf]
      %v1367 = vld [vmem:[%s21 + $0x18] sm:$0xf]
      %v1368 = vld [vmem:[%s21 + $0x1c] sm:$0xf]
      %v1369 = vld [vmem:[%s21 + $0x20] sm:$0xf]
      %v1370 = vld [vmem:[%s21 + $0x24] sm:$0xf]
      %v1371 = vld [vmem:[%s21 + $0x28] sm:$0xf]
      %v1372 = vld [vmem:[%s21 + $0x2c] sm:$0xf]
      %v1373 = vld [vmem:[%s23] sm:$0x1]
      %v1375 = vrot.slane %v1360, 7
      %vm1377 = vcmask 1040384
      %v1378 = vsel %vm1377, 0.0, %v1375
      %v1379 = vsel %vm1377, %v1375, 0.0
      %vm1382 = vcmask 1046528
      %v1383 = vrot.slane %v1378, 1
      %v1384 = vrot.slane %v1379, 1
      %v1385 = vsel %vm1382, %v1383, %v1384
      %1386 = vrot.lane.b32.xlu0 %v1385, 32
      %v1387 = vpop.permute.xlu0 %1386
      %vm1389 = vcmask 1045504
      %v1390 = vrot.slane %v1378, 2
      %v1391 = vrot.slane %v1379, 2
      %v1392 = vsel %vm1389, %v1390, %v1391
      %1393 = vrot.lane.b32.xlu0 %v1392, 64
      %v1394 = vpop.permute.xlu0 %1393
      %v1396 = vsel %vm985, %v1378, %v1387
      %vm1397 = vcmask 523264
      %v1398 = vsel %vm1397, %v1396, %v1394
      %v1399 = vpack.c.bf16 %v1398, %v1398
      %v1401 = vlaneseq
      %v1402 = vshrl.u32 %v1401, 7
      %v1403 = vsub.s32 0, %v1402
      %v1404 = vrot.slane %v1373, %v1403
      %v1418 = vunpack.c.l.b16 %v1361
      %v1419 = vunpack.c.l.b16 %v1362
      %v1420 = vunpack.c.l.b16 %v1363
      %v1421 = vunpack.c.l.b16 %v1364
      %v1422 = vunpack.c.l.b16 %v1365
      %v1423 = vunpack.c.l.b16 %v1366
      %v1424 = vunpack.c.l.b16 %v1367
      %v1425 = vunpack.c.l.b16 %v1368
      %v1426 = vunpack.c.l.b16 %v1369
      %v1427 = vunpack.c.l.b16 %v1370
      %v1428 = vunpack.c.l.b16 %v1371
      %v1429 = vunpack.c.l.b16 %v1372
      %v1430 = vpack.c.b16 %v1419, %v1418
      %v1431 = vpack.c.b16 %v1421, %v1420
      %v1432 = vpack.c.b16 %v1423, %v1422
      %v1433 = vpack.c.b16 %v1425, %v1424
      %v1434 = vpack.c.b16 %v1427, %v1426
      %v1435 = vpack.c.b16 %v1429, %v1428
      %vm1442 = vcmask 785408
      %v1444 = vsel %vm1442, %v1399, 0
      %1446 = vmatprep.subr.bf16.mxu0 0
      %1447 = vmatpush1.bf16.msra.mxu0 %v1430
      %1448 = vmatprep.subr.bf16.mxu0 0
      %1449 = vmatpush1.bf16.msra.mxu0 %v1431
      %1450 = vmatprep.subr.bf16.mxu0 0
      %1451 = vmatpush1.bf16.msra.mxu0 %v1432
      %1452 = vmatprep.subr.bf16.mxu0 0
      %1453 = vmatpush1.bf16.msra.mxu0 %v1433
      %1454 = vmatprep.subr.bf16.mxu0 0
      %1455 = vmatpush1.bf16.msra.mxu0 %v1434
      %1456 = vmatprep.subr.bf16.mxu0 0
      %1457 = vmatpush1.bf16.msra.mxu0 %v1435
      %1458 = vmatprep.subr.bf16.mxu0 0
      %1459 = vmatpush1.bf16.msra.mxu0 0
      %1460 = vmatprep.subr.bf16.mxu0 0
      %1461 = vmatpush1.bf16.msra.mxu0 0
      %1462 = vmatprep.subr.bf16.mxu0 0
      %1463 = vmatpush1.bf16.msra.mxu0 0
      %1464 = vmatprep.subr.bf16.mxu0 0
      %1465 = vmatpush1.bf16.msra.mxu0 0
      %1466 = vmatprep.subr.bf16.mxu0 0
      %1467 = vmatpush1.bf16.msra.mxu0 0
      %1468 = vmatprep.subr.bf16.mxu0 0
      %1469 = vmatpush1.bf16.msra.mxu0 0
      %1470 = vmatprep.subr.bf16.mxu0 0
      %1471 = vmatpush1.bf16.msra.mxu0 0
      %1472 = vmatprep.subr.bf16.mxu0 0
      %1473 = vmatpush1.bf16.msra.mxu0 0
      %1474 = vmatprep.subr.bf16.mxu0 0
      %1475 = vmatpush1.bf16.msra.mxu0 0
      %1476 = vmatprep.subr.bf16.mxu0 0
      %1477 = vmatpush1.bf16.msra.mxu0 0
      %1478 = vmatprep.mubr.bf16.mxu0 0
      %1479 = vmatmul.mubr.bf16.gmra.mrb[0].mxu0 %v1444
      %v1480 = vpop.f32.mrb[0].mxu0
      %v1481 = vadd.f32 %v1404, %v1480
      %v1482 = vpop.f32.mrb[0].mxu0
      %v1483 = vpop.f32.mrb[0].mxu0
      %v1484 = vpop.f32.mrb[0].mxu0
      %1485 = vdwg.mxu0
      %v1486 = vmax.f32 %v1481, 0.0
      %v1487 = vmul.f32 %v1486, %v956
      %v1488 = vld [vmem:[%s25] sm:$0xf]
      %v1489 = vld [vmem:[%s25 + $0x4] sm:$0xf]
      %v1490 = vld [vmem:[%s25 + $0x8] sm:$0xf]
      %v1491 = vld [vmem:[%s25 + $0xc] sm:$0xf]
      %v1492 = vld [vmem:[%s25 + $0x10] sm:$0xf]
      %v1493 = vld [vmem:[%s25 + $0x14] sm:$0xf]
      %v1494 = vld [vmem:[%s25 + $0x18] sm:$0xf]
      %v1495 = vld [vmem:[%s25 + $0x1c] sm:$0xf]
      %v1496 = vld [vmem:[%s25 + $0x20] sm:$0xf]
      %v1497 = vld [vmem:[%s25 + $0x24] sm:$0xf]
      %v1498 = vld [vmem:[%s25 + $0x28] sm:$0xf]
      %v1499 = vld [vmem:[%s25 + $0x2c] sm:$0xf]
      %v1500 = vld [vmem:[%s25 + $0x30] sm:$0xf]
      %v1501 = vld [vmem:[%s25 + $0x34] sm:$0xf]
      %v1502 = vld [vmem:[%s25 + $0x38] sm:$0xf]
      %v1503 = vld [vmem:[%s25 + $0x3c] sm:$0xf]
      %v1504 = vld [vmem:[%s25 + $0x40] sm:$0xf]
      %v1505 = vld [vmem:[%s25 + $0x44] sm:$0xf]
      %v1506 = vld [vmem:[%s25 + $0x48] sm:$0xf]
      %v1507 = vld [vmem:[%s25 + $0x4c] sm:$0xf]
      %v1508 = vld [vmem:[%s25 + $0x50] sm:$0xf]
      %v1509 = vld [vmem:[%s25 + $0x54] sm:$0xf]
      %v1510 = vld [vmem:[%s25 + $0x58] sm:$0xf]
      %v1511 = vld [vmem:[%s25 + $0x5c] sm:$0xf]
      %v1512 = vld [vmem:[%s27] sm:$0x1]
      %v1514 = vrot.slane %v1487, 7
      %v1516 = vsel %vm1377, 0.0, %v1514
      %v1517 = vsel %vm1377, %v1514, 0.0
      %v1520 = vrot.slane %v1516, 1
      %v1521 = vrot.slane %v1517, 1
      %v1522 = vsel %vm1382, %v1520, %v1521
      %1523 = vrot.lane.b32.xlu0 %v1522, 64
      %v1524 = vpop.permute.xlu0 %1523
      %v1526 = vrot.slane %v1516, 2
      %v1527 = vrot.slane %v1517, 2
      %v1528 = vsel %vm1389, %v1526, %v1527
      %v1530 = vsel %vm1397, %v1516, %v1524
      %v1531 = vpack.c.bf16 %v1530, %v1530
      %v1532 = vpack.c.bf16 %v1528, %v1528
      %v1534 = vlaneseq
      %v1535 = vshrl.u32 %v1534, 7
      %v1536 = vsub.s32 0, %v1535
      %v1537 = vrot.slane %v1512, %v1536
      %v1563 = vunpack.c.l.b16 %v1488
      %v1564 = vunpack.c.l.b16 %v1489
      %v1565 = vunpack.c.l.b16 %v1490
      %v1566 = vunpack.c.l.b16 %v1491
      %v1567 = vunpack.c.l.b16 %v1492
      %v1568 = vunpack.c.l.b16 %v1493
      %v1569 = vunpack.c.l.b16 %v1494
      %v1570 = vunpack.c.l.b16 %v1495
      %v1571 = vunpack.c.l.b16 %v1496
      %v1572 = vunpack.c.l.b16 %v1497
      %v1573 = vunpack.c.l.b16 %v1498
      %v1574 = vunpack.c.l.b16 %v1499
      %v1575 = vunpack.c.l.b16 %v1500
      %v1576 = vunpack.c.l.b16 %v1501
      %v1577 = vunpack.c.l.b16 %v1502
      %v1578 = vunpack.c.l.b16 %v1503
      %v1579 = vunpack.c.l.b16 %v1504
      %v1580 = vunpack.c.l.b16 %v1505
      %v1581 = vunpack.c.l.b16 %v1506
      %v1582 = vunpack.c.l.b16 %v1507
      %v1583 = vunpack.c.l.b16 %v1508
      %v1584 = vunpack.c.l.b16 %v1509
      %v1585 = vunpack.c.l.b16 %v1510
      %v1586 = vunpack.c.l.b16 %v1511
      %v1587 = vpack.c.b16 %v1564, %v1563
      %v1588 = vpack.c.b16 %v1566, %v1565
      %v1589 = vpack.c.b16 %v1568, %v1567
      %v1590 = vpack.c.b16 %v1570, %v1569
      %v1591 = vpack.c.b16 %v1572, %v1571
      %v1592 = vpack.c.b16 %v1574, %v1573
      %v1593 = vpack.c.b16 %v1576, %v1575
      %v1594 = vpack.c.b16 %v1578, %v1577
      %v1595 = vpack.c.b16 %v1580, %v1579
      %v1596 = vpack.c.b16 %v1582, %v1581
      %v1597 = vpack.c.b16 %v1584, %v1583
      %v1598 = vpack.c.b16 %v1586, %v1585
      %v1612 = vsel %vm1397, %v1532, 0
      %1614 = vmatprep.subr.bf16.mxu0 0
      %1615 = vmatpush1.bf16.msra.mxu0 %v1587
      %1616 = vmatprep.subr.bf16.mxu0 0
      %1617 = vmatpush1.bf16.msra.mxu0 %v1588
      %1618 = vmatprep.subr.bf16.mxu0 0
      %1619 = vmatpush1.bf16.msra.mxu0 %v1589
      %1620 = vmatprep.subr.bf16.mxu0 0
      %1621 = vmatpush1.bf16.msra.mxu0 %v1590
      %1622 = vmatprep.subr.bf16.mxu0 0
      %1623 = vmatpush1.bf16.msra.mxu0 %v1591
      %1624 = vmatprep.subr.bf16.mxu0 0
      %1625 = vmatpush1.bf16.msra.mxu0 %v1592
      %1626 = vmatprep.subr.bf16.mxu0 0
      %1627 = vmatpush1.bf16.msra.mxu0 %v1593
      %1628 = vmatprep.subr.bf16.mxu0 0
      %1629 = vmatpush1.bf16.msra.mxu0 %v1594
      %1630 = vmatprep.subr.bf16.mxu0 0
      %1631 = vmatpush1.bf16.msra.mxu0 %v1595
      %1632 = vmatprep.subr.bf16.mxu0 0
      %1633 = vmatpush1.bf16.msra.mxu0 %v1596
      %1634 = vmatprep.subr.bf16.mxu0 0
      %1635 = vmatpush1.bf16.msra.mxu0 %v1597
      %1636 = vmatprep.subr.bf16.mxu0 0
      %1637 = vmatpush1.bf16.msra.mxu0 %v1598
      %1638 = vmatprep.subr.bf16.mxu0 0
      %1639 = vmatpush1.bf16.msra.mxu0 0
      %1640 = vmatprep.subr.bf16.mxu0 0
      %1641 = vmatpush1.bf16.msra.mxu0 0
      %1642 = vmatprep.subr.bf16.mxu0 0
      %1643 = vmatpush1.bf16.msra.mxu0 0
      %1644 = vmatprep.subr.bf16.mxu0 0
      %1645 = vmatpush1.bf16.msra.mxu0 0
      %1646 = vmatprep.mubr.bf16.mxu0 %v1612
      %1647 = vmatmul.mubr.bf16.gmra.mrb[0].mxu0 %v1531
      %v1648 = vpop.f32.mrb[0].mxu0
      %v1649 = vadd.f32 %v1537, %v1648
      %v1650 = vpop.f32.mrb[0].mxu0
      %v1651 = vpop.f32.mrb[0].mxu0
      %v1652 = vpop.f32.mrb[0].mxu0
      %1653 = vdwg.mxu0
      %v1654 = vmul.f32 %v1649, %v956
      %v1655 = vadd.f32 %v1359, %v1654
      %v1656 = vld [vmem:[%s29] sm:$0x1]
      %v1657 = vld [vmem:[%s31] sm:$0x1]
      %v1658 = vsel %vm985, %v1655, 0.0
      %1659 = vadd.xlane.f32.xlu0 %v1658
      %v1660 = vpop.xlane.xlu0 %1659
      %v1661 = vmul.f32 %v1660, %v1335
      %v1662 = vsub.f32 %v1655, %v1661
      %v1663 = vmul.f32 %v1662, %v1662
      %v1664 = vsel %vm985, %v1663, 0.0
      %1665 = vadd.xlane.f32.xlu0 %v1664
      %v1666 = vpop.xlane.xlu0 %1665
      %v1667 = vmul.f32 %v1666, %v1335
      %v1668 = vadd.f32 %v1667, 1e-05
      %v1669 = vrsqrt.pop %v1668
      %v1670 = vmul.f32 %v1662, %v1669
      %v1672 = vlaneseq
      %v1673 = vshrl.u32 %v1672, 7
      %v1674 = vsub.s32 0, %v1673
      %v1675 = vrot.slane %v1656, %v1674
      %v1677 = vmul.f32 %v1670, %v1675
      %v1679 = vlaneseq
      %v1680 = vshrl.u32 %v1679, 7
      %v1681 = vsub.s32 0, %v1680
      %v1682 = vrot.slane %v1657, %v1681
      %v1684 = vadd.f32 %v1677, %v1682
      %v1685 = vpack.c.bf16 %v1684, %v1684
      %s1686 = scalar_lea.vmem %s9, 16
      %v1687 = vld [vmem:[%s1686] sm:$0xf]
      %v1688 = vld [vmem:[%s1686 + $0x4] sm:$0xf]
      %v1689 = vld [vmem:[%s1686 + $0x8] sm:$0xf]
      %v1690 = vld [vmem:[%s1686 + $0xc] sm:$0xf]
      %s1691 = scalar_lea.vmem %s11, 1
      %v1692 = vld [vmem:[%s1691] sm:$0x1]
      %v1694 = vlaneseq
      %v1695 = vshrl.u32 %v1694, 7
      %v1696 = vsub.s32 0, %v1695
      %v1697 = vrot.slane %v1692, %v1696
      %v1703 = vunpack.c.l.b16 %v1687
      %v1704 = vunpack.c.l.b16 %v1688
      %v1705 = vunpack.c.l.b16 %v1689
      %v1706 = vunpack.c.l.b16 %v1690
      %v1707 = vpack.c.b16 %v1704, %v1703
      %v1708 = vpack.c.b16 %v1706, %v1705
      %v1712 = vsel %vm985, %v1685, 0
      %1714 = vmatprep.subr.bf16.mxu0 0
      %1715 = vmatpush1.bf16.msra.mxu0 %v1707
      %1716 = vmatprep.subr.bf16.mxu0 0
      %1717 = vmatpush1.bf16.msra.mxu0 %v1708
      %1718 = vmatprep.subr.bf16.mxu0 0
      %1719 = vmatpush1.bf16.msra.mxu0 0
      %1720 = vmatprep.subr.bf16.mxu0 0
      %1721 = vmatpush1.bf16.msra.mxu0 0
      %1722 = vmatprep.subr.bf16.mxu0 0
      %1723 = vmatpush1.bf16.msra.mxu0 0
      %1724 = vmatprep.subr.bf16.mxu0 0
      %1725 = vmatpush1.bf16.msra.mxu0 0
      %1726 = vmatprep.subr.bf16.mxu0 0
      %1727 = vmatpush1.bf16.msra.mxu0 0
      %1728 = vmatprep.subr.bf16.mxu0 0
      %1729 = vmatpush1.bf16.msra.mxu0 0
      %1730 = vmatprep.subr.bf16.mxu0 0
      %1731 = vmatpush1.bf16.msra.mxu0 0
      %1732 = vmatprep.subr.bf16.mxu0 0
      %1733 = vmatpush1.bf16.msra.mxu0 0
      %1734 = vmatprep.subr.bf16.mxu0 0
      %1735 = vmatpush1.bf16.msra.mxu0 0
      %1736 = vmatprep.subr.bf16.mxu0 0
      %1737 = vmatpush1.bf16.msra.mxu0 0
      %1738 = vmatprep.subr.bf16.mxu0 0
      %1739 = vmatpush1.bf16.msra.mxu0 0
      %1740 = vmatprep.subr.bf16.mxu0 0
      %1741 = vmatpush1.bf16.msra.mxu0 0
      %1742 = vmatprep.subr.bf16.mxu0 0
      %1743 = vmatpush1.bf16.msra.mxu0 0
      %1744 = vmatprep.subr.bf16.mxu0 0
      %1745 = vmatpush1.bf16.msra.mxu0 0
      %1746 = vmatprep.mubr.bf16.mxu0 0
      %1747 = vmatmul.mubr.bf16.gmra.mrb[0].mxu0 %v1712
      %v1748 = vpop.f32.mrb[0].mxu0
      %v1749 = vadd.f32 %v1697, %v1748
      %v1750 = vpop.f32.mrb[0].mxu0
      %v1751 = vpop.f32.mrb[0].mxu0
      %v1752 = vpop.f32.mrb[0].mxu0
      %1753 = vdwg.mxu0
      %v1754 = vpack.c.bf16 %v1749, %v1749
      %1756 = vrot.lane.b32.xlu0 %v1754, 96
      %v1757 = vpop.permute.xlu0 %1756
      %v1759 = vsel %vm1033, %v1754, 0
      %v1762 = vsel %vm1033, %v1757, 0
      %1764 = vmatprep.subr.bf16.mxu0 0
      %1765 = vmatpush1.bf16.xpose.msra.mxu0 %v1762
      %1766 = vmatprep.subr.bf16.mxu0 0
      %1767 = vmatpush1.bf16.xpose.msra.mxu0 0
      %1768 = vmatprep.subr.bf16.mxu0 0
      %1769 = vmatpush1.bf16.xpose.msra.mxu0 0
      %1770 = vmatprep.subr.bf16.mxu0 0
      %1771 = vmatpush1.bf16.xpose.msra.mxu0 0
      %1772 = vmatprep.subr.bf16.mxu0 0
      %1773 = vmatpush1.bf16.xpose.msra.mxu0 0
      %1774 = vmatprep.subr.bf16.mxu0 0
      %1775 = vmatpush1.bf16.xpose.msra.mxu0 0
      %1776 = vmatprep.subr.bf16.mxu0 0
      %1777 = vmatpush1.bf16.xpose.msra.mxu0 0
      %1778 = vmatprep.subr.bf16.mxu0 0
      %1779 = vmatpush1.bf16.xpose.msra.mxu0 0
      %1780 = vmatprep.subr.bf16.mxu0 0
      %1781 = vmatpush1.bf16.xpose.msra.mxu0 0
      %1782 = vmatprep.subr.bf16.mxu0 0
      %1783 = vmatpush1.bf16.xpose.msra.mxu0 0
      %1784 = vmatprep.subr.bf16.mxu0 0
      %1785 = vmatpush1.bf16.xpose.msra.mxu0 0
      %1786 = vmatprep.subr.bf16.mxu0 0
      %1787 = vmatpush1.bf16.xpose.msra.mxu0 0
      %1788 = vmatprep.subr.bf16.mxu0 0
      %1789 = vmatpush1.bf16.xpose.msra.mxu0 0
      %1790 = vmatprep.subr.bf16.mxu0 0
      %1791 = vmatpush1.bf16.xpose.msra.mxu0 0
      %1792 = vmatprep.subr.bf16.mxu0 0
      %1793 = vmatpush1.bf16.xpose.msra.mxu0 0
      %1794 = vmatprep.subr.bf16.mxu0 0
      %1795 = vmatpush1.bf16.xpose.msra.mxu0 0
      %1796 = vmatprep.mubr.bf16.mxu0 0
      %1797 = vmatmul.mubr.bf16.gmra.mrb[0].mxu0 %v1759
      %v1798 = vpop.f32.mrb[0].mxu0
      %v1799 = vadd.f32 0.0, %v1798
      %v1800 = vpop.f32.mrb[0].mxu0
      %v1801 = vpop.f32.mrb[0].mxu0
      %v1802 = vpop.f32.mrb[0].mxu0
      %1803 = vdwg.mxu0
      %v1804 = vsel %vm1081, %v1799, -10000.0
      %v1805 = vsel %vm1083, %v1804, -inf
      %1806 = vmax.xlane.f32.xlu0 %v1805
      %v1807 = vpop.xlane.xlu0 %1806
      %v1808 = vsub.f32 %v1804, %v1807
      %v1809 = vmul.f32 %v1808, 1.442695
      %v1810 = vpow.pop %v1809
      %v1811 = vsel %vm1083, %v1810, 0.0
      %1812 = vadd.xlane.f32.xlu0 %v1811
      %v1813 = vpop.xlane.xlu0 %1812
      %v1814 = vrcp.pop %v1813
      %v1815 = vmul.f32 %v1810, %v1814
      %v1816 = vpack.c.bf16 %v1815, %v1815
      %1817 = vrot.lane.b32.xlu0 %v1754, 64
      %v1818 = vpop.permute.xlu0 %1817
      %v1820 = vsel %vm1083, %v1816, 0
      %v1823 = vsel %vm1101, %v1818, 0
      %1825 = vmatprep.subr.bf16.mxu0 0
      %1826 = vmatpush1.bf16.msra.mxu0 %v1823
      %1827 = vmatprep.subr.bf16.mxu0 0
      %1828 = vmatpush1.bf16.msra.mxu0 0
      %1829 = vmatprep.subr.bf16.mxu0 0
      %1830 = vmatpush1.bf16.msra.mxu0 0
      %1831 = vmatprep.subr.bf16.mxu0 0
      %1832 = vmatpush1.bf16.msra.mxu0 0
      %1833 = vmatprep.subr.bf16.mxu0 0
      %1834 = vmatpush1.bf16.msra.mxu0 0
      %1835 = vmatprep.subr.bf16.mxu0 0
      %1836 = vmatpush1.bf16.msra.mxu0 0
      %1837 = vmatprep.subr.bf16.mxu0 0
      %1838 = vmatpush1.bf16.msra.mxu0 0
      %1839 = vmatprep.subr.bf16.mxu0 0
      %1840 = vmatpush1.bf16.msra.mxu0 0
      %1841 = vmatprep.subr.bf16.mxu0 0
      %1842 = vmatpush1.bf16.msra.mxu0 0
      %1843 = vmatprep.subr.bf16.mxu0 0
      %1844 = vmatpush1.bf16.msra.mxu0 0
      %1845 = vmatprep.subr.bf16.mxu0 0
      %1846 = vmatpush1.bf16.msra.mxu0 0
      %1847 = vmatprep.subr.bf16.mxu0 0
      %1848 = vmatpush1.bf16.msra.mxu0 0
      %1849 = vmatprep.subr.bf16.mxu0 0
      %1850 = vmatpush1.bf16.msra.mxu0 0
      %1851 = vmatprep.subr.bf16.mxu0 0
      %1852 = vmatpush1.bf16.msra.mxu0 0
      %1853 = vmatprep.subr.bf16.mxu0 0
      %1854 = vmatpush1.bf16.msra.mxu0 0
      %1855 = vmatprep.subr.bf16.mxu0 0
      %1856 = vmatpush1.bf16.msra.mxu0 0
      %1857 = vmatprep.mubr.bf16.mxu0 0
      %1858 = vmatmul.mubr.bf16.gmra.mrb[0].mxu0 %v1820
      %v1859 = vpop.f32.mrb[0].mxu0
      %v1860 = vadd.f32 0.0, %v1859
      %v1861 = vpop.f32.mrb[0].mxu0
      %v1862 = vpop.f32.mrb[0].mxu0
      %v1863 = vpop.f32.mrb[0].mxu0
      %1864 = vdwg.mxu0
      %v1865 = vpack.c.bf16 %v1860, %v1860
      %1866 = vrot.lane.b32.xlu0 %v1754, 112
      %v1867 = vpop.permute.xlu0 %1866
      %1868 = vrot.lane.b32.xlu0 %v1754, 80
      %v1869 = vpop.permute.xlu0 %1868
      %v1871 = vsel %vm1033, %v1867, 0
      %v1874 = vsel %vm1033, %v1869, 0
      %1876 = vmatprep.subr.bf16.mxu0 0
      %1877 = vmatpush1.bf16.xpose.msra.mxu0 %v1874
      %1878 = vmatprep.subr.bf16.mxu0 0
      %1879 = vmatpush1.bf16.xpose.msra.mxu0 0
      %1880 = vmatprep.subr.bf16.mxu0 0
      %1881 = vmatpush1.bf16.xpose.msra.mxu0 0
      %1882 = vmatprep.subr.bf16.mxu0 0
      %1883 = vmatpush1.bf16.xpose.msra.mxu0 0
      %1884 = vmatprep.subr.bf16.mxu0 0
      %1885 = vmatpush1.bf16.xpose.msra.mxu0 0
      %1886 = vmatprep.subr.bf16.mxu0 0
      %1887 = vmatpush1.bf16.xpose.msra.mxu0 0
      %1888 = vmatprep.subr.bf16.mxu0 0
      %1889 = vmatpush1.bf16.xpose.msra.mxu0 0
      %1890 = vmatprep.subr.bf16.mxu0 0
      %1891 = vmatpush1.bf16.xpose.msra.mxu0 0
      %1892 = vmatprep.subr.bf16.mxu0 0
      %1893 = vmatpush1.bf16.xpose.msra.mxu0 0
      %1894 = vmatprep.subr.bf16.mxu0 0
      %1895 = vmatpush1.bf16.xpose.msra.mxu0 0
      %1896 = vmatprep.subr.bf16.mxu0 0
      %1897 = vmatpush1.bf16.xpose.msra.mxu0 0
      %1898 = vmatprep.subr.bf16.mxu0 0
      %1899 = vmatpush1.bf16.xpose.msra.mxu0 0
      %1900 = vmatprep.subr.bf16.mxu0 0
      %1901 = vmatpush1.bf16.xpose.msra.mxu0 0
      %1902 = vmatprep.subr.bf16.mxu0 0
      %1903 = vmatpush1.bf16.xpose.msra.mxu0 0
      %1904 = vmatprep.subr.bf16.mxu0 0
      %1905 = vmatpush1.bf16.xpose.msra.mxu0 0
      %1906 = vmatprep.subr.bf16.mxu0 0
      %1907 = vmatpush1.bf16.xpose.msra.mxu0 0
      %1908 = vmatprep.mubr.bf16.mxu0 0
      %1909 = vmatmul.mubr.bf16.gmra.mrb[0].mxu0 %v1871
      %v1910 = vpop.f32.mrb[0].mxu0
      %v1911 = vadd.f32 0.0, %v1910
      %v1912 = vpop.f32.mrb[0].mxu0
      %v1913 = vpop.f32.mrb[0].mxu0
      %v1914 = vpop.f32.mrb[0].mxu0
      %1915 = vdwg.mxu0
      %v1916 = vsel %vm1081, %v1911, -10000.0
      %v1917 = vsel %vm1083, %v1916, -inf
      %1918 = vmax.xlane.f32.xlu0 %v1917
      %v1919 = vpop.xlane.xlu0 %1918
      %v1920 = vsub.f32 %v1916, %v1919
      %v1921 = vmul.f32 %v1920, 1.442695
      %v1922 = vpow.pop %v1921
      %v1923 = vsel %vm1083, %v1922, 0.0
      %1924 = vadd.xlane.f32.xlu0 %v1923
      %v1925 = vpop.xlane.xlu0 %1924
      %v1926 = vrcp.pop %v1925
      %v1927 = vmul.f32 %v1922, %v1926
      %v1928 = vpack.c.bf16 %v1927, %v1927
      %1929 = vrot.lane.b32.xlu0 %v1754, 48
      %v1930 = vpop.permute.xlu0 %1929
      %v1932 = vsel %vm1083, %v1928, 0
      %v1935 = vsel %vm1101, %v1930, 0
      %1937 = vmatprep.subr.bf16.mxu0 0
      %1938 = vmatpush1.bf16.msra.mxu0 %v1935
      %1939 = vmatprep.subr.bf16.mxu0 0
      %1940 = vmatpush1.bf16.msra.mxu0 0
      %1941 = vmatprep.subr.bf16.mxu0 0
      %1942 = vmatpush1.bf16.msra.mxu0 0
      %1943 = vmatprep.subr.bf16.mxu0 0
      %1944 = vmatpush1.bf16.msra.mxu0 0
      %1945 = vmatprep.subr.bf16.mxu0 0
      %1946 = vmatpush1.bf16.msra.mxu0 0
      %1947 = vmatprep.subr.bf16.mxu0 0
      %1948 = vmatpush1.bf16.msra.mxu0 0
      %1949 = vmatprep.subr.bf16.mxu0 0
      %1950 = vmatpush1.bf16.msra.mxu0 0
      %1951 = vmatprep.subr.bf16.mxu0 0
      %1952 = vmatpush1.bf16.msra.mxu0 0
      %1953 = vmatprep.subr.bf16.mxu0 0
      %1954 = vmatpush1.bf16.msra.mxu0 0
      %1955 = vmatprep.subr.bf16.mxu0 0
      %1956 = vmatpush1.bf16.msra.mxu0 0
      %1957 = vmatprep.subr.bf16.mxu0 0
      %1958 = vmatpush1.bf16.msra.mxu0 0
      %1959 = vmatprep.subr.bf16.mxu0 0
      %1960 = vmatpush1.bf16.msra.mxu0 0
      %1961 = vmatprep.subr.bf16.mxu0 0
      %1962 = vmatpush1.bf16.msra.mxu0 0
      %1963 = vmatprep.subr.bf16.mxu0 0
      %1964 = vmatpush1.bf16.msra.mxu0 0
      %1965 = vmatprep.subr.bf16.mxu0 0
      %1966 = vmatpush1.bf16.msra.mxu0 0
      %1967 = vmatprep.subr.bf16.mxu0 0
      %1968 = vmatpush1.bf16.msra.mxu0 0
      %1969 = vmatprep.mubr.bf16.mxu0 0
      %1970 = vmatmul.mubr.bf16.gmra.mrb[0].mxu0 %v1932
      %v1971 = vpop.f32.mrb[0].mxu0
      %v1972 = vadd.f32 0.0, %v1971
      %v1973 = vpop.f32.mrb[0].mxu0
      %v1974 = vpop.f32.mrb[0].mxu0
      %v1975 = vpop.f32.mrb[0].mxu0
      %1976 = vdwg.mxu0
      %v1977 = vpack.c.bf16 %v1972, %v1972
      %1979 = vrot.lane.b32.xlu0 %v1977, 16
      %v1980 = vpop.permute.xlu0 %1979
      %v1983 = vsel %vm1033, %v1865, %v1980
      %s1984 = scalar_lea.vmem %s13, 16
      %v1985 = vld [vmem:[%s1984] sm:$0xf]
      %v1986 = vld [vmem:[%s1984 + $0x4] sm:$0xf]
      %v1987 = vld [vmem:[%s1984 + $0x8] sm:$0xf]
      %v1988 = vld [vmem:[%s1984 + $0xc] sm:$0xf]
      %s1989 = scalar_lea.vmem %s15, 1
      %v1990 = vld [vmem:[%s1989] sm:$0x1]
      %v1992 = vlaneseq
      %v1993 = vshrl.u32 %v1992, 7
      %v1994 = vsub.s32 0, %v1993
      %v1995 = vrot.slane %v1990, %v1994
      %v2001 = vunpack.c.l.b16 %v1985
      %v2002 = vunpack.c.l.b16 %v1986
      %v2003 = vunpack.c.l.b16 %v1987
      %v2004 = vunpack.c.l.b16 %v1988
      %v2005 = vpack.c.b16 %v2002, %v2001
      %v2006 = vpack.c.b16 %v2004, %v2003
      %v2009 = vsel %vm985, %v1983, 0
      %2011 = vmatprep.subr.bf16.mxu0 0
      %2012 = vmatpush1.bf16.msra.mxu0 %v2005
      %2013 = vmatprep.subr.bf16.mxu0 0
      %2014 = vmatpush1.bf16.msra.mxu0 %v2006
      %2015 = vmatprep.subr.bf16.mxu0 0
      %2016 = vmatpush1.bf16.msra.mxu0 0
      %2017 = vmatprep.subr.bf16.mxu0 0
      %2018 = vmatpush1.bf16.msra.mxu0 0
      %2019 = vmatprep.subr.bf16.mxu0 0
      %2020 = vmatpush1.bf16.msra.mxu0 0
      %2021 = vmatprep.subr.bf16.mxu0 0
      %2022 = vmatpush1.bf16.msra.mxu0 0
      %2023 = vmatprep.subr.bf16.mxu0 0
      %2024 = vmatpush1.bf16.msra.mxu0 0
      %2025 = vmatprep.subr.bf16.mxu0 0
      %2026 = vmatpush1.bf16.msra.mxu0 0
      %2027 = vmatprep.subr.bf16.mxu0 0
      %2028 = vmatpush1.bf16.msra.mxu0 0
      %2029 = vmatprep.subr.bf16.mxu0 0
      %2030 = vmatpush1.bf16.msra.mxu0 0
      %2031 = vmatprep.subr.bf16.mxu0 0
      %2032 = vmatpush1.bf16.msra.mxu0 0
      %2033 = vmatprep.subr.bf16.mxu0 0
      %2034 = vmatpush1.bf16.msra.mxu0 0
      %2035 = vmatprep.subr.bf16.mxu0 0
      %2036 = vmatpush1.bf16.msra.mxu0 0
      %2037 = vmatprep.subr.bf16.mxu0 0
      %2038 = vmatpush1.bf16.msra.mxu0 0
      %2039 = vmatprep.subr.bf16.mxu0 0
      %2040 = vmatpush1.bf16.msra.mxu0 0
      %2041 = vmatprep.subr.bf16.mxu0 0
      %2042 = vmatpush1.bf16.msra.mxu0 0
      %2043 = vmatprep.mubr.bf16.mxu0 0
      %2044 = vmatmul.mubr.bf16.gmra.mrb[0].mxu0 %v2009
      %v2045 = vpop.f32.mrb[0].mxu0
      %v2046 = vadd.f32 %v1995, %v2045
      %v2047 = vpop.f32.mrb[0].mxu0
      %v2048 = vpop.f32.mrb[0].mxu0
      %v2049 = vpop.f32.mrb[0].mxu0
      %2050 = vdwg.mxu0
      %v2051 = vadd.f32 %v1684, %v2046
      %s2052 = scalar_lea.vmem %s17, 1
      %v2053 = vld [vmem:[%s2052] sm:$0x1]
      %s2054 = scalar_lea.vmem %s19, 1
      %v2055 = vld [vmem:[%s2054] sm:$0x1]
      %v2056 = vsel %vm985, %v2051, 0.0
      %2057 = vadd.xlane.f32.xlu0 %v2056
      %v2058 = vpop.xlane.xlu0 %2057
      %v2059 = vmul.f32 %v2058, %v1335
      %v2060 = vsub.f32 %v2051, %v2059
      %v2061 = vmul.f32 %v2060, %v2060
      %v2062 = vsel %vm985, %v2061, 0.0
      %2063 = vadd.xlane.f32.xlu0 %v2062
      %v2064 = vpop.xlane.xlu0 %2063
      %v2065 = vmul.f32 %v2064, %v1335
      %v2066 = vadd.f32 %v2065, 1e-05
      %v2067 = vrsqrt.pop %v2066
      %v2068 = vmul.f32 %v2060, %v2067
      %v2070 = vlaneseq
      %v2071 = vshrl.u32 %v2070, 7
      %v2072 = vsub.s32 0, %v2071
      %v2073 = vrot.slane %v2053, %v2072
      %v2075 = vmul.f32 %v2068, %v2073
      %v2077 = vlaneseq
      %v2078 = vshrl.u32 %v2077, 7
      %v2079 = vsub.s32 0, %v2078
      %v2080 = vrot.slane %v2055, %v2079
      %v2082 = vadd.f32 %v2075, %v2080
      %v2083 = vmul.f32 %v2082, %v956
      %s2084 = scalar_lea.vmem %s21, 48
      %v2085 = vld [vmem:[%s2084] sm:$0xf]
      %v2086 = vld [vmem:[%s2084 + $0x4] sm:$0xf]
      %v2087 = vld [vmem:[%s2084 + $0x8] sm:$0xf]
      %v2088 = vld [vmem:[%s2084 + $0xc] sm:$0xf]
      %v2089 = vld [vmem:[%s2084 + $0x10] sm:$0xf]
      %v2090 = vld [vmem:[%s2084 + $0x14] sm:$0xf]
      %v2091 = vld [vmem:[%s2084 + $0x18] sm:$0xf]
      %v2092 = vld [vmem:[%s2084 + $0x1c] sm:$0xf]
      %v2093 = vld [vmem:[%s2084 + $0x20] sm:$0xf]
      %v2094 = vld [vmem:[%s2084 + $0x24] sm:$0xf]
      %v2095 = vld [vmem:[%s2084 + $0x28] sm:$0xf]
      %v2096 = vld [vmem:[%s2084 + $0x2c] sm:$0xf]
      %s2097 = scalar_lea.vmem %s23, 1
      %v2098 = vld [vmem:[%s2097] sm:$0x1]
      %v2100 = vrot.slane %v2083, 7
      %v2102 = vsel %vm1377, 0.0, %v2100
      %v2103 = vsel %vm1377, %v2100, 0.0
      %v2106 = vrot.slane %v2102, 1
      %v2107 = vrot.slane %v2103, 1
      %v2108 = vsel %vm1382, %v2106, %v2107
      %2109 = vrot.lane.b32.xlu0 %v2108, 32
      %v2110 = vpop.permute.xlu0 %2109
      %v2112 = vrot.slane %v2102, 2
      %v2113 = vrot.slane %v2103, 2
      %v2114 = vsel %vm1389, %v2112, %v2113
      %2115 = vrot.lane.b32.xlu0 %v2114, 64
      %v2116 = vpop.permute.xlu0 %2115
      %v2118 = vsel %vm985, %v2102, %v2110
      %v2119 = vsel %vm1397, %v2118, %v2116
      %v2120 = vpack.c.bf16 %v2119, %v2119
      %v2122 = vlaneseq
      %v2123 = vshrl.u32 %v2122, 7
      %v2124 = vsub.s32 0, %v2123
      %v2125 = vrot.slane %v2098, %v2124
      %v2139 = vunpack.c.l.b16 %v2085
      %v2140 = vunpack.c.l.b16 %v2086
      %v2141 = vunpack.c.l.b16 %v2087
      %v2142 = vunpack.c.l.b16 %v2088
      %v2143 = vunpack.c.l.b16 %v2089
      %v2144 = vunpack.c.l.b16 %v2090
      %v2145 = vunpack.c.l.b16 %v2091
      %v2146 = vunpack.c.l.b16 %v2092
      %v2147 = vunpack.c.l.b16 %v2093
      %v2148 = vunpack.c.l.b16 %v2094
      %v2149 = vunpack.c.l.b16 %v2095
      %v2150 = vunpack.c.l.b16 %v2096
      %v2151 = vpack.c.b16 %v2140, %v2139
      %v2152 = vpack.c.b16 %v2142, %v2141
      %v2153 = vpack.c.b16 %v2144, %v2143
      %v2154 = vpack.c.b16 %v2146, %v2145
      %v2155 = vpack.c.b16 %v2148, %v2147
      %v2156 = vpack.c.b16 %v2150, %v2149
      %v2164 = vsel %vm1442, %v2120, 0
      %2166 = vmatprep.subr.bf16.mxu0 0
      %2167 = vmatpush1.bf16.msra.mxu0 %v2151
      %2168 = vmatprep.subr.bf16.mxu0 0
      %2169 = vmatpush1.bf16.msra.mxu0 %v2152
      %2170 = vmatprep.subr.bf16.mxu0 0
      %2171 = vmatpush1.bf16.msra.mxu0 %v2153
      %2172 = vmatprep.subr.bf16.mxu0 0
      %2173 = vmatpush1.bf16.msra.mxu0 %v2154
      %2174 = vmatprep.subr.bf16.mxu0 0
      %2175 = vmatpush1.bf16.msra.mxu0 %v2155
      %2176 = vmatprep.subr.bf16.mxu0 0
      %2177 = vmatpush1.bf16.msra.mxu0 %v2156
      %2178 = vmatprep.subr.bf16.mxu0 0
      %2179 = vmatpush1.bf16.msra.mxu0 0
      %2180 = vmatprep.subr.bf16.mxu0 0
      %2181 = vmatpush1.bf16.msra.mxu0 0
      %2182 = vmatprep.subr.bf16.mxu0 0
      %2183 = vmatpush1.bf16.msra.mxu0 0
      %2184 = vmatprep.subr.bf16.mxu0 0
      %2185 = vmatpush1.bf16.msra.mxu0 0
      %2186 = vmatprep.subr.bf16.mxu0 0
      %2187 = vmatpush1.bf16.msra.mxu0 0
      %2188 = vmatprep.subr.bf16.mxu0 0
      %2189 = vmatpush1.bf16.msra.mxu0 0
      %2190 = vmatprep.subr.bf16.mxu0 0
      %2191 = vmatpush1.bf16.msra.mxu0 0
      %2192 = vmatprep.subr.bf16.mxu0 0
      %2193 = vmatpush1.bf16.msra.mxu0 0
      %2194 = vmatprep.subr.bf16.mxu0 0
      %2195 = vmatpush1.bf16.msra.mxu0 0
      %2196 = vmatprep.subr.bf16.mxu0 0
      %2197 = vmatpush1.bf16.msra.mxu0 0
      %2198 = vmatprep.mubr.bf16.mxu0 0
      %2199 = vmatmul.mubr.bf16.gmra.mrb[0].mxu0 %v2164
      %v2200 = vpop.f32.mrb[0].mxu0
      %v2201 = vadd.f32 %v2125, %v2200
      %v2202 = vpop.f32.mrb[0].mxu0
      %v2203 = vpop.f32.mrb[0].mxu0
      %v2204 = vpop.f32.mrb[0].mxu0
      %2205 = vdwg.mxu0
      %v2206 = vmax.f32 %v2201, 0.0
      %v2207 = vmul.f32 %v2206, %v956
      %s2208 = scalar_lea.vmem %s25, 96
      %v2209 = vld [vmem:[%s2208] sm:$0xf]
      %v2210 = vld [vmem:[%s2208 + $0x4] sm:$0xf]
      %v2211 = vld [vmem:[%s2208 + $0x8] sm:$0xf]
      %v2212 = vld [vmem:[%s2208 + $0xc] sm:$0xf]
      %v2213 = vld [vmem:[%s2208 + $0x10] sm:$0xf]
      %v2214 = vld [vmem:[%s2208 + $0x14] sm:$0xf]
      %v2215 = vld [vmem:[%s2208 + $0x18] sm:$0xf]
      %v2216 = vld [vmem:[%s2208 + $0x1c] sm:$0xf]
      %v2217 = vld [vmem:[%s2208 + $0x20] sm:$0xf]
      %v2218 = vld [vmem:[%s2208 + $0x24] sm:$0xf]
      %v2219 = vld [vmem:[%s2208 + $0x28] sm:$0xf]
      %v2220 = vld [vmem:[%s2208 + $0x2c] sm:$0xf]
      %v2221 = vld [vmem:[%s2208 + $0x30] sm:$0xf]
      %v2222 = vld [vmem:[%s2208 + $0x34] sm:$0xf]
      %v2223 = vld [vmem:[%s2208 + $0x38] sm:$0xf]
      %v2224 = vld [vmem:[%s2208 + $0x3c] sm:$0xf]
      %v2225 = vld [vmem:[%s2208 + $0x40] sm:$0xf]
      %v2226 = vld [vmem:[%s2208 + $0x44] sm:$0xf]
      %v2227 = vld [vmem:[%s2208 + $0x48] sm:$0xf]
      %v2228 = vld [vmem:[%s2208 + $0x4c] sm:$0xf]
      %v2229 = vld [vmem:[%s2208 + $0x50] sm:$0xf]
      %v2230 = vld [vmem:[%s2208 + $0x54] sm:$0xf]
      %v2231 = vld [vmem:[%s2208 + $0x58] sm:$0xf]
      %v2232 = vld [vmem:[%s2208 + $0x5c] sm:$0xf]
      %s2233 = scalar_lea.vmem %s27, 1
      %v2234 = vld [vmem:[%s2233] sm:$0x1]
      %v2236 = vrot.slane %v2207, 7
      %v2238 = vsel %vm1377, 0.0, %v2236
      %v2239 = vsel %vm1377, %v2236, 0.0
      %v2242 = vrot.slane %v2238, 1
      %v2243 = vrot.slane %v2239, 1
      %v2244 = vsel %vm1382, %v2242, %v2243
      %2245 = vrot.lane.b32.xlu0 %v2244, 64
      %v2246 = vpop.permute.xlu0 %2245
      %v2248 = vrot.slane %v2238, 2
      %v2249 = vrot.slane %v2239, 2
      %v2250 = vsel %vm1389, %v2248, %v2249
      %v2252 = vsel %vm1397, %v2238, %v2246
      %v2253 = vpack.c.bf16 %v2252, %v2252
      %v2254 = vpack.c.bf16 %v2250, %v2250
      %v2256 = vlaneseq
      %v2257 = vshrl.u32 %v2256, 7
      %v2258 = vsub.s32 0, %v2257
      %v2259 = vrot.slane %v2234, %v2258
      %v2285 = vunpack.c.l.b16 %v2209
      %v2286 = vunpack.c.l.b16 %v2210
      %v2287 = vunpack.c.l.b16 %v2211
      %v2288 = vunpack.c.l.b16 %v2212
      %v2289 = vunpack.c.l.b16 %v2213
      %v2290 = vunpack.c.l.b16 %v2214
      %v2291 = vunpack.c.l.b16 %v2215
      %v2292 = vunpack.c.l.b16 %v2216
      %v2293 = vunpack.c.l.b16 %v2217
      %v2294 = vunpack.c.l.b16 %v2218
      %v2295 = vunpack.c.l.b16 %v2219
      %v2296 = vunpack.c.l.b16 %v2220
      %v2297 = vunpack.c.l.b16 %v2221
      %v2298 = vunpack.c.l.b16 %v2222
      %v2299 = vunpack.c.l.b16 %v2223
      %v2300 = vunpack.c.l.b16 %v2224
      %v2301 = vunpack.c.l.b16 %v2225
      %v2302 = vunpack.c.l.b16 %v2226
      %v2303 = vunpack.c.l.b16 %v2227
      %v2304 = vunpack.c.l.b16 %v2228
      %v2305 = vunpack.c.l.b16 %v2229
      %v2306 = vunpack.c.l.b16 %v2230
      %v2307 = vunpack.c.l.b16 %v2231
      %v2308 = vunpack.c.l.b16 %v2232
      %v2309 = vpack.c.b16 %v2286, %v2285
      %v2310 = vpack.c.b16 %v2288, %v2287
      %v2311 = vpack.c.b16 %v2290, %v2289
      %v2312 = vpack.c.b16 %v2292, %v2291
      %v2313 = vpack.c.b16 %v2294, %v2293
      %v2314 = vpack.c.b16 %v2296, %v2295
      %v2315 = vpack.c.b16 %v2298, %v2297
      %v2316 = vpack.c.b16 %v2300, %v2299
      %v2317 = vpack.c.b16 %v2302, %v2301
      %v2318 = vpack.c.b16 %v2304, %v2303
      %v2319 = vpack.c.b16 %v2306, %v2305
      %v2320 = vpack.c.b16 %v2308, %v2307
      %v2334 = vsel %vm1397, %v2254, 0
      %2336 = vmatprep.subr.bf16.mxu0 0
      %2337 = vmatpush1.bf16.msra.mxu0 %v2309
      %2338 = vmatprep.subr.bf16.mxu0 0
      %2339 = vmatpush1.bf16.msra.mxu0 %v2310
      %2340 = vmatprep.subr.bf16.mxu0 0
      %2341 = vmatpush1.bf16.msra.mxu0 %v2311
      %2342 = vmatprep.subr.bf16.mxu0 0
      %2343 = vmatpush1.bf16.msra.mxu0 %v2312
      %2344 = vmatprep.subr.bf16.mxu0 0
      %2345 = vmatpush1.bf16.msra.mxu0 %v2313
      %2346 = vmatprep.subr.bf16.mxu0 0
      %2347 = vmatpush1.bf16.msra.mxu0 %v2314
      %2348 = vmatprep.subr.bf16.mxu0 0
      %2349 = vmatpush1.bf16.msra.mxu0 %v2315
      %2350 = vmatprep.subr.bf16.mxu0 0
      %2351 = vmatpush1.bf16.msra.mxu0 %v2316
      %2352 = vmatprep.subr.bf16.mxu0 0
      %2353 = vmatpush1.bf16.msra.mxu0 %v2317
      %2354 = vmatprep.subr.bf16.mxu0 0
      %2355 = vmatpush1.bf16.msra.mxu0 %v2318
      %2356 = vmatprep.subr.bf16.mxu0 0
      %2357 = vmatpush1.bf16.msra.mxu0 %v2319
      %2358 = vmatprep.subr.bf16.mxu0 0
      %2359 = vmatpush1.bf16.msra.mxu0 %v2320
      %2360 = vmatprep.subr.bf16.mxu0 0
      %2361 = vmatpush1.bf16.msra.mxu0 0
      %2362 = vmatprep.subr.bf16.mxu0 0
      %2363 = vmatpush1.bf16.msra.mxu0 0
      %2364 = vmatprep.subr.bf16.mxu0 0
      %2365 = vmatpush1.bf16.msra.mxu0 0
      %2366 = vmatprep.subr.bf16.mxu0 0
      %2367 = vmatpush1.bf16.msra.mxu0 0
      %2368 = vmatprep.mubr.bf16.mxu0 %v2334
      %2369 = vmatmul.mubr.bf16.gmra.mrb[0].mxu0 %v2253
      %v2370 = vpop.f32.mrb[0].mxu0
      %v2371 = vadd.f32 %v2259, %v2370
      %v2372 = vpop.f32.mrb[0].mxu0
      %v2373 = vpop.f32.mrb[0].mxu0
      %v2374 = vpop.f32.mrb[0].mxu0
      %2375 = vdwg.mxu0
      %v2376 = vmul.f32 %v2371, %v956
      %v2377 = vadd.f32 %v2082, %v2376
      %s2378 = scalar_lea.vmem %s29, 1
      %v2379 = vld [vmem:[%s2378] sm:$0x1]
      %s2380 = scalar_lea.vmem %s31, 1
      %v2381 = vld [vmem:[%s2380] sm:$0x1]
      %v2382 = vsel %vm985, %v2377, 0.0
      %2383 = vadd.xlane.f32.xlu0 %v2382
      %v2384 = vpop.xlane.xlu0 %2383
      %v2385 = vmul.f32 %v2384, %v1335
      %v2386 = vsub.f32 %v2377, %v2385
      %v2387 = vmul.f32 %v2386, %v2386
      %v2388 = vsel %vm985, %v2387, 0.0
      %2389 = vadd.xlane.f32.xlu0 %v2388
      %v2390 = vpop.xlane.xlu0 %2389
      %v2391 = vmul.f32 %v2390, %v1335
      %v2392 = vadd.f32 %v2391, 1e-05
      %v2393 = vrsqrt.pop %v2392
      %v2394 = vmul.f32 %v2386, %v2393
      %v2396 = vlaneseq
      %v2397 = vshrl.u32 %v2396, 7
      %v2398 = vsub.s32 0, %v2397
      %v2399 = vrot.slane %v2379, %v2398
      %v2401 = vmul.f32 %v2394, %v2399
      %v2403 = vlaneseq
      %v2404 = vshrl.u32 %v2403, 7
      %v2405 = vsub.s32 0, %v2404
      %v2406 = vrot.slane %v2381, %v2405
      %v2408 = vadd.f32 %v2401, %v2406
      %v2409 = vmul.f32 %v2408, %v956
      %v2410 = vld [vmem:[%s936] sm:$0xff]
      %v2411 = vld [vmem:[%s936 + $0x8] sm:$0xf]
      %v2412 = vpack.c.bf16 %v2411, %v2410
      %v2413 = vpack.c.bf16 %v2409, %v2409
      %v2415 = vsel %vm1083, %v2412, 0
      %v2418 = vsel %vm1101, %v2413, 0
      %2420 = vmatprep.subr.bf16.mxu0 0
      %2421 = vmatpush1.bf16.msra.mxu0 %v2418
      %2422 = vmatprep.subr.bf16.mxu0 0
      %2423 = vmatpush1.bf16.msra.mxu0 0
      %2424 = vmatprep.subr.bf16.mxu0 0
      %2425 = vmatpush1.bf16.msra.mxu0 0
      %2426 = vmatprep.subr.bf16.mxu0 0
      %2427 = vmatpush1.bf16.msra.mxu0 0
      %2428 = vmatprep.subr.bf16.mxu0 0
      %2429 = vmatpush1.bf16.msra.mxu0 0
      %2430 = vmatprep.subr.bf16.mxu0 0
      %2431 = vmatpush1.bf16.msra.mxu0 0
      %2432 = vmatprep.subr.bf16.mxu0 0
      %2433 = vmatpush1.bf16.msra.mxu0 0
      %2434 = vmatprep.subr.bf16.mxu0 0
      %2435 = vmatpush1.bf16.msra.mxu0 0
      %2436 = vmatprep.subr.bf16.mxu0 0
      %2437 = vmatpush1.bf16.msra.mxu0 0
      %2438 = vmatprep.subr.bf16.mxu0 0
      %2439 = vmatpush1.bf16.msra.mxu0 0
      %2440 = vmatprep.subr.bf16.mxu0 0
      %2441 = vmatpush1.bf16.msra.mxu0 0
      %2442 = vmatprep.subr.bf16.mxu0 0
      %2443 = vmatpush1.bf16.msra.mxu0 0
      %2444 = vmatprep.subr.bf16.mxu0 0
      %2445 = vmatpush1.bf16.msra.mxu0 0
      %2446 = vmatprep.subr.bf16.mxu0 0
      %2447 = vmatpush1.bf16.msra.mxu0 0
      %2448 = vmatprep.subr.bf16.mxu0 0
      %2449 = vmatpush1.bf16.msra.mxu0 0
      %2450 = vmatprep.subr.bf16.mxu0 0
      %2451 = vmatpush1.bf16.msra.mxu0 0
      %2452 = vmatprep.mubr.bf16.mxu0 0
      %2453 = vmatmul.mubr.bf16.gmra.mrb[0].mxu0 %v2415
      %v2454 = vpop.f32.mrb[0].mxu0
      %v2455 = vadd.f32 0.0, %v2454
      %v2456 = vpop.f32.mrb[0].mxu0
      %v2457 = vpop.f32.mrb[0].mxu0
      %v2458 = vadd.f32 0.0, %v2457
      %v2459 = vpop.f32.mrb[0].mxu0
      %2460 = vdwg.mxu0
      %v2461 = vadd.s32 %v952, 8
      %v2462 = vstv %s949
      %vm2463 = vcmp.lt.s32.totalorder %v952, %v2462
      %vm2464 = vcmp.lt.s32.totalorder %v2461, %v2462
      %v2465 = vsel %vm2463, 1, 0
      %v2466 = vsel %vm2464, 1, 0
      %v2467 = vcvt.s32.f32 %v2465
      %v2468 = vcvt.s32.f32 %v2466
      %vm2469 = vcmp.lt.s32.totalorder %v958, %v2462
      %v2470 = vmul.f32 %v2455, %v2467
      %v2471 = vmul.f32 %v2458, %v2468
      %v2472 = vpack.c.bf16 %v2471, %v2470
      %v2473 = vld [vmem:[%s33] sm:$0xf]
      %v2474 = vld [vmem:[%s33 + $0x4] sm:$0xf]
      %v2475 = vld [vmem:[%s33 + $0x8] sm:$0xf]
      %v2476 = vld [vmem:[%s33 + $0xc] sm:$0xf]
      %v2477 = vld [vmem:[%s35] sm:$0x1]
      %v2479 = vlaneseq
      %v2480 = vshrl.u32 %v2479, 7
      %v2481 = vsub.s32 0, %v2480
      %v2482 = vrot.slane %v2477, %v2481
      %v2488 = vunpack.c.l.b16 %v2473
      %v2489 = vunpack.c.l.b16 %v2474
      %v2490 = vunpack.c.l.b16 %v2475
      %v2491 = vunpack.c.l.b16 %v2476
      %v2492 = vpack.c.b16 %v2489, %v2488
      %v2493 = vpack.c.b16 %v2491, %v2490
      %v2497 = vsel %vm985, %v2472, 0
      %2499 = vmatprep.subr.bf16.mxu0 0
      %2500 = vmatpush1.bf16.msra.mxu0 %v2492
      %2501 = vmatprep.subr.bf16.mxu0 0
      %2502 = vmatpush1.bf16.msra.mxu0 %v2493
      %2503 = vmatprep.subr.bf16.mxu0 0
      %2504 = vmatpush1.bf16.msra.mxu0 0
      %2505 = vmatprep.subr.bf16.mxu0 0
      %2506 = vmatpush1.bf16.msra.mxu0 0
      %2507 = vmatprep.subr.bf16.mxu0 0
      %2508 = vmatpush1.bf16.msra.mxu0 0
      %2509 = vmatprep.subr.bf16.mxu0 0
      %2510 = vmatpush1.bf16.msra.mxu0 0
      %2511 = vmatprep.subr.bf16.mxu0 0
      %2512 = vmatpush1.bf16.msra.mxu0 0
      %2513 = vmatprep.subr.bf16.mxu0 0
      %2514 = vmatpush1.bf16.msra.mxu0 0
      %2515 = vmatprep.subr.bf16.mxu0 0
      %2516 = vmatpush1.bf16.msra.mxu0 0
      %2517 = vmatprep.subr.bf16.mxu0 0
      %2518 = vmatpush1.bf16.msra.mxu0 0
      %2519 = vmatprep.subr.bf16.mxu0 0
      %2520 = vmatpush1.bf16.msra.mxu0 0
      %2521 = vmatprep.subr.bf16.mxu0 0
      %2522 = vmatpush1.bf16.msra.mxu0 0
      %2523 = vmatprep.subr.bf16.mxu0 0
      %2524 = vmatpush1.bf16.msra.mxu0 0
      %2525 = vmatprep.subr.bf16.mxu0 0
      %2526 = vmatpush1.bf16.msra.mxu0 0
      %2527 = vmatprep.subr.bf16.mxu0 0
      %2528 = vmatpush1.bf16.msra.mxu0 0
      %2529 = vmatprep.subr.bf16.mxu0 0
      %2530 = vmatpush1.bf16.msra.mxu0 0
      %2531 = vmatprep.mubr.bf16.mxu0 0
      %2532 = vmatmul.mubr.bf16.gmra.mrb[0].mxu0 %v2497
      %v2533 = vpop.f32.mrb[0].mxu0
      %v2534 = vadd.f32 %v2482, %v2533
      %v2535 = vpop.f32.mrb[0].mxu0
      %v2536 = vpop.f32.mrb[0].mxu0
      %v2537 = vadd.f32 %v2482, %v2536
      %v2538 = vpop.f32.mrb[0].mxu0
      %2539 = vdwg.mxu0
      %v2540 = vpack.c.bf16 %v2537, %v2534
      %2542 = vrot.lane.b32.xlu0 %v2540, 96
      %v2543 = vpop.permute.xlu0 %2542
      %v2545 = vsel %vm1033, %v2540, 0
      %v2548 = vsel %vm1033, %v2543, 0
      %2550 = vmatprep.subr.bf16.mxu0 0
      %2551 = vmatpush1.bf16.xpose.msra.mxu0 %v2548
      %2552 = vmatprep.subr.bf16.mxu0 0
      %2553 = vmatpush1.bf16.xpose.msra.mxu0 0
      %2554 = vmatprep.subr.bf16.mxu0 0
      %2555 = vmatpush1.bf16.xpose.msra.mxu0 0
      %2556 = vmatprep.subr.bf16.mxu0 0
      %2557 = vmatpush1.bf16.xpose.msra.mxu0 0
      %2558 = vmatprep.subr.bf16.mxu0 0
      %2559 = vmatpush1.bf16.xpose.msra.mxu0 0
      %2560 = vmatprep.subr.bf16.mxu0 0
      %2561 = vmatpush1.bf16.xpose.msra.mxu0 0
      %2562 = vmatprep.subr.bf16.mxu0 0
      %2563 = vmatpush1.bf16.xpose.msra.mxu0 0
      %2564 = vmatprep.subr.bf16.mxu0 0
      %2565 = vmatpush1.bf16.xpose.msra.mxu0 0
      %2566 = vmatprep.subr.bf16.mxu0 0
      %2567 = vmatpush1.bf16.xpose.msra.mxu0 0
      %2568 = vmatprep.subr.bf16.mxu0 0
      %2569 = vmatpush1.bf16.xpose.msra.mxu0 0
      %2570 = vmatprep.subr.bf16.mxu0 0
      %2571 = vmatpush1.bf16.xpose.msra.mxu0 0
      %2572 = vmatprep.subr.bf16.mxu0 0
      %2573 = vmatpush1.bf16.xpose.msra.mxu0 0
      %2574 = vmatprep.subr.bf16.mxu0 0
      %2575 = vmatpush1.bf16.xpose.msra.mxu0 0
      %2576 = vmatprep.subr.bf16.mxu0 0
      %2577 = vmatpush1.bf16.xpose.msra.mxu0 0
      %2578 = vmatprep.subr.bf16.mxu0 0
      %2579 = vmatpush1.bf16.xpose.msra.mxu0 0
      %2580 = vmatprep.subr.bf16.mxu0 0
      %2581 = vmatpush1.bf16.xpose.msra.mxu0 0
      %2582 = vmatprep.mubr.bf16.mxu0 0
      %2583 = vmatmul.mubr.bf16.gmra.mrb[0].mxu0 %v2545
      %v2584 = vpop.f32.mrb[0].mxu0
      %v2585 = vadd.f32 0.0, %v2584
      %v2586 = vpop.f32.mrb[0].mxu0
      %v2587 = vpop.f32.mrb[0].mxu0
      %v2588 = vadd.f32 0.0, %v2587
      %v2589 = vpop.f32.mrb[0].mxu0
      %2590 = vdwg.mxu0
      %v2591 = vsel %vm2469, 1, 0
      %vm2592 = vcmp.eq.s32.totalorder %v2591, 1
      %v2593 = vsel %vm2592, %v2585, -10000.0
      %v2594 = vsel %vm2592, %v2588, -10000.0
      %vm2595 = vcmask 97280
      %v2596 = vsel %vm2595, %v2593, -inf
      %2597 = vmax.xlane.f32.xlu0 %v2596
      %v2598 = vpop.xlane.xlu0 %2597
      %vm2599 = vcmask 93184
      %v2600 = vsel %vm2599, %v2594, -inf
      %2601 = vmax.xlane.f32.xlu0 %v2600
      %v2602 = vpop.xlane.xlu0 %2601
      %v2603 = vsub.f32 %v2593, %v2598
      %v2604 = vsub.f32 %v2594, %v2602
      %v2605 = vmul.f32 %v2603, 1.442695
      %v2606 = vpow.pop %v2605
      %v2607 = vmul.f32 %v2604, 1.442695
      %v2608 = vpow.pop %v2607
      %v2609 = vsel %vm2595, %v2606, 0.0
      %2610 = vadd.xlane.f32.xlu0 %v2609
      %v2611 = vpop.xlane.xlu0 %2610
      %v2612 = vsel %vm2599, %v2608, 0.0
      %2613 = vadd.xlane.f32.xlu0 %v2612
      %v2614 = vpop.xlane.xlu0 %2613
      %v2615 = vrcp.pop %v2611
      %v2616 = vrcp.pop %v2614
      %v2617 = vmul.f32 %v2606, %v2615
      %v2618 = vmul.f32 %v2608, %v2616
      %v2619 = vpack.c.bf16 %v2618, %v2617
      %2620 = vrot.lane.b32.xlu0 %v2540, 64
      %v2621 = vpop.permute.xlu0 %2620
      %v2623 = vsel %vm2595, %v2619, 0
      %v2626 = vsel %vm1389, %v2621, 0
      %2628 = vmatprep.subr.bf16.mxu0 0
      %2629 = vmatpush1.bf16.msra.mxu0 %v2626
      %2630 = vmatprep.subr.bf16.mxu0 0
      %2631 = vmatpush1.bf16.msra.mxu0 0
      %2632 = vmatprep.subr.bf16.mxu0 0
      %2633 = vmatpush1.bf16.msra.mxu0 0
      %2634 = vmatprep.subr.bf16.mxu0 0
      %2635 = vmatpush1.bf16.msra.mxu0 0
      %2636 = vmatprep.subr.bf16.mxu0 0
      %2637 = vmatpush1.bf16.msra.mxu0 0
      %2638 = vmatprep.subr.bf16.mxu0 0
      %2639 = vmatpush1.bf16.msra.mxu0 0
      %2640 = vmatprep.subr.bf16.mxu0 0
      %2641 = vmatpush1.bf16.msra.mxu0 0
      %2642 = vmatprep.subr.bf16.mxu0 0
      %2643 = vmatpush1.bf16.msra.mxu0 0
      %2644 = vmatprep.subr.bf16.mxu0 0
      %2645 = vmatpush1.bf16.msra.mxu0 0
      %2646 = vmatprep.subr.bf16.mxu0 0
      %2647 = vmatpush1.bf16.msra.mxu0 0
      %2648 = vmatprep.subr.bf16.mxu0 0
      %2649 = vmatpush1.bf16.msra.mxu0 0
      %2650 = vmatprep.subr.bf16.mxu0 0
      %2651 = vmatpush1.bf16.msra.mxu0 0
      %2652 = vmatprep.subr.bf16.mxu0 0
      %2653 = vmatpush1.bf16.msra.mxu0 0
      %2654 = vmatprep.subr.bf16.mxu0 0
      %2655 = vmatpush1.bf16.msra.mxu0 0
      %2656 = vmatprep.subr.bf16.mxu0 0
      %2657 = vmatpush1.bf16.msra.mxu0 0
      %2658 = vmatprep.subr.bf16.mxu0 0
      %2659 = vmatpush1.bf16.msra.mxu0 0
      %2660 = vmatprep.mubr.bf16.mxu0 0
      %2661 = vmatmul.mubr.bf16.gmra.mrb[0].mxu0 %v2623
      %v2662 = vpop.f32.mrb[0].mxu0
      %v2663 = vadd.f32 0.0, %v2662
      %v2664 = vpop.f32.mrb[0].mxu0
      %v2665 = vpop.f32.mrb[0].mxu0
      %v2666 = vadd.f32 0.0, %v2665
      %v2667 = vpop.f32.mrb[0].mxu0
      %2668 = vdwg.mxu0
      %v2669 = vpack.c.bf16 %v2666, %v2663
      %2670 = vrot.lane.b32.xlu0 %v2540, 112
      %v2671 = vpop.permute.xlu0 %2670
      %2672 = vrot.lane.b32.xlu0 %v2540, 80
      %v2673 = vpop.permute.xlu0 %2672
      %v2675 = vsel %vm1033, %v2671, 0
      %v2678 = vsel %vm1033, %v2673, 0
      %2680 = vmatprep.subr.bf16.mxu0 0
      %2681 = vmatpush1.bf16.xpose.msra.mxu0 %v2678
      %2682 = vmatprep.subr.bf16.mxu0 0
      %2683 = vmatpush1.bf16.xpose.msra.mxu0 0
      %2684 = vmatprep.subr.bf16.mxu0 0
      %2685 = vmatpush1.bf16.xpose.msra.mxu0 0
      %2686 = vmatprep.subr.bf16.mxu0 0
      %2687 = vmatpush1.bf16.xpose.msra.mxu0 0
      %2688 = vmatprep.subr.bf16.mxu0 0
      %2689 = vmatpush1.bf16.xpose.msra.mxu0 0
      %2690 = vmatprep.subr.bf16.mxu0 0
      %2691 = vmatpush1.bf16.xpose.msra.mxu0 0
      %2692 = vmatprep.subr.bf16.mxu0 0
      %2693 = vmatpush1.bf16.xpose.msra.mxu0 0
      %2694 = vmatprep.subr.bf16.mxu0 0
      %2695 = vmatpush1.bf16.xpose.msra.mxu0 0
      %2696 = vmatprep.subr.bf16.mxu0 0
      %2697 = vmatpush1.bf16.xpose.msra.mxu0 0
      %2698 = vmatprep.subr.bf16.mxu0 0
      %2699 = vmatpush1.bf16.xpose.msra.mxu0 0
      %2700 = vmatprep.subr.bf16.mxu0 0
      %2701 = vmatpush1.bf16.xpose.msra.mxu0 0
      %2702 = vmatprep.subr.bf16.mxu0 0
      %2703 = vmatpush1.bf16.xpose.msra.mxu0 0
      %2704 = vmatprep.subr.bf16.mxu0 0
      %2705 = vmatpush1.bf16.xpose.msra.mxu0 0
      %2706 = vmatprep.subr.bf16.mxu0 0
      %2707 = vmatpush1.bf16.xpose.msra.mxu0 0
      %2708 = vmatprep.subr.bf16.mxu0 0
      %2709 = vmatpush1.bf16.xpose.msra.mxu0 0
      %2710 = vmatprep.subr.bf16.mxu0 0
      %2711 = vmatpush1.bf16.xpose.msra.mxu0 0
      %2712 = vmatprep.mubr.bf16.mxu0 0
      %2713 = vmatmul.mubr.bf16.gmra.mrb[0].mxu0 %v2675
      %v2714 = vpop.f32.mrb[0].mxu0
      %v2715 = vadd.f32 0.0, %v2714
      %v2716 = vpop.f32.mrb[0].mxu0
      %v2717 = vpop.f32.mrb[0].mxu0
      %v2718 = vadd.f32 0.0, %v2717
      %v2719 = vpop.f32.mrb[0].mxu0
      %2720 = vdwg.mxu0
      %v2721 = vsel %vm2592, %v2715, -10000.0
      %v2722 = vsel %vm2592, %v2718, -10000.0
      %v2723 = vsel %vm2595, %v2721, -inf
      %2724 = vmax.xlane.f32.xlu0 %v2723
      %v2725 = vpop.xlane.xlu0 %2724
      %v2726 = vsel %vm2599, %v2722, -inf
      %2727 = vmax.xlane.f32.xlu0 %v2726
      %v2728 = vpop.xlane.xlu0 %2727
      %v2729 = vsub.f32 %v2721, %v2725
      %v2730 = vsub.f32 %v2722, %v2728
      %v2731 = vmul.f32 %v2729, 1.442695
      %v2732 = vpow.pop %v2731
      %v2733 = vmul.f32 %v2730, 1.442695
      %v2734 = vpow.pop %v2733
      %v2735 = vsel %vm2595, %v2732, 0.0
      %2736 = vadd.xlane.f32.xlu0 %v2735
      %v2737 = vpop.xlane.xlu0 %2736
      %v2738 = vsel %vm2599, %v2734, 0.0
      %2739 = vadd.xlane.f32.xlu0 %v2738
      %v2740 = vpop.xlane.xlu0 %2739
      %v2741 = vrcp.pop %v2737
      %v2742 = vrcp.pop %v2740
      %v2743 = vmul.f32 %v2732, %v2741
      %v2744 = vmul.f32 %v2734, %v2742
      %v2745 = vpack.c.bf16 %v2744, %v2743
      %2746 = vrot.lane.b32.xlu0 %v2540, 48
      %v2747 = vpop.permute.xlu0 %2746
      %v2749 = vsel %vm2595, %v2745, 0
      %v2752 = vsel %vm1389, %v2747, 0
      %2754 = vmatprep.subr.bf16.mxu0 0
      %2755 = vmatpush1.bf16.msra.mxu0 %v2752
      %2756 = vmatprep.subr.bf16.mxu0 0
      %2757 = vmatpush1.bf16.msra.mxu0 0
      %2758 = vmatprep.subr.bf16.mxu0 0
      %2759 = vmatpush1.bf16.msra.mxu0 0
      %2760 = vmatprep.subr.bf16.mxu0 0
      %2761 = vmatpush1.bf16.msra.mxu0 0
      %2762 = vmatprep.subr.bf16.mxu0 0
      %2763 = vmatpush1.bf16.msra.mxu0 0
      %2764 = vmatprep.subr.bf16.mxu0 0
      %2765 = vmatpush1.bf16.msra.mxu0 0
      %2766 = vmatprep.subr.bf16.mxu0 0
      %2767 = vmatpush1.bf16.msra.mxu0 0
      %2768 = vmatprep.subr.bf16.mxu0 0
      %2769 = vmatpush1.bf16.msra.mxu0 0
      %2770 = vmatprep.subr.bf16.mxu0 0
      %2771 = vmatpush1.bf16.msra.mxu0 0
      %2772 = vmatprep.subr.bf16.mxu0 0
      %2773 = vmatpush1.bf16.msra.mxu0 0
      %2774 = vmatprep.subr.bf16.mxu0 0
      %2775 = vmatpush1.bf16.msra.mxu0 0
      %2776 = vmatprep.subr.bf16.mxu0 0
      %2777 = vmatpush1.bf16.msra.mxu0 0
      %2778 = vmatprep.subr.bf16.mxu0 0
      %2779 = vmatpush1.bf16.msra.mxu0 0
      %2780 = vmatprep.subr.bf16.mxu0 0
      %2781 = vmatpush1.bf16.msra.mxu0 0
      %2782 = vmatprep.subr.bf16.mxu0 0
      %2783 = vmatpush1.bf16.msra.mxu0 0
      %2784 = vmatprep.subr.bf16.mxu0 0
      %2785 = vmatpush1.bf16.msra.mxu0 0
      %2786 = vmatprep.mubr.bf16.mxu0 0
      %2787 = vmatmul.mubr.bf16.gmra.mrb[0].mxu0 %v2749
      %v2788 = vpop.f32.mrb[0].mxu0
      %v2789 = vadd.f32 0.0, %v2788
      %v2790 = vpop.f32.mrb[0].mxu0
      %v2791 = vpop.f32.mrb[0].mxu0
      %v2792 = vadd.f32 0.0, %v2791
      %v2793 = vpop.f32.mrb[0].mxu0
      %2794 = vdwg.mxu0
      %v2795 = vpack.c.bf16 %v2792, %v2789
      %2797 = vrot.lane.b32.xlu0 %v2795, 16
      %v2798 = vpop.permute.xlu0 %2797
      %v2801 = vsel %vm1033, %v2669, %v2798
      %v2802 = vld [vmem:[%s37] sm:$0xf]
      %v2803 = vld [vmem:[%s37 + $0x4] sm:$0xf]
      %v2804 = vld [vmem:[%s37 + $0x8] sm:$0xf]
      %v2805 = vld [vmem:[%s37 + $0xc] sm:$0xf]
      %v2806 = vld [vmem:[%s39] sm:$0x1]
      %v2808 = vlaneseq
      %v2809 = vshrl.u32 %v2808, 7
      %v2810 = vsub.s32 0, %v2809
      %v2811 = vrot.slane %v2806, %v2810
      %v2817 = vunpack.c.l.b16 %v2802
      %v2818 = vunpack.c.l.b16 %v2803
      %v2819 = vunpack.c.l.b16 %v2804
      %v2820 = vunpack.c.l.b16 %v2805
      %v2821 = vpack.c.b16 %v2818, %v2817
      %v2822 = vpack.c.b16 %v2820, %v2819
      %v2825 = vsel %vm985, %v2801, 0
      %2827 = vmatprep.subr.bf16.mxu0 0
      %2828 = vmatpush1.bf16.msra.mxu0 %v2821
      %2829 = vmatprep.subr.bf16.mxu0 0
      %2830 = vmatpush1.bf16.msra.mxu0 %v2822
      %2831 = vmatprep.subr.bf16.mxu0 0
      %2832 = vmatpush1.bf16.msra.mxu0 0
      %2833 = vmatprep.subr.bf16.mxu0 0
      %2834 = vmatpush1.bf16.msra.mxu0 0
      %2835 = vmatprep.subr.bf16.mxu0 0
      %2836 = vmatpush1.bf16.msra.mxu0 0
      %2837 = vmatprep.subr.bf16.mxu0 0
      %2838 = vmatpush1.bf16.msra.mxu0 0
      %2839 = vmatprep.subr.bf16.mxu0 0
      %2840 = vmatpush1.bf16.msra.mxu0 0
      %2841 = vmatprep.subr.bf16.mxu0 0
      %2842 = vmatpush1.bf16.msra.mxu0 0
      %2843 = vmatprep.subr.bf16.mxu0 0
      %2844 = vmatpush1.bf16.msra.mxu0 0
      %2845 = vmatprep.subr.bf16.mxu0 0
      %2846 = vmatpush1.bf16.msra.mxu0 0
      %2847 = vmatprep.subr.bf16.mxu0 0
      %2848 = vmatpush1.bf16.msra.mxu0 0
      %2849 = vmatprep.subr.bf16.mxu0 0
      %2850 = vmatpush1.bf16.msra.mxu0 0
      %2851 = vmatprep.subr.bf16.mxu0 0
      %2852 = vmatpush1.bf16.msra.mxu0 0
      %2853 = vmatprep.subr.bf16.mxu0 0
      %2854 = vmatpush1.bf16.msra.mxu0 0
      %2855 = vmatprep.subr.bf16.mxu0 0
      %2856 = vmatpush1.bf16.msra.mxu0 0
      %2857 = vmatprep.subr.bf16.mxu0 0
      %2858 = vmatpush1.bf16.msra.mxu0 0
      %2859 = vmatprep.mubr.bf16.mxu0 0
      %2860 = vmatmul.mubr.bf16.gmra.mrb[0].mxu0 %v2825
      %v2861 = vpop.f32.mrb[0].mxu0
      %v2862 = vadd.f32 %v2811, %v2861
      %v2863 = vpop.f32.mrb[0].mxu0
      %v2864 = vpop.f32.mrb[0].mxu0
      %v2865 = vadd.f32 %v2811, %v2864
      %v2866 = vpop.f32.mrb[0].mxu0
      %2867 = vdwg.mxu0
      %v2868 = vadd.f32 %v2470, %v2862
      %v2869 = vadd.f32 %v2471, %v2865
      %v2870 = vld [vmem:[%s41] sm:$0x1]
      %v2871 = vld [vmem:[%s43] sm:$0x1]
      %v2872 = vsel %vm985, %v2868, 0.0
      %2873 = vadd.xlane.f32.xlu0 %v2872
      %v2874 = vpop.xlane.xlu0 %2873
      %vm2875 = vcmask 257024
      %v2876 = vsel %vm2875, %v2869, 0.0
      %2877 = vadd.xlane.f32.xlu0 %v2876
      %v2878 = vpop.xlane.xlu0 %2877
      %v2879 = vmul.f32 %v2874, %v1335
      %v2880 = vmul.f32 %v2878, %v1335
      %v2881 = vsub.f32 %v2868, %v2879
      %v2882 = vsub.f32 %v2869, %v2880
      %v2883 = vmul.f32 %v2881, %v2881
      %v2884 = vmul.f32 %v2882, %v2882
      %v2885 = vsel %vm985, %v2883, 0.0
      %2886 = vadd.xlane.f32.xlu0 %v2885
      %v2887 = vpop.xlane.xlu0 %2886
      %v2888 = vsel %vm2875, %v2884, 0.0
      %2889 = vadd.xlane.f32.xlu0 %v2888
      %v2890 = vpop.xlane.xlu0 %2889
      %v2891 = vmul.f32 %v2887, %v1335
      %v2892 = vmul.f32 %v2890, %v1335
      %v2893 = vadd.f32 %v2891, 1e-05
      %v2894 = vadd.f32 %v2892, 1e-05
      %v2895 = vrsqrt.pop %v2893
      %v2896 = vrsqrt.pop %v2894
      %v2897 = vmul.f32 %v2881, %v2895
      %v2898 = vmul.f32 %v2882, %v2896
      %v2900 = vlaneseq
      %v2901 = vshrl.u32 %v2900, 7
      %v2902 = vsub.s32 0, %v2901
      %v2903 = vrot.slane %v2870, %v2902
      %v2905 = vmul.f32 %v2897, %v2903
      %v2906 = vmul.f32 %v2898, %v2903
      %v2908 = vlaneseq
      %v2909 = vshrl.u32 %v2908, 7
      %v2910 = vsub.s32 0, %v2909
      %v2911 = vrot.slane %v2871, %v2910
      %v2913 = vadd.f32 %v2905, %v2911
      %v2914 = vadd.f32 %v2906, %v2911
      %v2915 = vmul.f32 %v2913, %v2467
      %v2916 = vmul.f32 %v2914, %v2468
      %v2917 = vld [vmem:[%s45] sm:$0xf]
      %v2918 = vld [vmem:[%s45 + $0x4] sm:$0xf]
      %v2919 = vld [vmem:[%s45 + $0x8] sm:$0xf]
      %v2920 = vld [vmem:[%s45 + $0xc] sm:$0xf]
      %v2921 = vld [vmem:[%s45 + $0x10] sm:$0xf]
      %v2922 = vld [vmem:[%s45 + $0x14] sm:$0xf]
      %v2923 = vld [vmem:[%s45 + $0x18] sm:$0xf]
      %v2924 = vld [vmem:[%s45 + $0x1c] sm:$0xf]
      %v2925 = vld [vmem:[%s45 + $0x20] sm:$0xf]
      %v2926 = vld [vmem:[%s45 + $0x24] sm:$0xf]
      %v2927 = vld [vmem:[%s45 + $0x28] sm:$0xf]
      %v2928 = vld [vmem:[%s45 + $0x2c] sm:$0xf]
      %v2929 = vld [vmem:[%s47] sm:$0x1]
      %v2932 = vrot.slane %v2915, 7
      %v2933 = vrot.slane %v2916, 7
      %v2934 = vsel %vm1377, %v2932, %v2933
      %v2937 = vsel %vm1377, 0.0, %v2932
      %vm2938 = vcmask 1044480
      %v2939 = vsel %vm2938, %v2934, 0.0
      %v2942 = vrot.slane %v2937, 1
      %v2943 = vrot.slane %v2939, 1
      %v2944 = vsel %vm1382, %v2942, %v2943
      %2945 = vrot.lane.b32.xlu0 %v2944, 32
      %v2946 = vpop.permute.xlu0 %2945
      %2947 = vrot.lane.b32.xlu0 %v2943, 32
      %v2948 = vpop.permute.xlu0 %2947
      %v2951 = vrot.slane %v2937, 2
      %v2952 = vrot.slane %v2939, 2
      %v2953 = vsel %vm1389, %v2951, %v2952
      %2954 = vrot.lane.b32.xlu0 %v2953, 64
      %v2955 = vpop.permute.xlu0 %2954
      %2956 = vrot.lane.b32.xlu0 %v2952, 64
      %v2957 = vpop.permute.xlu0 %2956
      %v2960 = vsel %vm985, %v2937, %v2946
      %v2961 = vsel %vm985, %v2939, %v2948
      %v2962 = vsel %vm1397, %v2960, %v2955
      %v2963 = vsel %vm1397, %v2961, %v2957
      %v2964 = vpack.c.bf16 %v2963, %v2962
      %v2966 = vlaneseq
      %v2967 = vshrl.u32 %v2966, 7
      %v2968 = vsub.s32 0, %v2967
      %v2969 = vrot.slane %v2929, %v2968
      %v2983 = vunpack.c.l.b16 %v2917
      %v2984 = vunpack.c.l.b16 %v2918
      %v2985 = vunpack.c.l.b16 %v2919
      %v2986 = vunpack.c.l.b16 %v2920
      %v2987 = vunpack.c.l.b16 %v2921
      %v2988 = vunpack.c.l.b16 %v2922
      %v2989 = vunpack.c.l.b16 %v2923
      %v2990 = vunpack.c.l.b16 %v2924
      %v2991 = vunpack.c.l.b16 %v2925
      %v2992 = vunpack.c.l.b16 %v2926
      %v2993 = vunpack.c.l.b16 %v2927
      %v2994 = vunpack.c.l.b16 %v2928
      %v2995 = vpack.c.b16 %v2984, %v2983
      %v2996 = vpack.c.b16 %v2986, %v2985
      %v2997 = vpack.c.b16 %v2988, %v2987
      %v2998 = vpack.c.b16 %v2990, %v2989
      %v2999 = vpack.c.b16 %v2992, %v2991
      %v3000 = vpack.c.b16 %v2994, %v2993
      %v3008 = vsel %vm1442, %v2964, 0
      %3010 = vmatprep.subr.bf16.mxu0 0
      %3011 = vmatpush1.bf16.msra.mxu0 %v2995
      %3012 = vmatprep.subr.bf16.mxu0 0
      %3013 = vmatpush1.bf16.msra.mxu0 %v2996
      %3014 = vmatprep.subr.bf16.mxu0 0
      %3015 = vmatpush1.bf16.msra.mxu0 %v2997
      %3016 = vmatprep.subr.bf16.mxu0 0
      %3017 = vmatpush1.bf16.msra.mxu0 %v2998
      %3018 = vmatprep.subr.bf16.mxu0 0
      %3019 = vmatpush1.bf16.msra.mxu0 %v2999
      %3020 = vmatprep.subr.bf16.mxu0 0
      %3021 = vmatpush1.bf16.msra.mxu0 %v3000
      %3022 = vmatprep.subr.bf16.mxu0 0
      %3023 = vmatpush1.bf16.msra.mxu0 0
      %3024 = vmatprep.subr.bf16.mxu0 0
      %3025 = vmatpush1.bf16.msra.mxu0 0
      %3026 = vmatprep.subr.bf16.mxu0 0
      %3027 = vmatpush1.bf16.msra.mxu0 0
      %3028 = vmatprep.subr.bf16.mxu0 0
      %3029 = vmatpush1.bf16.msra.mxu0 0
      %3030 = vmatprep.subr.bf16.mxu0 0
      %3031 = vmatpush1.bf16.msra.mxu0 0
      %3032 = vmatprep.subr.bf16.mxu0 0
      %3033 = vmatpush1.bf16.msra.mxu0 0
      %3034 = vmatprep.subr.bf16.mxu0 0
      %3035 = vmatpush1.bf16.msra.mxu0 0
      %3036 = vmatprep.subr.bf16.mxu0 0
      %3037 = vmatpush1.bf16.msra.mxu0 0
      %3038 = vmatprep.subr.bf16.mxu0 0
      %3039 = vmatpush1.bf16.msra.mxu0 0
      %3040 = vmatprep.subr.bf16.mxu0 0
      %3041 = vmatpush1.bf16.msra.mxu0 0
      %3042 = vmatprep.mubr.bf16.mxu0 0
      %3043 = vmatmul.mubr.bf16.gmra.mrb[0].mxu0 %v3008
      %v3044 = vpop.f32.mrb[0].mxu0
      %v3045 = vadd.f32 %v2969, %v3044
      %v3046 = vpop.f32.mrb[0].mxu0
      %v3047 = vpop.f32.mrb[0].mxu0
      %v3048 = vadd.f32 %v2969, %v3047
      %v3049 = vpop.f32.mrb[0].mxu0
      %3050 = vdwg.mxu0
      %v3051 = vmax.f32 %v3045, 0.0
      %v3052 = vmax.f32 %v3048, 0.0
      %v3053 = vmul.f32 %v3051, %v2467
      %v3054 = vmul.f32 %v3052, %v2468
      %v3055 = vld [vmem:[%s49] sm:$0xf]
      %v3056 = vld [vmem:[%s49 + $0x4] sm:$0xf]
      %v3057 = vld [vmem:[%s49 + $0x8] sm:$0xf]
      %v3058 = vld [vmem:[%s49 + $0xc] sm:$0xf]
      %v3059 = vld [vmem:[%s49 + $0x10] sm:$0xf]
      %v3060 = vld [vmem:[%s49 + $0x14] sm:$0xf]
      %v3061 = vld [vmem:[%s49 + $0x18] sm:$0xf]
      %v3062 = vld [vmem:[%s49 + $0x1c] sm:$0xf]
      %v3063 = vld [vmem:[%s49 + $0x20] sm:$0xf]
      %v3064 = vld [vmem:[%s49 + $0x24] sm:$0xf]
      %v3065 = vld [vmem:[%s49 + $0x28] sm:$0xf]
      %v3066 = vld [vmem:[%s49 + $0x2c] sm:$0xf]
      %v3067 = vld [vmem:[%s49 + $0x30] sm:$0xf]
      %v3068 = vld [vmem:[%s49 + $0x34] sm:$0xf]
      %v3069 = vld [vmem:[%s49 + $0x38] sm:$0xf]
      %v3070 = vld [vmem:[%s49 + $0x3c] sm:$0xf]
      %v3071 = vld [vmem:[%s49 + $0x40] sm:$0xf]
      %v3072 = vld [vmem:[%s49 + $0x44] sm:$0xf]
      %v3073 = vld [vmem:[%s49 + $0x48] sm:$0xf]
      %v3074 = vld [vmem:[%s49 + $0x4c] sm:$0xf]
      %v3075 = vld [vmem:[%s49 + $0x50] sm:$0xf]
      %v3076 = vld [vmem:[%s49 + $0x54] sm:$0xf]
      %v3077 = vld [vmem:[%s49 + $0x58] sm:$0xf]
      %v3078 = vld [vmem:[%s49 + $0x5c] sm:$0xf]
      %v3079 = vld [vmem:[%s51] sm:$0x1]
      %v3082 = vrot.slane %v3053, 7
      %v3083 = vrot.slane %v3054, 7
      %v3084 = vsel %vm1377, %v3082, %v3083
      %v3087 = vsel %vm1377, 0.0, %v3082
      %v3088 = vsel %vm2938, %v3084, 0.0
      %v3091 = vrot.slane %v3087, 1
      %v3092 = vrot.slane %v3088, 1
      %v3093 = vsel %vm1382, %v3091, %v3092
      %3094 = vrot.lane.b32.xlu0 %v3093, 64
      %v3095 = vpop.permute.xlu0 %3094
      %3096 = vrot.lane.b32.xlu0 %v3092, 64
      %v3097 = vpop.permute.xlu0 %3096
      %v3100 = vrot.slane %v3087, 2
      %v3101 = vrot.slane %v3088, 2
      %v3102 = vsel %vm1389, %v3100, %v3101
      %v3105 = vsel %vm1397, %v3087, %v3095
      %v3106 = vsel %vm1397, %v3088, %v3097
      %v3107 = vpack.c.bf16 %v3106, %v3105
      %v3108 = vpack.c.bf16 %v3101, %v3102
      %v3110 = vlaneseq
      %v3111 = vshrl.u32 %v3110, 7
      %v3112 = vsub.s32 0, %v3111
      %v3113 = vrot.slane %v3079, %v3112
      %v3139 = vunpack.c.l.b16 %v3055
      %v3140 = vunpack.c.l.b16 %v3056
      %v3141 = vunpack.c.l.b16 %v3057
      %v3142 = vunpack.c.l.b16 %v3058
      %v3143 = vunpack.c.l.b16 %v3059
      %v3144 = vunpack.c.l.b16 %v3060
      %v3145 = vunpack.c.l.b16 %v3061
      %v3146 = vunpack.c.l.b16 %v3062
      %v3147 = vunpack.c.l.b16 %v3063
      %v3148 = vunpack.c.l.b16 %v3064
      %v3149 = vunpack.c.l.b16 %v3065
      %v3150 = vunpack.c.l.b16 %v3066
      %v3151 = vunpack.c.l.b16 %v3067
      %v3152 = vunpack.c.l.b16 %v3068
      %v3153 = vunpack.c.l.b16 %v3069
      %v3154 = vunpack.c.l.b16 %v3070
      %v3155 = vunpack.c.l.b16 %v3071
      %v3156 = vunpack.c.l.b16 %v3072
      %v3157 = vunpack.c.l.b16 %v3073
      %v3158 = vunpack.c.l.b16 %v3074
      %v3159 = vunpack.c.l.b16 %v3075
      %v3160 = vunpack.c.l.b16 %v3076
      %v3161 = vunpack.c.l.b16 %v3077
      %v3162 = vunpack.c.l.b16 %v3078
      %v3163 = vpack.c.b16 %v3140, %v3139
      %v3164 = vpack.c.b16 %v3142, %v3141
      %v3165 = vpack.c.b16 %v3144, %v3143
      %v3166 = vpack.c.b16 %v3146, %v3145
      %v3167 = vpack.c.b16 %v3148, %v3147
      %v3168 = vpack.c.b16 %v3150, %v3149
      %v3169 = vpack.c.b16 %v3152, %v3151
      %v3170 = vpack.c.b16 %v3154, %v3153
      %v3171 = vpack.c.b16 %v3156, %v3155
      %v3172 = vpack.c.b16 %v3158, %v3157
      %v3173 = vpack.c.b16 %v3160, %v3159
      %v3174 = vpack.c.b16 %v3162, %v3161
      %v3188 = vsel %vm1397, %v3108, 0
      %3190 = vmatprep.subr.bf16.mxu0 0
      %3191 = vmatpush1.bf16.msra.mxu0 %v3163
      %3192 = vmatprep.subr.bf16.mxu0 0
      %3193 = vmatpush1.bf16.msra.mxu0 %v3164
      %3194 = vmatprep.subr.bf16.mxu0 0
      %3195 = vmatpush1.bf16.msra.mxu0 %v3165
      %3196 = vmatprep.subr.bf16.mxu0 0
      %3197 = vmatpush1.bf16.msra.mxu0 %v3166
      %3198 = vmatprep.subr.bf16.mxu0 0
      %3199 = vmatpush1.bf16.msra.mxu0 %v3167
      %3200 = vmatprep.subr.bf16.mxu0 0
      %3201 = vmatpush1.bf16.msra.mxu0 %v3168
      %3202 = vmatprep.subr.bf16.mxu0 0
      %3203 = vmatpush1.bf16.msra.mxu0 %v3169
      %3204 = vmatprep.subr.bf16.mxu0 0
      %3205 = vmatpush1.bf16.msra.mxu0 %v3170
      %3206 = vmatprep.subr.bf16.mxu0 0
      %3207 = vmatpush1.bf16.msra.mxu0 %v3171
      %3208 = vmatprep.subr.bf16.mxu0 0
      %3209 = vmatpush1.bf16.msra.mxu0 %v3172
      %3210 = vmatprep.subr.bf16.mxu0 0
      %3211 = vmatpush1.bf16.msra.mxu0 %v3173
      %3212 = vmatprep.subr.bf16.mxu0 0
      %3213 = vmatpush1.bf16.msra.mxu0 %v3174
      %3214 = vmatprep.subr.bf16.mxu0 0
      %3215 = vmatpush1.bf16.msra.mxu0 0
      %3216 = vmatprep.subr.bf16.mxu0 0
      %3217 = vmatpush1.bf16.msra.mxu0 0
      %3218 = vmatprep.subr.bf16.mxu0 0
      %3219 = vmatpush1.bf16.msra.mxu0 0
      %3220 = vmatprep.subr.bf16.mxu0 0
      %3221 = vmatpush1.bf16.msra.mxu0 0
      %3222 = vmatprep.mubr.bf16.mxu0 %v3188
      %3223 = vmatmul.mubr.bf16.gmra.mrb[0].mxu0 %v3107
      %v3224 = vpop.f32.mrb[0].mxu0
      %v3225 = vadd.f32 %v3113, %v3224
      %v3226 = vpop.f32.mrb[0].mxu0
      %v3227 = vpop.f32.mrb[0].mxu0
      %v3228 = vadd.f32 %v3113, %v3227
      %v3229 = vpop.f32.mrb[0].mxu0
      %3230 = vdwg.mxu0
      %v3231 = vmul.f32 %v3225, %v2467
      %v3232 = vmul.f32 %v3228, %v2468
      %v3233 = vadd.f32 %v2913, %v3231
      %v3234 = vadd.f32 %v2914, %v3232
      %v3235 = vld [vmem:[%s53] sm:$0x1]
      %v3236 = vld [vmem:[%s55] sm:$0x1]
      %v3237 = vsel %vm985, %v3233, 0.0
      %3238 = vadd.xlane.f32.xlu0 %v3237
      %v3239 = vpop.xlane.xlu0 %3238
      %v3240 = vsel %vm2875, %v3234, 0.0
      %3241 = vadd.xlane.f32.xlu0 %v3240
      %v3242 = vpop.xlane.xlu0 %3241
      %v3243 = vmul.f32 %v3239, %v1335
      %v3244 = vmul.f32 %v3242, %v1335
      %v3245 = vsub.f32 %v3233, %v3243
      %v3246 = vsub.f32 %v3234, %v3244
      %v3247 = vmul.f32 %v3245, %v3245
      %v3248 = vmul.f32 %v3246, %v3246
      %v3249 = vsel %vm985, %v3247, 0.0
      %3250 = vadd.xlane.f32.xlu0 %v3249
      %v3251 = vpop.xlane.xlu0 %3250
      %v3252 = vsel %vm2875, %v3248, 0.0
      %3253 = vadd.xlane.f32.xlu0 %v3252
      %v3254 = vpop.xlane.xlu0 %3253
      %v3255 = vmul.f32 %v3251, %v1335
      %v3256 = vmul.f32 %v3254, %v1335
      %v3257 = vadd.f32 %v3255, 1e-05
      %v3258 = vadd.f32 %v3256, 1e-05
      %v3259 = vrsqrt.pop %v3257
      %v3260 = vrsqrt.pop %v3258
      %v3261 = vmul.f32 %v3245, %v3259
      %v3262 = vmul.f32 %v3246, %v3260
      %v3264 = vlaneseq
      %v3265 = vshrl.u32 %v3264, 7
      %v3266 = vsub.s32 0, %v3265
      %v3267 = vrot.slane %v3235, %v3266
      %v3269 = vmul.f32 %v3261, %v3267
      %v3270 = vmul.f32 %v3262, %v3267
      %v3272 = vlaneseq
      %v3273 = vshrl.u32 %v3272, 7
      %v3274 = vsub.s32 0, %v3273
      %v3275 = vrot.slane %v3236, %v3274
      %v3277 = vadd.f32 %v3269, %v3275
      %v3278 = vadd.f32 %v3270, %v3275
      %v3279 = vpack.c.bf16 %v3278, %v3277
      %s3280 = scalar_lea.vmem %s33, 16
      %v3281 = vld [vmem:[%s3280] sm:$0xf]
      %v3282 = vld [vmem:[%s3280 + $0x4] sm:$0xf]
      %v3283 = vld [vmem:[%s3280 + $0x8] sm:$0xf]
      %v3284 = vld [vmem:[%s3280 + $0xc] sm:$0xf]
      %s3285 = scalar_lea.vmem %s35, 1
      %v3286 = vld [vmem:[%s3285] sm:$0x1]
      %v3288 = vlaneseq
      %v3289 = vshrl.u32 %v3288, 7
      %v3290 = vsub.s32 0, %v3289
      %v3291 = vrot.slane %v3286, %v3290
      %v3297 = vunpack.c.l.b16 %v3281
      %v3298 = vunpack.c.l.b16 %v3282
      %v3299 = vunpack.c.l.b16 %v3283
      %v3300 = vunpack.c.l.b16 %v3284
      %v3301 = vpack.c.b16 %v3298, %v3297
      %v3302 = vpack.c.b16 %v3300, %v3299
      %v3306 = vsel %vm985, %v3279, 0
      %3308 = vmatprep.subr.bf16.mxu0 0
      %3309 = vmatpush1.bf16.msra.mxu0 %v3301
      %3310 = vmatprep.subr.bf16.mxu0 0
      %3311 = vmatpush1.bf16.msra.mxu0 %v3302
      %3312 = vmatprep.subr.bf16.mxu0 0
      %3313 = vmatpush1.bf16.msra.mxu0 0
      %3314 = vmatprep.subr.bf16.mxu0 0
      %3315 = vmatpush1.bf16.msra.mxu0 0
      %3316 = vmatprep.subr.bf16.mxu0 0
      %3317 = vmatpush1.bf16.msra.mxu0 0
      %3318 = vmatprep.subr.bf16.mxu0 0
      %3319 = vmatpush1.bf16.msra.mxu0 0
      %3320 = vmatprep.subr.bf16.mxu0 0
      %3321 = vmatpush1.bf16.msra.mxu0 0
      %3322 = vmatprep.subr.bf16.mxu0 0
      %3323 = vmatpush1.bf16.msra.mxu0 0
      %3324 = vmatprep.subr.bf16.mxu0 0
      %3325 = vmatpush1.bf16.msra.mxu0 0
      %3326 = vmatprep.subr.bf16.mxu0 0
      %3327 = vmatpush1.bf16.msra.mxu0 0
      %3328 = vmatprep.subr.bf16.mxu0 0
      %3329 = vmatpush1.bf16.msra.mxu0 0
      %3330 = vmatprep.subr.bf16.mxu0 0
      %3331 = vmatpush1.bf16.msra.mxu0 0
      %3332 = vmatprep.subr.bf16.mxu0 0
      %3333 = vmatpush1.bf16.msra.mxu0 0
      %3334 = vmatprep.subr.bf16.mxu0 0
      %3335 = vmatpush1.bf16.msra.mxu0 0
      %3336 = vmatprep.subr.bf16.mxu0 0
      %3337 = vmatpush1.bf16.msra.mxu0 0
      %3338 = vmatprep.subr.bf16.mxu0 0
      %3339 = vmatpush1.bf16.msra.mxu0 0
      %3340 = vmatprep.mubr.bf16.mxu0 0
      %3341 = vmatmul.mubr.bf16.gmra.mrb[0].mxu0 %v3306
      %v3342 = vpop.f32.mrb[0].mxu0
      %v3343 = vadd.f32 %v3291, %v3342
      %v3344 = vpop.f32.mrb[0].mxu0
      %v3345 = vpop.f32.mrb[0].mxu0
      %v3346 = vadd.f32 %v3291, %v3345
      %v3347 = vpop.f32.mrb[0].mxu0
      %3348 = vdwg.mxu0
      %v3349 = vpack.c.bf16 %v3346, %v3343
      %3351 = vrot.lane.b32.xlu0 %v3349, 96
      %v3352 = vpop.permute.xlu0 %3351
      %v3354 = vsel %vm1033, %v3349, 0
      %v3357 = vsel %vm1033, %v3352, 0
      %3359 = vmatprep.subr.bf16.mxu0 0
      %3360 = vmatpush1.bf16.xpose.msra.mxu0 %v3357
      %3361 = vmatprep.subr.bf16.mxu0 0
      %3362 = vmatpush1.bf16.xpose.msra.mxu0 0
      %3363 = vmatprep.subr.bf16.mxu0 0
      %3364 = vmatpush1.bf16.xpose.msra.mxu0 0
      %3365 = vmatprep.subr.bf16.mxu0 0
      %3366 = vmatpush1.bf16.xpose.msra.mxu0 0
      %3367 = vmatprep.subr.bf16.mxu0 0
      %3368 = vmatpush1.bf16.xpose.msra.mxu0 0
      %3369 = vmatprep.subr.bf16.mxu0 0
      %3370 = vmatpush1.bf16.xpose.msra.mxu0 0
      %3371 = vmatprep.subr.bf16.mxu0 0
      %3372 = vmatpush1.bf16.xpose.msra.mxu0 0
      %3373 = vmatprep.subr.bf16.mxu0 0
      %3374 = vmatpush1.bf16.xpose.msra.mxu0 0
      %3375 = vmatprep.subr.bf16.mxu0 0
      %3376 = vmatpush1.bf16.xpose.msra.mxu0 0
      %3377 = vmatprep.subr.bf16.mxu0 0
      %3378 = vmatpush1.bf16.xpose.msra.mxu0 0
      %3379 = vmatprep.subr.bf16.mxu0 0
      %3380 = vmatpush1.bf16.xpose.msra.mxu0 0
      %3381 = vmatprep.subr.bf16.mxu0 0
      %3382 = vmatpush1.bf16.xpose.msra.mxu0 0
      %3383 = vmatprep.subr.bf16.mxu0 0
      %3384 = vmatpush1.bf16.xpose.msra.mxu0 0
      %3385 = vmatprep.subr.bf16.mxu0 0
      %3386 = vmatpush1.bf16.xpose.msra.mxu0 0
      %3387 = vmatprep.subr.bf16.mxu0 0
      %3388 = vmatpush1.bf16.xpose.msra.mxu0 0
      %3389 = vmatprep.subr.bf16.mxu0 0
      %3390 = vmatpush1.bf16.xpose.msra.mxu0 0
      %3391 = vmatprep.mubr.bf16.mxu0 0
      %3392 = vmatmul.mubr.bf16.gmra.mrb[0].mxu0 %v3354
      %v3393 = vpop.f32.mrb[0].mxu0
      %v3394 = vadd.f32 0.0, %v3393
      %v3395 = vpop.f32.mrb[0].mxu0
      %v3396 = vpop.f32.mrb[0].mxu0
      %v3397 = vadd.f32 0.0, %v3396
      %v3398 = vpop.f32.mrb[0].mxu0
      %3399 = vdwg.mxu0
      %v3400 = vsel %vm2592, %v3394, -10000.0
      %v3401 = vsel %vm2592, %v3397, -10000.0
      %v3402 = vsel %vm2595, %v3400, -inf
      %3403 = vmax.xlane.f32.xlu0 %v3402
      %v3404 = vpop.xlane.xlu0 %3403
      %v3405 = vsel %vm2599, %v3401, -inf
      %3406 = vmax.xlane.f32.xlu0 %v3405
      %v3407 = vpop.xlane.xlu0 %3406
      %v3408 = vsub.f32 %v3400, %v3404
      %v3409 = vsub.f32 %v3401, %v3407
      %v3410 = vmul.f32 %v3408, 1.442695
      %v3411 = vpow.pop %v3410
      %v3412 = vmul.f32 %v3409, 1.442695
      %v3413 = vpow.pop %v3412
      %v3414 = vsel %vm2595, %v3411, 0.0
      %3415 = vadd.xlane.f32.xlu0 %v3414
      %v3416 = vpop.xlane.xlu0 %3415
      %v3417 = vsel %vm2599, %v3413, 0.0
      %3418 = vadd.xlane.f32.xlu0 %v3417
      %v3419 = vpop.xlane.xlu0 %3418
      %v3420 = vrcp.pop %v3416
      %v3421 = vrcp.pop %v3419
      %v3422 = vmul.f32 %v3411, %v3420
      %v3423 = vmul.f32 %v3413, %v3421
      %v3424 = vpack.c.bf16 %v3423, %v3422
      %3425 = vrot.lane.b32.xlu0 %v3349, 64
      %v3426 = vpop.permute.xlu0 %3425
      %v3428 = vsel %vm2595, %v3424, 0
      %v3431 = vsel %vm1389, %v3426, 0
      %3433 = vmatprep.subr.bf16.mxu0 0
      %3434 = vmatpush1.bf16.msra.mxu0 %v3431
      %3435 = vmatprep.subr.bf16.mxu0 0
      %3436 = vmatpush1.bf16.msra.mxu0 0
      %3437 = vmatprep.subr.bf16.mxu0 0
      %3438 = vmatpush1.bf16.msra.mxu0 0
      %3439 = vmatprep.subr.bf16.mxu0 0
      %3440 = vmatpush1.bf16.msra.mxu0 0
      %3441 = vmatprep.subr.bf16.mxu0 0
      %3442 = vmatpush1.bf16.msra.mxu0 0
      %3443 = vmatprep.subr.bf16.mxu0 0
      %3444 = vmatpush1.bf16.msra.mxu0 0
      %3445 = vmatprep.subr.bf16.mxu0 0
      %3446 = vmatpush1.bf16.msra.mxu0 0
      %3447 = vmatprep.subr.bf16.mxu0 0
      %3448 = vmatpush1.bf16.msra.mxu0 0
      %3449 = vmatprep.subr.bf16.mxu0 0
      %3450 = vmatpush1.bf16.msra.mxu0 0
      %3451 = vmatprep.subr.bf16.mxu0 0
      %3452 = vmatpush1.bf16.msra.mxu0 0
      %3453 = vmatprep.subr.bf16.mxu0 0
      %3454 = vmatpush1.bf16.msra.mxu0 0
      %3455 = vmatprep.subr.bf16.mxu0 0
      %3456 = vmatpush1.bf16.msra.mxu0 0
      %3457 = vmatprep.subr.bf16.mxu0 0
      %3458 = vmatpush1.bf16.msra.mxu0 0
      %3459 = vmatprep.subr.bf16.mxu0 0
      %3460 = vmatpush1.bf16.msra.mxu0 0
      %3461 = vmatprep.subr.bf16.mxu0 0
      %3462 = vmatpush1.bf16.msra.mxu0 0
      %3463 = vmatprep.subr.bf16.mxu0 0
      %3464 = vmatpush1.bf16.msra.mxu0 0
      %3465 = vmatprep.mubr.bf16.mxu0 0
      %3466 = vmatmul.mubr.bf16.gmra.mrb[0].mxu0 %v3428
      %v3467 = vpop.f32.mrb[0].mxu0
      %v3468 = vadd.f32 0.0, %v3467
      %v3469 = vpop.f32.mrb[0].mxu0
      %v3470 = vpop.f32.mrb[0].mxu0
      %v3471 = vadd.f32 0.0, %v3470
      %v3472 = vpop.f32.mrb[0].mxu0
      %3473 = vdwg.mxu0
      %v3474 = vpack.c.bf16 %v3471, %v3468
      %3475 = vrot.lane.b32.xlu0 %v3349, 112
      %v3476 = vpop.permute.xlu0 %3475
      %3477 = vrot.lane.b32.xlu0 %v3349, 80
      %v3478 = vpop.permute.xlu0 %3477
      %v3480 = vsel %vm1033, %v3476, 0
      %v3483 = vsel %vm1033, %v3478, 0
      %3485 = vmatprep.subr.bf16.mxu0 0
      %3486 = vmatpush1.bf16.xpose.msra.mxu0 %v3483
      %3487 = vmatprep.subr.bf16.mxu0 0
      %3488 = vmatpush1.bf16.xpose.msra.mxu0 0
      %3489 = vmatprep.subr.bf16.mxu0 0
      %3490 = vmatpush1.bf16.xpose.msra.mxu0 0
      %3491 = vmatprep.subr.bf16.mxu0 0
      %3492 = vmatpush1.bf16.xpose.msra.mxu0 0
      %3493 = vmatprep.subr.bf16.mxu0 0
      %3494 = vmatpush1.bf16.xpose.msra.mxu0 0
      %3495 = vmatprep.subr.bf16.mxu0 0
      %3496 = vmatpush1.bf16.xpose.msra.mxu0 0
      %3497 = vmatprep.subr.bf16.mxu0 0
      %3498 = vmatpush1.bf16.xpose.msra.mxu0 0
      %3499 = vmatprep.subr.bf16.mxu0 0
      %3500 = vmatpush1.bf16.xpose.msra.mxu0 0
      %3501 = vmatprep.subr.bf16.mxu0 0
      %3502 = vmatpush1.bf16.xpose.msra.mxu0 0
      %3503 = vmatprep.subr.bf16.mxu0 0
      %3504 = vmatpush1.bf16.xpose.msra.mxu0 0
      %3505 = vmatprep.subr.bf16.mxu0 0
      %3506 = vmatpush1.bf16.xpose.msra.mxu0 0
      %3507 = vmatprep.subr.bf16.mxu0 0
      %3508 = vmatpush1.bf16.xpose.msra.mxu0 0
      %3509 = vmatprep.subr.bf16.mxu0 0
      %3510 = vmatpush1.bf16.xpose.msra.mxu0 0
      %3511 = vmatprep.subr.bf16.mxu0 0
      %3512 = vmatpush1.bf16.xpose.msra.mxu0 0
      %3513 = vmatprep.subr.bf16.mxu0 0
      %3514 = vmatpush1.bf16.xpose.msra.mxu0 0
      %3515 = vmatprep.subr.bf16.mxu0 0
      %3516 = vmatpush1.bf16.xpose.msra.mxu0 0
      %3517 = vmatprep.mubr.bf16.mxu0 0
      %3518 = vmatmul.mubr.bf16.gmra.mrb[0].mxu0 %v3480
      %v3519 = vpop.f32.mrb[0].mxu0
      %v3520 = vadd.f32 0.0, %v3519
      %v3521 = vpop.f32.mrb[0].mxu0
      %v3522 = vpop.f32.mrb[0].mxu0
      %v3523 = vadd.f32 0.0, %v3522
      %v3524 = vpop.f32.mrb[0].mxu0
      %3525 = vdwg.mxu0
      %v3526 = vsel %vm2592, %v3520, -10000.0
      %v3527 = vsel %vm2592, %v3523, -10000.0
      %v3528 = vsel %vm2595, %v3526, -inf
      %3529 = vmax.xlane.f32.xlu0 %v3528
      %v3530 = vpop.xlane.xlu0 %3529
      %v3531 = vsel %vm2599, %v3527, -inf
      %3532 = vmax.xlane.f32.xlu0 %v3531
      %v3533 = vpop.xlane.xlu0 %3532
      %v3534 = vsub.f32 %v3526, %v3530
      %v3535 = vsub.f32 %v3527, %v3533
      %v3536 = vmul.f32 %v3534, 1.442695
      %v3537 = vpow.pop %v3536
      %v3538 = vmul.f32 %v3535, 1.442695
      %v3539 = vpow.pop %v3538
      %v3540 = vsel %vm2595, %v3537, 0.0
      %3541 = vadd.xlane.f32.xlu0 %v3540
      %v3542 = vpop.xlane.xlu0 %3541
      %v3543 = vsel %vm2599, %v3539, 0.0
      %3544 = vadd.xlane.f32.xlu0 %v3543
      %v3545 = vpop.xlane.xlu0 %3544
      %v3546 = vrcp.pop %v3542
      %v3547 = vrcp.pop %v3545
      %v3548 = vmul.f32 %v3537, %v3546
      %v3549 = vmul.f32 %v3539, %v3547
      %v3550 = vpack.c.bf16 %v3549, %v3548
      %3551 = vrot.lane.b32.xlu0 %v3349, 48
      %v3552 = vpop.permute.xlu0 %3551
      %v3554 = vsel %vm2595, %v3550, 0
      %v3557 = vsel %vm1389, %v3552, 0
      %3559 = vmatprep.subr.bf16.mxu0 0
      %3560 = vmatpush1.bf16.msra.mxu0 %v3557
      %3561 = vmatprep.subr.bf16.mxu0 0
      %3562 = vmatpush1.bf16.msra.mxu0 0
      %3563 = vmatprep.subr.bf16.mxu0 0
      %3564 = vmatpush1.bf16.msra.mxu0 0
      %3565 = vmatprep.subr.bf16.mxu0 0
      %3566 = vmatpush1.bf16.msra.mxu0 0
      %3567 = vmatprep.subr.bf16.mxu0 0
      %3568 = vmatpush1.bf16.msra.mxu0 0
      %3569 = vmatprep.subr.bf16.mxu0 0
      %3570 = vmatpush1.bf16.msra.mxu0 0
      %3571 = vmatprep.subr.bf16.mxu0 0
      %3572 = vmatpush1.bf16.msra.mxu0 0
      %3573 = vmatprep.subr.bf16.mxu0 0
      %3574 = vmatpush1.bf16.msra.mxu0 0
      %3575 = vmatprep.subr.bf16.mxu0 0
      %3576 = vmatpush1.bf16.msra.mxu0 0
      %3577 = vmatprep.subr.bf16.mxu0 0
      %3578 = vmatpush1.bf16.msra.mxu0 0
      %3579 = vmatprep.subr.bf16.mxu0 0
      %3580 = vmatpush1.bf16.msra.mxu0 0
      %3581 = vmatprep.subr.bf16.mxu0 0
      %3582 = vmatpush1.bf16.msra.mxu0 0
      %3583 = vmatprep.subr.bf16.mxu0 0
      %3584 = vmatpush1.bf16.msra.mxu0 0
      %3585 = vmatprep.subr.bf16.mxu0 0
      %3586 = vmatpush1.bf16.msra.mxu0 0
      %3587 = vmatprep.subr.bf16.mxu0 0
      %3588 = vmatpush1.bf16.msra.mxu0 0
      %3589 = vmatprep.subr.bf16.mxu0 0
      %3590 = vmatpush1.bf16.msra.mxu0 0
      %3591 = vmatprep.mubr.bf16.mxu0 0
      %3592 = vmatmul.mubr.bf16.gmra.mrb[0].mxu0 %v3554
      %v3593 = vpop.f32.mrb[0].mxu0
      %v3594 = vadd.f32 0.0, %v3593
      %v3595 = vpop.f32.mrb[0].mxu0
      %v3596 = vpop.f32.mrb[0].mxu0
      %v3597 = vadd.f32 0.0, %v3596
      %v3598 = vpop.f32.mrb[0].mxu0
      %3599 = vdwg.mxu0
      %v3600 = vpack.c.bf16 %v3597, %v3594
      %3602 = vrot.lane.b32.xlu0 %v3600, 16
      %v3603 = vpop.permute.xlu0 %3602
      %v3606 = vsel %vm1033, %v3474, %v3603
      %s3607 = scalar_lea.vmem %s37, 16
      %v3608 = vld [vmem:[%s3607] sm:$0xf]
      %v3609 = vld [vmem:[%s3607 + $0x4] sm:$0xf]
      %v3610 = vld [vmem:[%s3607 + $0x8] sm:$0xf]
      %v3611 = vld [vmem:[%s3607 + $0xc] sm:$0xf]
      %s3612 = scalar_lea.vmem %s39, 1
      %v3613 = vld [vmem:[%s3612] sm:$0x1]
      %v3615 = vlaneseq
      %v3616 = vshrl.u32 %v3615, 7
      %v3617 = vsub.s32 0, %v3616
      %v3618 = vrot.slane %v3613, %v3617
      %v3624 = vunpack.c.l.b16 %v3608
      %v3625 = vunpack.c.l.b16 %v3609
      %v3626 = vunpack.c.l.b16 %v3610
      %v3627 = vunpack.c.l.b16 %v3611
      %v3628 = vpack.c.b16 %v3625, %v3624
      %v3629 = vpack.c.b16 %v3627, %v3626
      %v3632 = vsel %vm985, %v3606, 0
      %3634 = vmatprep.subr.bf16.mxu0 0
      %3635 = vmatpush1.bf16.msra.mxu0 %v3628
      %3636 = vmatprep.subr.bf16.mxu0 0
      %3637 = vmatpush1.bf16.msra.mxu0 %v3629
      %3638 = vmatprep.subr.bf16.mxu0 0
      %3639 = vmatpush1.bf16.msra.mxu0 0
      %3640 = vmatprep.subr.bf16.mxu0 0
      %3641 = vmatpush1.bf16.msra.mxu0 0
      %3642 = vmatprep.subr.bf16.mxu0 0
      %3643 = vmatpush1.bf16.msra.mxu0 0
      %3644 = vmatprep.subr.bf16.mxu0 0
      %3645 = vmatpush1.bf16.msra.mxu0 0
      %3646 = vmatprep.subr.bf16.mxu0 0
      %3647 = vmatpush1.bf16.msra.mxu0 0
      %3648 = vmatprep.subr.bf16.mxu0 0
      %3649 = vmatpush1.bf16.msra.mxu0 0
      %3650 = vmatprep.subr.bf16.mxu0 0
      %3651 = vmatpush1.bf16.msra.mxu0 0
      %3652 = vmatprep.subr.bf16.mxu0 0
      %3653 = vmatpush1.bf16.msra.mxu0 0
      %3654 = vmatprep.subr.bf16.mxu0 0
      %3655 = vmatpush1.bf16.msra.mxu0 0
      %3656 = vmatprep.subr.bf16.mxu0 0
      %3657 = vmatpush1.bf16.msra.mxu0 0
      %3658 = vmatprep.subr.bf16.mxu0 0
      %3659 = vmatpush1.bf16.msra.mxu0 0
      %3660 = vmatprep.subr.bf16.mxu0 0
      %3661 = vmatpush1.bf16.msra.mxu0 0
      %3662 = vmatprep.subr.bf16.mxu0 0
      %3663 = vmatpush1.bf16.msra.mxu0 0
      %3664 = vmatprep.subr.bf16.mxu0 0
      %3665 = vmatpush1.bf16.msra.mxu0 0
      %3666 = vmatprep.mubr.bf16.mxu0 0
      %3667 = vmatmul.mubr.bf16.gmra.mrb[0].mxu0 %v3632
      %v3668 = vpop.f32.mrb[0].mxu0
      %v3669 = vadd.f32 %v3618, %v3668
      %v3670 = vpop.f32.mrb[0].mxu0
      %v3671 = vpop.f32.mrb[0].mxu0
      %v3672 = vadd.f32 %v3618, %v3671
      %v3673 = vpop.f32.mrb[0].mxu0
      %3674 = vdwg.mxu0
      %v3675 = vadd.f32 %v3277, %v3669
      %v3676 = vadd.f32 %v3278, %v3672
      %s3677 = scalar_lea.vmem %s41, 1
      %v3678 = vld [vmem:[%s3677] sm:$0x1]
      %s3679 = scalar_lea.vmem %s43, 1
      %v3680 = vld [vmem:[%s3679] sm:$0x1]
      %v3681 = vsel %vm985, %v3675, 0.0
      %3682 = vadd.xlane.f32.xlu0 %v3681
      %v3683 = vpop.xlane.xlu0 %3682
      %v3684 = vsel %vm2875, %v3676, 0.0
      %3685 = vadd.xlane.f32.xlu0 %v3684
      %v3686 = vpop.xlane.xlu0 %3685
      %v3687 = vmul.f32 %v3683, %v1335
      %v3688 = vmul.f32 %v3686, %v1335
      %v3689 = vsub.f32 %v3675, %v3687
      %v3690 = vsub.f32 %v3676, %v3688
      %v3691 = vmul.f32 %v3689, %v3689
      %v3692 = vmul.f32 %v3690, %v3690
      %v3693 = vsel %vm985, %v3691, 0.0
      %3694 = vadd.xlane.f32.xlu0 %v3693
      %v3695 = vpop.xlane.xlu0 %3694
      %v3696 = vsel %vm2875, %v3692, 0.0
      %3697 = vadd.xlane.f32.xlu0 %v3696
      %v3698 = vpop.xlane.xlu0 %3697
      %v3699 = vmul.f32 %v3695, %v1335
      %v3700 = vmul.f32 %v3698, %v1335
      %v3701 = vadd.f32 %v3699, 1e-05
      %v3702 = vadd.f32 %v3700, 1e-05
      %v3703 = vrsqrt.pop %v3701
      %v3704 = vrsqrt.pop %v3702
      %v3705 = vmul.f32 %v3689, %v3703
      %v3706 = vmul.f32 %v3690, %v3704
      %v3708 = vlaneseq
      %v3709 = vshrl.u32 %v3708, 7
      %v3710 = vsub.s32 0, %v3709
      %v3711 = vrot.slane %v3678, %v3710
      %v3713 = vmul.f32 %v3705, %v3711
      %v3714 = vmul.f32 %v3706, %v3711
      %v3716 = vlaneseq
      %v3717 = vshrl.u32 %v3716, 7
      %v3718 = vsub.s32 0, %v3717
      %v3719 = vrot.slane %v3680, %v3718
      %v3721 = vadd.f32 %v3713, %v3719
      %v3722 = vadd.f32 %v3714, %v3719
      %v3723 = vmul.f32 %v3721, %v2467
      %v3724 = vmul.f32 %v3722, %v2468
      %s3725 = scalar_lea.vmem %s45, 48
      %v3726 = vld [vmem:[%s3725] sm:$0xf]
      %v3727 = vld [vmem:[%s3725 + $0x4] sm:$0xf]
      %v3728 = vld [vmem:[%s3725 + $0x8] sm:$0xf]
      %v3729 = vld [vmem:[%s3725 + $0xc] sm:$0xf]
      %v3730 = vld [vmem:[%s3725 + $0x10] sm:$0xf]
      %v3731 = vld [vmem:[%s3725 + $0x14] sm:$0xf]
      %v3732 = vld [vmem:[%s3725 + $0x18] sm:$0xf]
      %v3733 = vld [vmem:[%s3725 + $0x1c] sm:$0xf]
      %v3734 = vld [vmem:[%s3725 + $0x20] sm:$0xf]
      %v3735 = vld [vmem:[%s3725 + $0x24] sm:$0xf]
      %v3736 = vld [vmem:[%s3725 + $0x28] sm:$0xf]
      %v3737 = vld [vmem:[%s3725 + $0x2c] sm:$0xf]
      %s3738 = scalar_lea.vmem %s47, 1
      %v3739 = vld [vmem:[%s3738] sm:$0x1]
      %v3742 = vrot.slane %v3723, 7
      %v3743 = vrot.slane %v3724, 7
      %v3744 = vsel %vm1377, %v3742, %v3743
      %v3747 = vsel %vm1377, 0.0, %v3742
      %v3748 = vsel %vm2938, %v3744, 0.0
      %v3751 = vrot.slane %v3747, 1
      %v3752 = vrot.slane %v3748, 1
      %v3753 = vsel %vm1382, %v3751, %v3752
      %3754 = vrot.lane.b32.xlu0 %v3753, 32
      %v3755 = vpop.permute.xlu0 %3754
      %3756 = vrot.lane.b32.xlu0 %v3752, 32
      %v3757 = vpop.permute.xlu0 %3756
      %v3760 = vrot.slane %v3747, 2
      %v3761 = vrot.slane %v3748, 2
      %v3762 = vsel %vm1389, %v3760, %v3761
      %3763 = vrot.lane.b32.xlu0 %v3762, 64
      %v3764 = vpop.permute.xlu0 %3763
      %3765 = vrot.lane.b32.xlu0 %v3761, 64
      %v3766 = vpop.permute.xlu0 %3765
      %v3769 = vsel %vm985, %v3747, %v3755
      %v3770 = vsel %vm985, %v3748, %v3757
      %v3771 = vsel %vm1397, %v3769, %v3764
      %v3772 = vsel %vm1397, %v3770, %v3766
      %v3773 = vpack.c.bf16 %v3772, %v3771
      %v3775 = vlaneseq
      %v3776 = vshrl.u32 %v3775, 7
      %v3777 = vsub.s32 0, %v3776
      %v3778 = vrot.slane %v3739, %v3777
      %v3792 = vunpack.c.l.b16 %v3726
      %v3793 = vunpack.c.l.b16 %v3727
      %v3794 = vunpack.c.l.b16 %v3728
      %v3795 = vunpack.c.l.b16 %v3729
      %v3796 = vunpack.c.l.b16 %v3730
      %v3797 = vunpack.c.l.b16 %v3731
      %v3798 = vunpack.c.l.b16 %v3732
      %v3799 = vunpack.c.l.b16 %v3733
      %v3800 = vunpack.c.l.b16 %v3734
      %v3801 = vunpack.c.l.b16 %v3735
      %v3802 = vunpack.c.l.b16 %v3736
      %v3803 = vunpack.c.l.b16 %v3737
      %v3804 = vpack.c.b16 %v3793, %v3792
      %v3805 = vpack.c.b16 %v3795, %v3794
      %v3806 = vpack.c.b16 %v3797, %v3796
      %v3807 = vpack.c.b16 %v3799, %v3798
      %v3808 = vpack.c.b16 %v3801, %v3800
      %v3809 = vpack.c.b16 %v3803, %v3802
      %v3817 = vsel %vm1442, %v3773, 0
      %3819 = vmatprep.subr.bf16.mxu0 0
      %3820 = vmatpush1.bf16.msra.mxu0 %v3804
      %3821 = vmatprep.subr.bf16.mxu0 0
      %3822 = vmatpush1.bf16.msra.mxu0 %v3805
      %3823 = vmatprep.subr.bf16.mxu0 0
      %3824 = vmatpush1.bf16.msra.mxu0 %v3806
      %3825 = vmatprep.subr.bf16.mxu0 0
      %3826 = vmatpush1.bf16.msra.mxu0 %v3807
      %3827 = vmatprep.subr.bf16.mxu0 0
      %3828 = vmatpush1.bf16.msra.mxu0 %v3808
      %3829 = vmatprep.subr.bf16.mxu0 0
      %3830 = vmatpush1.bf16.msra.mxu0 %v3809
      %3831 = vmatprep.subr.bf16.mxu0 0
      %3832 = vmatpush1.bf16.msra.mxu0 0
      %3833 = vmatprep.subr.bf16.mxu0 0
      %3834 = vmatpush1.bf16.msra.mxu0 0
      %3835 = vmatprep.subr.bf16.mxu0 0
      %3836 = vmatpush1.bf16.msra.mxu0 0
      %3837 = vmatprep.subr.bf16.mxu0 0
      %3838 = vmatpush1.bf16.msra.mxu0 0
      %3839 = vmatprep.subr.bf16.mxu0 0
      %3840 = vmatpush1.bf16.msra.mxu0 0
      %3841 = vmatprep.subr.bf16.mxu0 0
      %3842 = vmatpush1.bf16.msra.mxu0 0
      %3843 = vmatprep.subr.bf16.mxu0 0
      %3844 = vmatpush1.bf16.msra.mxu0 0
      %3845 = vmatprep.subr.bf16.mxu0 0
      %3846 = vmatpush1.bf16.msra.mxu0 0
      %3847 = vmatprep.subr.bf16.mxu0 0
      %3848 = vmatpush1.bf16.msra.mxu0 0
      %3849 = vmatprep.subr.bf16.mxu0 0
      %3850 = vmatpush1.bf16.msra.mxu0 0
      %3851 = vmatprep.mubr.bf16.mxu0 0
      %3852 = vmatmul.mubr.bf16.gmra.mrb[0].mxu0 %v3817
      %v3853 = vpop.f32.mrb[0].mxu0
      %v3854 = vadd.f32 %v3778, %v3853
      %v3855 = vpop.f32.mrb[0].mxu0
      %v3856 = vpop.f32.mrb[0].mxu0
      %v3857 = vadd.f32 %v3778, %v3856
      %v3858 = vpop.f32.mrb[0].mxu0
      %3859 = vdwg.mxu0
      %v3860 = vmax.f32 %v3854, 0.0
      %v3861 = vmax.f32 %v3857, 0.0
      %v3862 = vmul.f32 %v3860, %v2467
      %v3863 = vmul.f32 %v3861, %v2468
      %s3864 = scalar_lea.vmem %s49, 96
      %v3865 = vld [vmem:[%s3864] sm:$0xf]
      %v3866 = vld [vmem:[%s3864 + $0x4] sm:$0xf]
      %v3867 = vld [vmem:[%s3864 + $0x8] sm:$0xf]
      %v3868 = vld [vmem:[%s3864 + $0xc] sm:$0xf]
      %v3869 = vld [vmem:[%s3864 + $0x10] sm:$0xf]
      %v3870 = vld [vmem:[%s3864 + $0x14] sm:$0xf]
      %v3871 = vld [vmem:[%s3864 + $0x18] sm:$0xf]
      %v3872 = vld [vmem:[%s3864 + $0x1c] sm:$0xf]
      %v3873 = vld [vmem:[%s3864 + $0x20] sm:$0xf]
      %v3874 = vld [vmem:[%s3864 + $0x24] sm:$0xf]
      %v3875 = vld [vmem:[%s3864 + $0x28] sm:$0xf]
      %v3876 = vld [vmem:[%s3864 + $0x2c] sm:$0xf]
      %v3877 = vld [vmem:[%s3864 + $0x30] sm:$0xf]
      %v3878 = vld [vmem:[%s3864 + $0x34] sm:$0xf]
      %v3879 = vld [vmem:[%s3864 + $0x38] sm:$0xf]
      %v3880 = vld [vmem:[%s3864 + $0x3c] sm:$0xf]
      %v3881 = vld [vmem:[%s3864 + $0x40] sm:$0xf]
      %v3882 = vld [vmem:[%s3864 + $0x44] sm:$0xf]
      %v3883 = vld [vmem:[%s3864 + $0x48] sm:$0xf]
      %v3884 = vld [vmem:[%s3864 + $0x4c] sm:$0xf]
      %v3885 = vld [vmem:[%s3864 + $0x50] sm:$0xf]
      %v3886 = vld [vmem:[%s3864 + $0x54] sm:$0xf]
      %v3887 = vld [vmem:[%s3864 + $0x58] sm:$0xf]
      %v3888 = vld [vmem:[%s3864 + $0x5c] sm:$0xf]
      %s3889 = scalar_lea.vmem %s51, 1
      %v3890 = vld [vmem:[%s3889] sm:$0x1]
      %v3893 = vrot.slane %v3862, 7
      %v3894 = vrot.slane %v3863, 7
      %v3895 = vsel %vm1377, %v3893, %v3894
      %v3898 = vsel %vm1377, 0.0, %v3893
      %v3899 = vsel %vm2938, %v3895, 0.0
      %v3902 = vrot.slane %v3898, 1
      %v3903 = vrot.slane %v3899, 1
      %v3904 = vsel %vm1382, %v3902, %v3903
      %3905 = vrot.lane.b32.xlu0 %v3904, 64
      %v3906 = vpop.permute.xlu0 %3905
      %3907 = vrot.lane.b32.xlu0 %v3903, 64
      %v3908 = vpop.permute.xlu0 %3907
      %v3911 = vrot.slane %v3898, 2
      %v3912 = vrot.slane %v3899, 2
      %v3913 = vsel %vm1389, %v3911, %v3912
      %v3916 = vsel %vm1397, %v3898, %v3906
      %v3917 = vsel %vm1397, %v3899, %v3908
      %v3918 = vpack.c.bf16 %v3917, %v3916
      %v3919 = vpack.c.bf16 %v3912, %v3913
      %v3921 = vlaneseq
      %v3922 = vshrl.u32 %v3921, 7
      %v3923 = vsub.s32 0, %v3922
      %v3924 = vrot.slane %v3890, %v3923
      %v3950 = vunpack.c.l.b16 %v3865
      %v3951 = vunpack.c.l.b16 %v3866
      %v3952 = vunpack.c.l.b16 %v3867
      %v3953 = vunpack.c.l.b16 %v3868
      %v3954 = vunpack.c.l.b16 %v3869
      %v3955 = vunpack.c.l.b16 %v3870
      %v3956 = vunpack.c.l.b16 %v3871
      %v3957 = vunpack.c.l.b16 %v3872
      %v3958 = vunpack.c.l.b16 %v3873
      %v3959 = vunpack.c.l.b16 %v3874
      %v3960 = vunpack.c.l.b16 %v3875
      %v3961 = vunpack.c.l.b16 %v3876
      %v3962 = vunpack.c.l.b16 %v3877
      %v3963 = vunpack.c.l.b16 %v3878
      %v3964 = vunpack.c.l.b16 %v3879
      %v3965 = vunpack.c.l.b16 %v3880
      %v3966 = vunpack.c.l.b16 %v3881
      %v3967 = vunpack.c.l.b16 %v3882
      %v3968 = vunpack.c.l.b16 %v3883
      %v3969 = vunpack.c.l.b16 %v3884
      %v3970 = vunpack.c.l.b16 %v3885
      %v3971 = vunpack.c.l.b16 %v3886
      %v3972 = vunpack.c.l.b16 %v3887
      %v3973 = vunpack.c.l.b16 %v3888
      %v3974 = vpack.c.b16 %v3951, %v3950
      %v3975 = vpack.c.b16 %v3953, %v3952
      %v3976 = vpack.c.b16 %v3955, %v3954
      %v3977 = vpack.c.b16 %v3957, %v3956
      %v3978 = vpack.c.b16 %v3959, %v3958
      %v3979 = vpack.c.b16 %v3961, %v3960
      %v3980 = vpack.c.b16 %v3963, %v3962
      %v3981 = vpack.c.b16 %v3965, %v3964
      %v3982 = vpack.c.b16 %v3967, %v3966
      %v3983 = vpack.c.b16 %v3969, %v3968
      %v3984 = vpack.c.b16 %v3971, %v3970
      %v3985 = vpack.c.b16 %v3973, %v3972
      %v3999 = vsel %vm1397, %v3919, 0
      %4001 = vmatprep.subr.bf16.mxu0 0
      %4002 = vmatpush1.bf16.msra.mxu0 %v3974
      %4003 = vmatprep.subr.bf16.mxu0 0
      %4004 = vmatpush1.bf16.msra.mxu0 %v3975
      %4005 = vmatprep.subr.bf16.mxu0 0
      %4006 = vmatpush1.bf16.msra.mxu0 %v3976
      %4007 = vmatprep.subr.bf16.mxu0 0
      %4008 = vmatpush1.bf16.msra.mxu0 %v3977
      %4009 = vmatprep.subr.bf16.mxu0 0
      %4010 = vmatpush1.bf16.msra.mxu0 %v3978
      %4011 = vmatprep.subr.bf16.mxu0 0
      %4012 = vmatpush1.bf16.msra.mxu0 %v3979
      %4013 = vmatprep.subr.bf16.mxu0 0
      %4014 = vmatpush1.bf16.msra.mxu0 %v3980
      %4015 = vmatprep.subr.bf16.mxu0 0
      %4016 = vmatpush1.bf16.msra.mxu0 %v3981
      %4017 = vmatprep.subr.bf16.mxu0 0
      %4018 = vmatpush1.bf16.msra.mxu0 %v3982
      %4019 = vmatprep.subr.bf16.mxu0 0
      %4020 = vmatpush1.bf16.msra.mxu0 %v3983
      %4021 = vmatprep.subr.bf16.mxu0 0
      %4022 = vmatpush1.bf16.msra.mxu0 %v3984
      %4023 = vmatprep.subr.bf16.mxu0 0
      %4024 = vmatpush1.bf16.msra.mxu0 %v3985
      %4025 = vmatprep.subr.bf16.mxu0 0
      %4026 = vmatpush1.bf16.msra.mxu0 0
      %4027 = vmatprep.subr.bf16.mxu0 0
      %4028 = vmatpush1.bf16.msra.mxu0 0
      %4029 = vmatprep.subr.bf16.mxu0 0
      %4030 = vmatpush1.bf16.msra.mxu0 0
      %4031 = vmatprep.subr.bf16.mxu0 0
      %4032 = vmatpush1.bf16.msra.mxu0 0
      %4033 = vmatprep.mubr.bf16.mxu0 %v3999
      %4034 = vmatmul.mubr.bf16.gmra.mrb[0].mxu0 %v3918
      %v4035 = vpop.f32.mrb[0].mxu0
      %v4036 = vadd.f32 %v3924, %v4035
      %v4037 = vpop.f32.mrb[0].mxu0
      %v4038 = vpop.f32.mrb[0].mxu0
      %v4039 = vadd.f32 %v3924, %v4038
      %v4040 = vpop.f32.mrb[0].mxu0
      %4041 = vdwg.mxu0
      %v4042 = vmul.f32 %v4036, %v2467
      %v4043 = vmul.f32 %v4039, %v2468
      %v4044 = vadd.f32 %v3721, %v4042
      %v4045 = vadd.f32 %v3722, %v4043
      %s4046 = scalar_lea.vmem %s53, 1
      %v4047 = vld [vmem:[%s4046] sm:$0x1]
      %s4048 = scalar_lea.vmem %s55, 1
      %v4049 = vld [vmem:[%s4048] sm:$0x1]
      %v4050 = vsel %vm985, %v4044, 0.0
      %4051 = vadd.xlane.f32.xlu0 %v4050
      %v4052 = vpop.xlane.xlu0 %4051
      %v4053 = vsel %vm2875, %v4045, 0.0
      %4054 = vadd.xlane.f32.xlu0 %v4053
      %v4055 = vpop.xlane.xlu0 %4054
      %v4056 = vmul.f32 %v4052, %v1335
      %v4057 = vmul.f32 %v4055, %v1335
      %v4058 = vsub.f32 %v4044, %v4056
      %v4059 = vsub.f32 %v4045, %v4057
      %v4060 = vmul.f32 %v4058, %v4058
      %v4061 = vmul.f32 %v4059, %v4059
      %v4062 = vsel %vm985, %v4060, 0.0
      %4063 = vadd.xlane.f32.xlu0 %v4062
      %v4064 = vpop.xlane.xlu0 %4063
      %v4065 = vsel %vm2875, %v4061, 0.0
      %4066 = vadd.xlane.f32.xlu0 %v4065
      %v4067 = vpop.xlane.xlu0 %4066
      %v4068 = vmul.f32 %v4064, %v1335
      %v4069 = vmul.f32 %v4067, %v1335
      %v4070 = vadd.f32 %v4068, 1e-05
      %v4071 = vadd.f32 %v4069, 1e-05
      %v4072 = vrsqrt.pop %v4070
      %v4073 = vrsqrt.pop %v4071
      %v4074 = vmul.f32 %v4058, %v4072
      %v4075 = vmul.f32 %v4059, %v4073
      %v4077 = vlaneseq
      %v4078 = vshrl.u32 %v4077, 7
      %v4079 = vsub.s32 0, %v4078
      %v4080 = vrot.slane %v4047, %v4079
      %v4082 = vmul.f32 %v4074, %v4080
      %v4083 = vmul.f32 %v4075, %v4080
      %v4085 = vlaneseq
      %v4086 = vshrl.u32 %v4085, 7
      %v4087 = vsub.s32 0, %v4086
      %v4088 = vrot.slane %v4049, %v4087
      %v4090 = vadd.f32 %v4082, %v4088
      %v4091 = vadd.f32 %v4083, %v4088
      %v4092 = vmul.f32 %v4090, %v2467
      %v4093 = vmul.f32 %v4091, %v2468
      %v4094 = vpack.c.bf16 %v4093, %v4092
      %v4095 = vld [vmem:[%s57] sm:$0xf]
      %v4096 = vld [vmem:[%s57 + $0x4] sm:$0xf]
      %v4097 = vld [vmem:[%s57 + $0x8] sm:$0xf]
      %v4098 = vld [vmem:[%s57 + $0xc] sm:$0xf]
      %v4099 = vld [vmem:[%s59] sm:$0x1]
      %v4101 = vlaneseq
      %v4102 = vshrl.u32 %v4101, 7
      %v4103 = vsub.s32 0, %v4102
      %v4104 = vrot.slane %v4099, %v4103
      %v4110 = vunpack.c.l.b16 %v4095
      %v4111 = vunpack.c.l.b16 %v4096
      %v4112 = vunpack.c.l.b16 %v4097
      %v4113 = vunpack.c.l.b16 %v4098
      %v4114 = vpack.c.b16 %v4111, %v4110
      %v4115 = vpack.c.b16 %v4113, %v4112
      %v4119 = vsel %vm985, %v4094, 0
      %4121 = vmatprep.subr.bf16.mxu0 0
      %4122 = vmatpush1.bf16.msra.mxu0 %v4114
      %4123 = vmatprep.subr.bf16.mxu0 0
      %4124 = vmatpush1.bf16.msra.mxu0 %v4115
      %4125 = vmatprep.subr.bf16.mxu0 0
      %4126 = vmatpush1.bf16.msra.mxu0 0
      %4127 = vmatprep.subr.bf16.mxu0 0
      %4128 = vmatpush1.bf16.msra.mxu0 0
      %4129 = vmatprep.subr.bf16.mxu0 0
      %4130 = vmatpush1.bf16.msra.mxu0 0
      %4131 = vmatprep.subr.bf16.mxu0 0
      %4132 = vmatpush1.bf16.msra.mxu0 0
      %4133 = vmatprep.subr.bf16.mxu0 0
      %4134 = vmatpush1.bf16.msra.mxu0 0
      %4135 = vmatprep.subr.bf16.mxu0 0
      %4136 = vmatpush1.bf16.msra.mxu0 0
      %4137 = vmatprep.subr.bf16.mxu0 0
      %4138 = vmatpush1.bf16.msra.mxu0 0
      %4139 = vmatprep.subr.bf16.mxu0 0
      %4140 = vmatpush1.bf16.msra.mxu0 0
      %4141 = vmatprep.subr.bf16.mxu0 0
      %4142 = vmatpush1.bf16.msra.mxu0 0
      %4143 = vmatprep.subr.bf16.mxu0 0
      %4144 = vmatpush1.bf16.msra.mxu0 0
      %4145 = vmatprep.subr.bf16.mxu0 0
      %4146 = vmatpush1.bf16.msra.mxu0 0
      %4147 = vmatprep.subr.bf16.mxu0 0
      %4148 = vmatpush1.bf16.msra.mxu0 0
      %4149 = vmatprep.subr.bf16.mxu0 0
      %4150 = vmatpush1.bf16.msra.mxu0 0
      %4151 = vmatprep.subr.bf16.mxu0 0
      %4152 = vmatpush1.bf16.msra.mxu0 0
      %4153 = vmatprep.mubr.bf16.mxu0 0
      %4154 = vmatmul.mubr.bf16.gmra.mrb[0].mxu0 %v4119
      %v4155 = vpop.f32.mrb[0].mxu0
      %v4156 = vadd.f32 %v4104, %v4155
      %v4157 = vpop.f32.mrb[0].mxu0
      %v4158 = vpop.f32.mrb[0].mxu0
      %v4159 = vadd.f32 %v4104, %v4158
      %v4160 = vpop.f32.mrb[0].mxu0
      %4161 = vdwg.mxu0
      %v4162 = vmul.f32 %v4156, %v2467
      %v4163 = vmul.f32 %v4159, %v2468
      %4164 = vst.msk [vmem:[%s941] sm:$0xff] %vm985, %v4092
      %4165 = vst.msk [vmem:[%s941 + $0x8] sm:$0xf] %vm2875, %v4093
      %4166 = vst.msk [vmem:[%s946] sm:$0xff] %vm1033, %v4162
      %vm4167 = vcmask 125952
      %4168 = vst.msk [vmem:[%s946 + $0x8] sm:$0xf] %vm4167, %v4163
      %p4169 = scmp.lt.s32.totalorder %s85, 1
      %s4170 = scalar_select %p4169, %s85, 1
      %s4171 = smul.addr %s4170, 2
      %s4172 = smul.addr %s4171, 8
      %s4173 = scalar_lea.vmem %s61, %s4172
      %p4174 = scmp.lt.s32.totalorder %s85, 1
      %s4175 = scalar_select %p4174, %s85, 1
      %s4176 = smul.addr %s4175, 2
      %s4177 = smul.addr %s4176, 8
      %s4178 = scalar_lea.vmem %s63, %s4177
      // Predicated region
      $region133: #{_lambda_.1} parent=131 // pred_check
        %p4179 = pneg %p701
      $region134: #{_lambda_.1} parent=131 // pred_check_branch
        %4181 = sbr.rel (%p4179) target = $region136
      $region135: #{_lambda_.1} parent=131 // pred_region
        _
      $region136: #{_lambda_.1} parent=131 // pred_fallthru
        _
      // Predicated region
      $region137: #{_lambda_.1} parent=131 // pred_check
        %p4182 = pneg %p727
      $region138: #{_lambda_.1} parent=131 // pred_check_branch
        %4184 = sbr.rel (%p4182) target = $region140
      $region139: #{_lambda_.1} parent=131 // pred_region
        _
      $region140: #{_lambda_.1} parent=131 // pred_fallthru
        _
    $region132: #{_lambda_.1} parent=5 // pred_fallthru
      _
    %p4185 = scmp.le.s32.totalorder 2, %s80
    // Predicated region
    $region141: #{_lambda_.1} parent=5 // pred_check
      %p4186 = pneg %p4185
    $region142: #{_lambda_.1} parent=5 // pred_check_branch
      %4188 = sbr.rel (%p4186) target = $region144
    $region143: #{_lambda_.1} parent=5 // pred_region
      %s4189 = ssub.s32 %s80, 2
      // Predicated region
      $region145: #{_lambda_.1} parent=143 // pred_check
        %p4190 = pneg %p707
      $region146: #{_lambda_.1} parent=143 // pred_check_branch
        %4192 = sbr.rel (%p4190) target = $region148
      $region147: #{_lambda_.1} parent=143 // pred_region
        %p4193 = scmp.lt.s32.totalorder %s86, 1
        %s4194 = scalar_select %p4193, %s86, 1
        %s4195 = smul.addr %s4194, 2
        %s4196 = smul.addr %s4195, 8
        %s4197 = scalar_lea.vmem %s61, %s4196
      $region148: #{_lambda_.1} parent=143 // pred_fallthru
        _
      // Predicated region
      $region149: #{_lambda_.1} parent=143 // pred_check
        %p4198 = pneg %p733
      $region150: #{_lambda_.1} parent=143 // pred_check_branch
        %4200 = sbr.rel (%p4198) target = $region152
      $region151: #{_lambda_.1} parent=143 // pred_region
        %p4201 = scmp.lt.s32.totalorder %s86, 1
        %s4202 = scalar_select %p4201, %s86, 1
        %s4203 = smul.addr %s4202, 2
        %s4204 = smul.addr %s4203, 8
        %s4205 = scalar_lea.vmem %s63, %s4204
      $region152: #{_lambda_.1} parent=143 // pred_fallthru
        _
    $region144: #{_lambda_.1} parent=5 // pred_fallthru
      _
  $region6: #{_lambda_.1} parent=0 // loop_footer
    %s84 = sadd.s32 1, %s80
  $region7: #{_lambda_.1} parent=0 // loop_footer_branch
    %79 = sbr.rel target = $region3
  $region8: #{_lambda_.1} parent=0 // loop_exit
    _

</llo_original>
